<compile_context>
chip_gen: v7x
topology: tpu7x:2x2x1
jax: 0.10.0
libtpu: 0.0.40
codegen_flags: <defaults>
</compile_context>

<pallas_src>
import math

import jax
import jax.numpy as jnp
from jax.experimental import pallas as pl
from jax.experimental.pallas import tpu as pltpu

PAD = 128  # lane-aligned hidden width all layers are padded to


def mlp_kernel(x_ref,
               w1_ref, b1_ref,
               w2_ref, b2_ref,
               w3_ref, b3_ref,
               w4_ref, b4_ref,
               w5_ref,
               o_ref):
    # x tile: (TILE_B, F) bf16.  Weights: bf16 (padded to 128 lanes).
    # Biases: f32.  All accumulation / elementwise math in f32.
    def layer(h_bf16, w_ref, b_ref):
        acc = jnp.dot(h_bf16, w_ref[...], preferred_element_type=jnp.float32)
        return jnp.maximum(acc + b_ref[...], 0.0)

    h = layer(x_ref[...], w1_ref, b1_ref)                       # (TILE_B, 128) f32
    h = layer(h.astype(jnp.bfloat16), w2_ref, b2_ref)
    h = layer(h.astype(jnp.bfloat16), w3_ref, b3_ref)
    h = layer(h.astype(jnp.bfloat16), w4_ref, b4_ref)
    z = jnp.dot(h.astype(jnp.bfloat16), w5_ref[...],
                preferred_element_type=jnp.float32)              # (TILE_B, 128)

    # Numerically stable sigmoid: one exp (EUP) + reciprocal, all f32.
    e = jnp.exp(-jnp.abs(z))
    inv = pl.reciprocal(1.0 + e, approx=False)  # approx=True possible if tol allows
    o_ref[...] = jnp.where(z >= 0.0, inv, e * inv)


def init_params(key, num_features):
    """PyTorch-style Linear init, stored transposed (in, out), zero-padded to
    128 output lanes (and 128 input rows for layers 2..5).  Weights bf16,
    biases f32."""
    dims = [(num_features, 32), (32, 8), (8, 16), (16, 64), (64, 1)]
    params = []
    for i, (fan_in, fan_out) in enumerate(dims):
        key, wk, bk = jax.random.split(key, 3)
        bound = 1.0 / math.sqrt(fan_in)
        w = jax.random.uniform(wk, (fan_in, fan_out), jnp.float32, -bound, bound)
        in_pad = num_features if i == 0 else PAD
        wp = jnp.zeros((in_pad, PAD), jnp.float32).at[:fan_in, :fan_out].set(w)
        params.append(wp.astype(jnp.bfloat16))
        if i < 4:  # last layer has bias=False
            b = jax.random.uniform(bk, (1, fan_out), jnp.float32, -bound, bound)
            bp = jnp.zeros((1, PAD), jnp.float32).at[:, :fan_out].set(b)
            params.append(bp)
    return params


def neural_network_forward(x, params, *, tile_b=256):
    # nn.Flatten(): (B, C, H, W) -> (B, F); cast to bf16 to halve HBM traffic.
    b = x.shape[0]
    x2d = x.reshape(b, -1).astype(jnp.bfloat16)
    f = x2d.shape[1]

    num_tiles = pl.cdiv(b, tile_b)
    b_pad = num_tiles * tile_b
    if b_pad != b:
        x2d = jnp.pad(x2d, ((0, b_pad - b), (0, 0)))

    # x is tiled along batch; weights/biases use constant index_maps so Pallas
    # keeps them resident in VMEM across grid steps.
    x_spec = pl.BlockSpec((tile_b, f), lambda i: (i, 0))
    param_specs = [pl.BlockSpec(p.shape, lambda i: (0, 0)) for p in params]
    out_spec = pl.BlockSpec((tile_b, PAD), lambda i: (i, 0))  # lane-dense output

    weight_bytes = sum(p.size * p.dtype.itemsize for p in params)
    cost = pl.CostEstimate(
        flops=2 * b_pad * (f * PAD + 4 * PAD * PAD),
        transcendentals=b_pad * PAD,
        bytes_accessed=b_pad * f * 2 + b_pad * PAD * 4 + weight_bytes,
    )

    y_pad = pl.pallas_call(
        mlp_kernel,
        out_shape=jax.ShapeDtypeStruct((b_pad, PAD), jnp.float32),
        grid=(num_tiles,),
        in_specs=[x_spec] + param_specs,
        out_specs=out_spec,
        compiler_params=pltpu.CompilerParams(
            dimension_semantics=("parallel",)),   # megacore sharding on v7x
        cost_estimate=cost,
    )(x2d, *params)

    # Column 0 of the padded slab is the real Linear(64, 1) -> Sigmoid output.
    return y_pad[:b, :1]


def reference_forward(x, params):
    """Pure-JAX reference mirroring the kernel's bf16 rounding exactly
    (bf16 operands for every dot, f32 accumulation / elementwise)."""
    b = x.shape[0]
    w1, b1, w2, b2, w3, b3, w4, b4, w5 = params
    hi = jax.lax.Precision.HIGHEST

    def layer(h_bf16, w, bias):
        acc = jnp.dot(h_bf16.astype(jnp.float32), w.astype(jnp.float32),
                      precision=hi)
        return jnp.maximum(acc + bias, 0.0)

    h = x.reshape(b, -1).astype(jnp.bfloat16)
    h = layer(h, w1, b1)
    h = layer(h.astype(jnp.bfloat16), w2, b2)
    h = layer(h.astype(jnp.bfloat16), w3, b3)
    h = layer(h.astype(jnp.bfloat16), w4, b4)
    z = jnp.dot(h.astype(jnp.bfloat16).astype(jnp.float32),
                w5.astype(jnp.float32), precision=hi)
    return jax.nn.sigmoid(z)[:, :1]


if __name__ == "__main__":
    key = jax.random.PRNGKey(0)
    key, xk, pk = jax.random.split(key, 3)

    # NCHW input: batch=300 (exercises batch padding + a 2-step grid),
    # channels=4, spatial=16x16 -> num_features=1024.
    B, C, H, W = 300, 4, 16, 16
    num_features = C * H * W
    x = jax.random.normal(xk, (B, C, H, W), jnp.float32)

    params = init_params(pk, num_features)

    y = neural_network_forward(x, params, tile_b=256)
    y = jax.block_until_ready(y)

    y_ref = reference_forward(x, params)
    assert y.shape == (B, 1)
    assert jnp.allclose(y, y_ref, atol=1e-3, rtol=1e-3), (
        f"max abs err = {float(jnp.max(jnp.abs(y - y_ref)))}")

    print("KERNEL_OK")
</pallas_src>

<mosaic_0001>
module attributes {stable_mosaic.version = 11 : i64} {
  func.func @mlp_kernel(%arg0: i32, %arg1: memref<256x1024xbf16, #tpu.memory_space<vmem>>, %arg2: memref<1024x128xbf16, #tpu.memory_space<vmem>>, %arg3: memref<1x128xf32, #tpu.memory_space<vmem>>, %arg4: memref<128x128xbf16, #tpu.memory_space<vmem>>, %arg5: memref<1x128xf32, #tpu.memory_space<vmem>>, %arg6: memref<128x128xbf16, #tpu.memory_space<vmem>>, %arg7: memref<1x128xf32, #tpu.memory_space<vmem>>, %arg8: memref<128x128xbf16, #tpu.memory_space<vmem>>, %arg9: memref<1x128xf32, #tpu.memory_space<vmem>>, %arg10: memref<128x128xbf16, #tpu.memory_space<vmem>>, %arg11: memref<256x128xf32, #tpu.memory_space<vmem>>) attributes {dimension_semantics = [#tpu.dimension_semantics<parallel>], iteration_bounds = array<i64: 2>, scalar_prefetch = 0 : i64, scratch_operands = 0 : i64, tpu.core_type = #tpu.core_type<tc>, window_params = [{transform_indices = @transform_0, window_bounds = array<i64: 256, 1024>}, {pipeline_mode = #tpu.pipeline_mode<synchronous>, transform_indices = @transform_1, window_bounds = array<i64: 1024, 128>}, {pipeline_mode = #tpu.pipeline_mode<synchronous>, transform_indices = @transform_2, window_bounds = array<i64: 1, 128>}, {pipeline_mode = #tpu.pipeline_mode<synchronous>, transform_indices = @transform_3, window_bounds = array<i64: 128, 128>}, {pipeline_mode = #tpu.pipeline_mode<synchronous>, transform_indices = @transform_4, window_bounds = array<i64: 1, 128>}, {pipeline_mode = #tpu.pipeline_mode<synchronous>, transform_indices = @transform_5, window_bounds = array<i64: 128, 128>}, {pipeline_mode = #tpu.pipeline_mode<synchronous>, transform_indices = @transform_6, window_bounds = array<i64: 1, 128>}, {pipeline_mode = #tpu.pipeline_mode<synchronous>, transform_indices = @transform_7, window_bounds = array<i64: 128, 128>}, {pipeline_mode = #tpu.pipeline_mode<synchronous>, transform_indices = @transform_8, window_bounds = array<i64: 1, 128>}, {pipeline_mode = #tpu.pipeline_mode<synchronous>, transform_indices = @transform_9, window_bounds = array<i64: 128, 128>}, {transform_indices = @transform_10, window_bounds = array<i64: 256, 128>}]} {
    %c0 = arith.constant 0 : index
    %c0_0 = arith.constant 0 : index
    %0 = vector.load %arg1[%c0, %c0_0] : memref<256x1024xbf16, #tpu.memory_space<vmem>>, vector<256x1024xbf16>
    %c0_1 = arith.constant 0 : index
    %c0_2 = arith.constant 0 : index
    %1 = vector.load %arg2[%c0_1, %c0_2] : memref<1024x128xbf16, #tpu.memory_space<vmem>>, vector<1024x128xbf16>
    %cst = arith.constant dense<0.000000e+00> : vector<256x128xf32>
    %2 = tpu.matmul %0, %1, %cst {dimension_numbers = #tpu.dot_dimension_numbers<[1], [0], [0], [1], [0, 0, 1, 1], [], []>} : vector<256x1024xbf16>, vector<1024x128xbf16>, vector<256x128xf32> -> vector<256x128xf32>
    %c0_3 = arith.constant 0 : index
    %c0_4 = arith.constant 0 : index
    %3 = vector.load %arg3[%c0_3, %c0_4] : memref<1x128xf32, #tpu.memory_space<vmem>>, vector<1x128xf32>
    %4 = vector.broadcast %3 : vector<1x128xf32> to vector<256x128xf32>
    %5 = arith.addf %2, %4 : vector<256x128xf32>
    %cst_5 = arith.constant 0.000000e+00 : f32
    %6 = vector.broadcast %cst_5 : f32 to vector<256x128xf32>
    %7 = arith.maximumf %5, %6 : vector<256x128xf32>
    %8 = arith.truncf %7 : vector<256x128xf32> to vector<256x128xbf16>
    %c0_6 = arith.constant 0 : index
    %c0_7 = arith.constant 0 : index
    %9 = vector.load %arg4[%c0_6, %c0_7] : memref<128x128xbf16, #tpu.memory_space<vmem>>, vector<128x128xbf16>
    %cst_8 = arith.constant dense<0.000000e+00> : vector<256x128xf32>
    %10 = tpu.matmul %8, %9, %cst_8 {dimension_numbers = #tpu.dot_dimension_numbers<[1], [0], [0], [1], [0, 0, 1, 1], [], []>} : vector<256x128xbf16>, vector<128x128xbf16>, vector<256x128xf32> -> vector<256x128xf32>
    %c0_9 = arith.constant 0 : index
    %c0_10 = arith.constant 0 : index
    %11 = vector.load %arg5[%c0_9, %c0_10] : memref<1x128xf32, #tpu.memory_space<vmem>>, vector<1x128xf32>
    %12 = vector.broadcast %11 : vector<1x128xf32> to vector<256x128xf32>
    %13 = arith.addf %10, %12 : vector<256x128xf32>
    %cst_11 = arith.constant 0.000000e+00 : f32
    %14 = vector.broadcast %cst_11 : f32 to vector<256x128xf32>
    %15 = arith.maximumf %13, %14 : vector<256x128xf32>
    %16 = arith.truncf %15 : vector<256x128xf32> to vector<256x128xbf16>
    %c0_12 = arith.constant 0 : index
    %c0_13 = arith.constant 0 : index
    %17 = vector.load %arg6[%c0_12, %c0_13] : memref<128x128xbf16, #tpu.memory_space<vmem>>, vector<128x128xbf16>
    %cst_14 = arith.constant dense<0.000000e+00> : vector<256x128xf32>
    %18 = tpu.matmul %16, %17, %cst_14 {dimension_numbers = #tpu.dot_dimension_numbers<[1], [0], [0], [1], [0, 0, 1, 1], [], []>} : vector<256x128xbf16>, vector<128x128xbf16>, vector<256x128xf32> -> vector<256x128xf32>
    %c0_15 = arith.constant 0 : index
    %c0_16 = arith.constant 0 : index
    %19 = vector.load %arg7[%c0_15, %c0_16] : memref<1x128xf32, #tpu.memory_space<vmem>>, vector<1x128xf32>
    %20 = vector.broadcast %19 : vector<1x128xf32> to vector<256x128xf32>
    %21 = arith.addf %18, %20 : vector<256x128xf32>
    %cst_17 = arith.constant 0.000000e+00 : f32
    %22 = vector.broadcast %cst_17 : f32 to vector<256x128xf32>
    %23 = arith.maximumf %21, %22 : vector<256x128xf32>
    %24 = arith.truncf %23 : vector<256x128xf32> to vector<256x128xbf16>
    %c0_18 = arith.constant 0 : index
    %c0_19 = arith.constant 0 : index
    %25 = vector.load %arg8[%c0_18, %c0_19] : memref<128x128xbf16, #tpu.memory_space<vmem>>, vector<128x128xbf16>
    %cst_20 = arith.constant dense<0.000000e+00> : vector<256x128xf32>
    %26 = tpu.matmul %24, %25, %cst_20 {dimension_numbers = #tpu.dot_dimension_numbers<[1], [0], [0], [1], [0, 0, 1, 1], [], []>} : vector<256x128xbf16>, vector<128x128xbf16>, vector<256x128xf32> -> vector<256x128xf32>
    %c0_21 = arith.constant 0 : index
    %c0_22 = arith.constant 0 : index
    %27 = vector.load %arg9[%c0_21, %c0_22] : memref<1x128xf32, #tpu.memory_space<vmem>>, vector<1x128xf32>
    %28 = vector.broadcast %27 : vector<1x128xf32> to vector<256x128xf32>
    %29 = arith.addf %26, %28 : vector<256x128xf32>
    %cst_23 = arith.constant 0.000000e+00 : f32
    %30 = vector.broadcast %cst_23 : f32 to vector<256x128xf32>
    %31 = arith.maximumf %29, %30 : vector<256x128xf32>
    %32 = arith.truncf %31 : vector<256x128xf32> to vector<256x128xbf16>
    %c0_24 = arith.constant 0 : index
    %c0_25 = arith.constant 0 : index
    %33 = vector.load %arg10[%c0_24, %c0_25] : memref<128x128xbf16, #tpu.memory_space<vmem>>, vector<128x128xbf16>
    %cst_26 = arith.constant dense<0.000000e+00> : vector<256x128xf32>
    %34 = tpu.matmul %32, %33, %cst_26 {dimension_numbers = #tpu.dot_dimension_numbers<[1], [0], [0], [1], [0, 0, 1, 1], [], []>} : vector<256x128xbf16>, vector<128x128xbf16>, vector<256x128xf32> -> vector<256x128xf32>
    %35 = math.absf %34 : vector<256x128xf32>
    %cst_27 = arith.constant 0.000000e+00 : f32
    %36 = vector.broadcast %cst_27 : f32 to vector<256x128xf32>
    %37 = arith.subf %36, %35 : vector<256x128xf32>
    %38 = math.exp %37 : vector<256x128xf32>
    %cst_28 = arith.constant 1.000000e+00 : f32
    %39 = vector.broadcast %cst_28 : f32 to vector<256x128xf32>
    %40 = arith.addf %39, %38 : vector<256x128xf32>
    %41 = tpu.reciprocal %40 : vector<256x128xf32> -> vector<256x128xf32>
    %cst_29 = arith.constant 0.000000e+00 : f32
    %42 = vector.broadcast %cst_29 : f32 to vector<256x128xf32>
    %43 = arith.cmpf oge, %34, %42 : vector<256x128xf32>
    %44 = arith.mulf %38, %41 : vector<256x128xf32>
    %45 = arith.select %43, %41, %44 : vector<256x128xi1>, vector<256x128xf32>
    %c0_30 = arith.constant 0 : index
    %c0_31 = arith.constant 0 : index
    %46 = vector.load %arg11[%c0_30, %c0_31] : memref<256x128xf32, #tpu.memory_space<vmem>>, vector<256x128xf32>
    tpu.vector_store %arg11[%c0_30, %c0_31], %45 {strides = array<i32>} : memref<256x128xf32, #tpu.memory_space<vmem>>, vector<256x128xf32>,
    return
  }
  func.func @transform_0(%arg0: i32) -> (i32, i32) {
    %c0_i32 = arith.constant 0 : i32
    %c0_i32_0 = arith.constant 0 : i32
    return %arg0, %c0_i32 : i32, i32
  }
  func.func @transform_1(%arg0: i32) -> (i32, i32) {
    %c0_i32 = arith.constant 0 : i32
    %c0_i32_0 = arith.constant 0 : i32
    %c0_i32_1 = arith.constant 0 : i32
    return %c0_i32, %c0_i32_0 : i32, i32
  }
  func.func @transform_2(%arg0: i32) -> (i32, i32) {
    %c0_i32 = arith.constant 0 : i32
    %c0_i32_0 = arith.constant 0 : i32
    %c0_i32_1 = arith.constant 0 : i32
    return %c0_i32, %c0_i32_0 : i32, i32
  }
  func.func @transform_3(%arg0: i32) -> (i32, i32) {
    %c0_i32 = arith.constant 0 : i32
    %c0_i32_0 = arith.constant 0 : i32
    %c0_i32_1 = arith.constant 0 : i32
    return %c0_i32, %c0_i32_0 : i32, i32
  }
  func.func @transform_4(%arg0: i32) -> (i32, i32) {
    %c0_i32 = arith.constant 0 : i32
    %c0_i32_0 = arith.constant 0 : i32
    %c0_i32_1 = arith.constant 0 : i32
    return %c0_i32, %c0_i32_0 : i32, i32
  }
  func.func @transform_5(%arg0: i32) -> (i32, i32) {
    %c0_i32 = arith.constant 0 : i32
    %c0_i32_0 = arith.constant 0 : i32
    %c0_i32_1 = arith.constant 0 : i32
    return %c0_i32, %c0_i32_0 : i32, i32
  }
  func.func @transform_6(%arg0: i32) -> (i32, i32) {
    %c0_i32 = arith.constant 0 : i32
    %c0_i32_0 = arith.constant 0 : i32
    %c0_i32_1 = arith.constant 0 : i32
    return %c0_i32, %c0_i32_0 : i32, i32
  }
  func.func @transform_7(%arg0: i32) -> (i32, i32) {
    %c0_i32 = arith.constant 0 : i32
    %c0_i32_0 = arith.constant 0 : i32
    %c0_i32_1 = arith.constant 0 : i32
    return %c0_i32, %c0_i32_0 : i32, i32
  }
  func.func @transform_8(%arg0: i32) -> (i32, i32) {
    %c0_i32 = arith.constant 0 : i32
    %c0_i32_0 = arith.constant 0 : i32
    %c0_i32_1 = arith.constant 0 : i32
    return %c0_i32, %c0_i32_0 : i32, i32
  }
  func.func @transform_9(%arg0: i32) -> (i32, i32) {
    %c0_i32 = arith.constant 0 : i32
    %c0_i32_0 = arith.constant 0 : i32
    %c0_i32_1 = arith.constant 0 : i32
    return %c0_i32, %c0_i32_0 : i32, i32
  }
  func.func @transform_10(%arg0: i32) -> (i32, i32) {
    %c0_i32 = arith.constant 0 : i32
    %c0_i32_0 = arith.constant 0 : i32
    return %arg0, %c0_i32 : i32, i32
  }
}

</mosaic_0001>

<llo_original>
// kernel: tpu_custom_call.1
$region0: #{tpu_custom_call.1}
  #allocation0 [shape = 'u32[]', space=smem, size = 0x4, offset = 0x4, fixed_abs, tag = 'smem constant byte address 0x4 - core index']
  #allocation1 [shape = 'u32[144,128]{1,0:T(1,128)}', space=vmem, size = 0x12000, scoped, tag = 'internal scratch']
  %s0 = inlined_call_operand.hbm [shape: bf16[512,1024], index: 0, kind: input, shape index: {}]
  %s1 = inlined_call_operand.hbm [shape: bf16[1024,128], index: 1, kind: input, shape index: {}]
  %s2 = inlined_call_operand.vmem [shape: f32[1,128], index: 2, kind: input, shape index: {}]
  %s3 = inlined_call_operand.hbm [shape: bf16[128,128], index: 3, kind: input, shape index: {}]
  %s4 = inlined_call_operand.vmem [shape: f32[1,128], index: 4, kind: input, shape index: {}]
  %s5 = inlined_call_operand.hbm [shape: bf16[128,128], index: 5, kind: input, shape index: {}]
  %s6 = inlined_call_operand.vmem [shape: f32[1,128], index: 6, kind: input, shape index: {}]
  %s7 = inlined_call_operand.hbm [shape: bf16[128,128], index: 7, kind: input, shape index: {}]
  %s8 = inlined_call_operand.vmem [shape: f32[1,128], index: 8, kind: input, shape index: {}]
  %s9 = inlined_call_operand.hbm [shape: bf16[128,128], index: 9, kind: input, shape index: {}]
  %s10 = inlined_call_operand.hbm [shape: f32[512,128], index: 10, kind: output, shape index: {}]
  %s11 = sld [smem:[#allocation0]]
  $region97: #{tpu_custom_call.1} parent=0
    _
  %s13 = ssub.s32 1, %s11
  %s14 = scalar_select 0, %s13, %s11
  $region1: #{tpu_custom_call.1} parent=0
    #allocation2 [shape = 'u8[1048576]{0}', space=vmem, size = 0x100000, scoped, tag = 'input window, operand 0']
    #allocation3 [shape = 's32[2]{0}', space=sflag, size = 0x8, scoped, tag = 'scoped memory for tpu_custom_call.1']
    #allocation4 [shape = 's32[2]{0}', space=sflag, size = 0x8, scoped, tag = 'scoped memory for tpu_custom_call.1']
    #allocation5 [shape = 'u8[262144]{0}', space=vmem, size = 0x40000, scoped, tag = 'input window, operand 1, single buffered']
    #allocation6 [shape = 's32[1]{0}', space=sflag, size = 0x4, scoped, tag = 'scoped memory for tpu_custom_call.1']
    #allocation7 [shape = 'u8[32768]{0}', space=vmem, size = 0x8000, scoped, tag = 'input window, operand 3, single buffered']
    #allocation8 [shape = 'u8[32768]{0}', space=vmem, size = 0x8000, scoped, tag = 'input window, operand 5, single buffered']
    #allocation9 [shape = 's32[1]{0}', space=sflag, size = 0x4, scoped, tag = 'scoped memory for tpu_custom_call.1']
    #allocation10 [shape = 'u8[32768]{0}', space=vmem, size = 0x8000, scoped, tag = 'input window, operand 7, single buffered']
    #allocation11 [shape = 'u8[32768]{0}', space=vmem, size = 0x8000, scoped, tag = 'input window, operand 9, single buffered']
    #allocation12 [shape = 's32[1]{0}', space=sflag, size = 0x4, scoped, tag = 'scoped memory for tpu_custom_call.1']
    #allocation13 [shape = 'u8[262144]{0}', space=vmem, size = 0x40000, scoped, tag = 'output window, operand 0']
    %15 = vsyncpa [#allocation3], 0
    %s16 = scalar_lea.sflag [#allocation3], 1
    %17 = vsyncpa %s16, 0
    %18 = vsyncpa [#allocation6], 0
    %19 = vsyncpa [#allocation9], 0
    %20 = vsyncpa [#allocation12], 0
    %21 = vsyncpa [#allocation4], 0
    %s22 = scalar_lea.sflag [#allocation4], 1
    %23 = vsyncpa %s22, 0
    loop: start=0, step=1, limit=4
    $region2: #{tpu_custom_call.1} parent=1 // loop_pre_header
      _
    $region3: #{tpu_custom_call.1} parent=1 // loop_header
      %s25 = sphi 0, %s29
      %p26 = scmp.ge.s32.totalorder %s25, 4
      %s35 = sphi 0, %s37
      %s38 = sphi 0, %s35
      %s39 = sphi 0, %s38
      %s55 = sphi 0, %s39
      %s59 = sphi 0, %s59
      %s61 = sphi 0, %s59
      %s62 = sphi 0, %s61
      %s76 = sphi 0, %s62
      %s80 = sphi 0, %s80
      %s82 = sphi 0, %s80
      %s83 = sphi 0, %s82
      %s97 = sphi 0, %s83
      %s101 = sphi 0, %s101
      %s103 = sphi 0, %s101
      %s104 = sphi 0, %s103
      %s118 = sphi 0, %s104
      %s122 = sphi 0, %s122
      %s124 = sphi 0, %s122
      %s125 = sphi 0, %s124
      %s139 = sphi 0, %s125
      %s143 = sphi 0, %s143
      %s145 = sphi 0, %s143
      %s146 = sphi 0, %s145
      %s160 = sphi 0, %s146
      %s164 = sphi 0, %s164
      %s166 = sphi 0, %s164
      %s167 = sphi 0, %s166
      %s181 = sphi 0, %s167
      %s185 = sphi 0, %s185
      %s187 = sphi 0, %s185
      %s188 = sphi 0, %s187
      %s202 = sphi 0, %s188
      %s206 = sphi 0, %s206
      %s208 = sphi 0, %s206
      %s209 = sphi 0, %s208
      %s223 = sphi 0, %s209
      %s227 = sphi 0, %s227
      %s229 = sphi 0, %s227
      %s230 = sphi 0, %s229
      %s244 = sphi 0, %s230
      %s250 = sphi 0, %s252
      %s253 = sphi 0, %s250
      %s254 = sphi 0, %s253
      %s270 = sphi 0, %s254
    $region4: #{tpu_custom_call.1} parent=1 // loop_header_branch
      %28 = sbr.rel (%p26) target = $region8
    $region5: #{tpu_custom_call.1} parent=1 // loop_body
      %s30 = ssub.s32 %s25, 1
      %s31 = ssub.s32 %s25, 2
      %s32 = sadd.s32 %s25, 1
      %s33 = ssub.s32 %s25, %s32
      %p34 = scmp.eq.s32.totalorder %s33, 0
      %s36 = sadd.s32 %s35, 1
      %s37 = scalar_select %p34, %s35, %s36
      %p40 = pneg %p34
      %p41 = scmp.eq.s32.totalorder %s25, 1
      %p42 = por %p40, %p41
      %p43 = scmp.ne.s32.totalorder %s35, %s38
      %p44 = scmp.eq.s32.totalorder %s25, 0
      %p45 = por %p43, %p44
      %p46 = scmp.ne.s32.totalorder %s35, %s38
      %p47 = scmp.eq.s32.totalorder %s30, 1
      %p48 = por %p46, %p47
      %p49 = scmp.ne.s32.totalorder %s38, %s39
      %p50 = scmp.eq.s32.totalorder %s30, 0
      %p51 = por %p49, %p50
      %p52 = scmp.ne.s32.totalorder %s38, %s39
      %p53 = scmp.eq.s32.totalorder %s31, 1
      %p54 = por %p52, %p53
      %p56 = scmp.ne.s32.totalorder %s39, %s55
      %p57 = scmp.eq.s32.totalorder %s31, 0
      %p58 = por %p56, %p57
      %s60 = sadd.s32 %s59, 1
      %p63 = scmp.eq.s32.totalorder %s25, 1
      %p64 = scmp.ne.s32.totalorder %s59, %s61
      %p65 = scmp.eq.s32.totalorder %s25, 0
      %p66 = por %p64, %p65
      %p67 = scmp.ne.s32.totalorder %s59, %s61
      %p68 = scmp.eq.s32.totalorder %s30, 1
      %p69 = por %p67, %p68
      %p70 = scmp.ne.s32.totalorder %s61, %s62
      %p71 = scmp.eq.s32.totalorder %s30, 0
      %p72 = por %p70, %p71
      %p73 = scmp.ne.s32.totalorder %s61, %s62
      %p74 = scmp.eq.s32.totalorder %s31, 1
      %p75 = por %p73, %p74
      %p77 = scmp.ne.s32.totalorder %s62, %s76
      %p78 = scmp.eq.s32.totalorder %s31, 0
      %p79 = por %p77, %p78
      %s81 = sadd.s32 %s80, 1
      %p84 = scmp.eq.s32.totalorder %s25, 1
      %p85 = scmp.ne.s32.totalorder %s80, %s82
      %p86 = scmp.eq.s32.totalorder %s25, 0
      %p87 = por %p85, %p86
      %p88 = scmp.ne.s32.totalorder %s80, %s82
      %p89 = scmp.eq.s32.totalorder %s30, 1
      %p90 = por %p88, %p89
      %p91 = scmp.ne.s32.totalorder %s82, %s83
      %p92 = scmp.eq.s32.totalorder %s30, 0
      %p93 = por %p91, %p92
      %p94 = scmp.ne.s32.totalorder %s82, %s83
      %p95 = scmp.eq.s32.totalorder %s31, 1
      %p96 = por %p94, %p95
      %p98 = scmp.ne.s32.totalorder %s83, %s97
      %p99 = scmp.eq.s32.totalorder %s31, 0
      %p100 = por %p98, %p99
      %s102 = sadd.s32 %s101, 1
      %p105 = scmp.eq.s32.totalorder %s25, 1
      %p106 = scmp.ne.s32.totalorder %s101, %s103
      %p107 = scmp.eq.s32.totalorder %s25, 0
      %p108 = por %p106, %p107
      %p109 = scmp.ne.s32.totalorder %s101, %s103
      %p110 = scmp.eq.s32.totalorder %s30, 1
      %p111 = por %p109, %p110
      %p112 = scmp.ne.s32.totalorder %s103, %s104
      %p113 = scmp.eq.s32.totalorder %s30, 0
      %p114 = por %p112, %p113
      %p115 = scmp.ne.s32.totalorder %s103, %s104
      %p116 = scmp.eq.s32.totalorder %s31, 1
      %p117 = por %p115, %p116
      %p119 = scmp.ne.s32.totalorder %s104, %s118
      %p120 = scmp.eq.s32.totalorder %s31, 0
      %p121 = por %p119, %p120
      %s123 = sadd.s32 %s122, 1
      %p126 = scmp.eq.s32.totalorder %s25, 1
      %p127 = scmp.ne.s32.totalorder %s122, %s124
      %p128 = scmp.eq.s32.totalorder %s25, 0
      %p129 = por %p127, %p128
      %p130 = scmp.ne.s32.totalorder %s122, %s124
      %p131 = scmp.eq.s32.totalorder %s30, 1
      %p132 = por %p130, %p131
      %p133 = scmp.ne.s32.totalorder %s124, %s125
      %p134 = scmp.eq.s32.totalorder %s30, 0
      %p135 = por %p133, %p134
      %p136 = scmp.ne.s32.totalorder %s124, %s125
      %p137 = scmp.eq.s32.totalorder %s31, 1
      %p138 = por %p136, %p137
      %p140 = scmp.ne.s32.totalorder %s125, %s139
      %p141 = scmp.eq.s32.totalorder %s31, 0
      %p142 = por %p140, %p141
      %s144 = sadd.s32 %s143, 1
      %p147 = scmp.eq.s32.totalorder %s25, 1
      %p148 = scmp.ne.s32.totalorder %s143, %s145
      %p149 = scmp.eq.s32.totalorder %s25, 0
      %p150 = por %p148, %p149
      %p151 = scmp.ne.s32.totalorder %s143, %s145
      %p152 = scmp.eq.s32.totalorder %s30, 1
      %p153 = por %p151, %p152
      %p154 = scmp.ne.s32.totalorder %s145, %s146
      %p155 = scmp.eq.s32.totalorder %s30, 0
      %p156 = por %p154, %p155
      %p157 = scmp.ne.s32.totalorder %s145, %s146
      %p158 = scmp.eq.s32.totalorder %s31, 1
      %p159 = por %p157, %p158
      %p161 = scmp.ne.s32.totalorder %s146, %s160
      %p162 = scmp.eq.s32.totalorder %s31, 0
      %p163 = por %p161, %p162
      %s165 = sadd.s32 %s164, 1
      %p168 = scmp.eq.s32.totalorder %s25, 1
      %p169 = scmp.ne.s32.totalorder %s164, %s166
      %p170 = scmp.eq.s32.totalorder %s25, 0
      %p171 = por %p169, %p170
      %p172 = scmp.ne.s32.totalorder %s164, %s166
      %p173 = scmp.eq.s32.totalorder %s30, 1
      %p174 = por %p172, %p173
      %p175 = scmp.ne.s32.totalorder %s166, %s167
      %p176 = scmp.eq.s32.totalorder %s30, 0
      %p177 = por %p175, %p176
      %p178 = scmp.ne.s32.totalorder %s166, %s167
      %p179 = scmp.eq.s32.totalorder %s31, 1
      %p180 = por %p178, %p179
      %p182 = scmp.ne.s32.totalorder %s167, %s181
      %p183 = scmp.eq.s32.totalorder %s31, 0
      %p184 = por %p182, %p183
      %s186 = sadd.s32 %s185, 1
      %p189 = scmp.eq.s32.totalorder %s25, 1
      %p190 = scmp.ne.s32.totalorder %s185, %s187
      %p191 = scmp.eq.s32.totalorder %s25, 0
      %p192 = por %p190, %p191
      %p193 = scmp.ne.s32.totalorder %s185, %s187
      %p194 = scmp.eq.s32.totalorder %s30, 1
      %p195 = por %p193, %p194
      %p196 = scmp.ne.s32.totalorder %s187, %s188
      %p197 = scmp.eq.s32.totalorder %s30, 0
      %p198 = por %p196, %p197
      %p199 = scmp.ne.s32.totalorder %s187, %s188
      %p200 = scmp.eq.s32.totalorder %s31, 1
      %p201 = por %p199, %p200
      %p203 = scmp.ne.s32.totalorder %s188, %s202
      %p204 = scmp.eq.s32.totalorder %s31, 0
      %p205 = por %p203, %p204
      %s207 = sadd.s32 %s206, 1
      %p210 = scmp.eq.s32.totalorder %s25, 1
      %p211 = scmp.ne.s32.totalorder %s206, %s208
      %p212 = scmp.eq.s32.totalorder %s25, 0
      %p213 = por %p211, %p212
      %p214 = scmp.ne.s32.totalorder %s206, %s208
      %p215 = scmp.eq.s32.totalorder %s30, 1
      %p216 = por %p214, %p215
      %p217 = scmp.ne.s32.totalorder %s208, %s209
      %p218 = scmp.eq.s32.totalorder %s30, 0
      %p219 = por %p217, %p218
      %p220 = scmp.ne.s32.totalorder %s208, %s209
      %p221 = scmp.eq.s32.totalorder %s31, 1
      %p222 = por %p220, %p221
      %p224 = scmp.ne.s32.totalorder %s209, %s223
      %p225 = scmp.eq.s32.totalorder %s31, 0
      %p226 = por %p224, %p225
      %s228 = sadd.s32 %s227, 1
      %p231 = scmp.eq.s32.totalorder %s25, 1
      %p232 = scmp.ne.s32.totalorder %s227, %s229
      %p233 = scmp.eq.s32.totalorder %s25, 0
      %p234 = por %p232, %p233
      %p235 = scmp.ne.s32.totalorder %s227, %s229
      %p236 = scmp.eq.s32.totalorder %s30, 1
      %p237 = por %p235, %p236
      %p238 = scmp.ne.s32.totalorder %s229, %s230
      %p239 = scmp.eq.s32.totalorder %s30, 0
      %p240 = por %p238, %p239
      %p241 = scmp.ne.s32.totalorder %s229, %s230
      %p242 = scmp.eq.s32.totalorder %s31, 1
      %p243 = por %p241, %p242
      %p245 = scmp.ne.s32.totalorder %s230, %s244
      %p246 = scmp.eq.s32.totalorder %s31, 0
      %p247 = por %p245, %p246
      %s248 = ssub.s32 %s25, %s32
      %p249 = scmp.eq.s32.totalorder %s248, 0
      %s251 = sadd.s32 %s250, 1
      %s252 = scalar_select %p249, %s250, %s251
      %p255 = pneg %p249
      %p256 = scmp.eq.s32.totalorder %s25, 1
      %p257 = por %p255, %p256
      %p258 = scmp.ne.s32.totalorder %s250, %s253
      %p259 = scmp.eq.s32.totalorder %s25, 0
      %p260 = por %p258, %p259
      %p261 = scmp.ne.s32.totalorder %s250, %s253
      %p262 = scmp.eq.s32.totalorder %s30, 1
      %p263 = por %p261, %p262
      %p264 = scmp.ne.s32.totalorder %s253, %s254
      %p265 = scmp.eq.s32.totalorder %s30, 0
      %p266 = por %p264, %p265
      %p267 = scmp.ne.s32.totalorder %s253, %s254
      %p268 = scmp.eq.s32.totalorder %s31, 1
      %p269 = por %p267, %p268
      %p271 = scmp.ne.s32.totalorder %s254, %s270
      %p272 = scmp.eq.s32.totalorder %s31, 0
      %p273 = por %p271, %p272
      %p274 = scmp.le.s32.totalorder 1, %s25
      %p275 = scmp.lt.s32.totalorder %s25, 3
      %p276 = pnand %p274, %p275
      %p277 = pneg %p276
      // Predicated region
      $region9: #{tpu_custom_call.1} parent=5 // pred_check
        _
      $region10: #{tpu_custom_call.1} parent=5 // pred_check_branch
        %279 = sbr.rel (%p276) target = $region12
      $region11: #{tpu_custom_call.1} parent=5 // pred_region
        %s280 = ssub.s32 %s25, 1
        // Predicated region
        $region13: #{tpu_custom_call.1} parent=11 // pred_check
          %p281 = pneg %p72
        $region14: #{tpu_custom_call.1} parent=11 // pred_check_branch
          %283 = sbr.rel (%p281) target = $region16
        $region15: #{tpu_custom_call.1} parent=11 // pred_region
          %s285 = ssub.s32 8192, 8192
          %286 = vsyncadd [#allocation6], %s285
          %s287 = sshll.u32 [#allocation5], 4
          %s288 = int_to_ptr.vmem [resolvable:$true] %s287
          %293 = dma.hbm_to_vmem [thread:$0]  %s1, 8192, %s288, [#allocation6], 64, 64, 4
        $region16: #{tpu_custom_call.1} parent=11 // pred_fallthru
          _
        // Predicated region
        $region17: #{tpu_custom_call.1} parent=11 // pred_check
          %p294 = pneg %p93
        $region18: #{tpu_custom_call.1} parent=11 // pred_check_branch
          %296 = sbr.rel (%p294) target = $region20
        $region19: #{tpu_custom_call.1} parent=11 // pred_region
          _
        $region20: #{tpu_custom_call.1} parent=11 // pred_fallthru
          _
        // Predicated region
        $region21: #{tpu_custom_call.1} parent=11 // pred_check
          %p297 = pneg %p114
        $region22: #{tpu_custom_call.1} parent=11 // pred_check_branch
          %299 = sbr.rel (%p297) target = $region24
        $region23: #{tpu_custom_call.1} parent=11 // pred_region
          %s301 = ssub.s32 1024, 1024
          %302 = vsyncadd [#allocation6], %s301
          %s303 = sshll.u32 [#allocation7], 4
          %s304 = int_to_ptr.vmem [resolvable:$true] %s303
          %309 = dma.hbm_to_vmem [thread:$0]  %s3, 1024, %s304, [#allocation6], 64, 64, 4
        $region24: #{tpu_custom_call.1} parent=11 // pred_fallthru
          _
        // Predicated region
        $region25: #{tpu_custom_call.1} parent=11 // pred_check
          %p310 = pneg %p135
        $region26: #{tpu_custom_call.1} parent=11 // pred_check_branch
          %312 = sbr.rel (%p310) target = $region28
        $region27: #{tpu_custom_call.1} parent=11 // pred_region
          _
        $region28: #{tpu_custom_call.1} parent=11 // pred_fallthru
          _
        // Predicated region
        $region29: #{tpu_custom_call.1} parent=11 // pred_check
          %p313 = pneg %p156
        $region30: #{tpu_custom_call.1} parent=11 // pred_check_branch
          %315 = sbr.rel (%p313) target = $region32
        $region31: #{tpu_custom_call.1} parent=11 // pred_region
          %s317 = ssub.s32 1024, 1024
          %318 = vsyncadd [#allocation9], %s317
          %s319 = sshll.u32 [#allocation8], 4
          %s320 = int_to_ptr.vmem [resolvable:$true] %s319
          %325 = dma.hbm_to_vmem [thread:$0]  %s5, 1024, %s320, [#allocation9], 64, 64, 4
        $region32: #{tpu_custom_call.1} parent=11 // pred_fallthru
          _
        // Predicated region
        $region33: #{tpu_custom_call.1} parent=11 // pred_check
          %p326 = pneg %p177
        $region34: #{tpu_custom_call.1} parent=11 // pred_check_branch
          %328 = sbr.rel (%p326) target = $region36
        $region35: #{tpu_custom_call.1} parent=11 // pred_region
          _
        $region36: #{tpu_custom_call.1} parent=11 // pred_fallthru
          _
        // Predicated region
        $region37: #{tpu_custom_call.1} parent=11 // pred_check
          %p329 = pneg %p198
        $region38: #{tpu_custom_call.1} parent=11 // pred_check_branch
          %331 = sbr.rel (%p329) target = $region40
        $region39: #{tpu_custom_call.1} parent=11 // pred_region
          %s333 = ssub.s32 1024, 1024
          %334 = vsyncadd [#allocation9], %s333
          %s335 = sshll.u32 [#allocation10], 4
          %s336 = int_to_ptr.vmem [resolvable:$true] %s335
          %341 = dma.hbm_to_vmem [thread:$0]  %s7, 1024, %s336, [#allocation9], 64, 64, 4
        $region40: #{tpu_custom_call.1} parent=11 // pred_fallthru
          _
        // Predicated region
        $region41: #{tpu_custom_call.1} parent=11 // pred_check
          %p342 = pneg %p219
        $region42: #{tpu_custom_call.1} parent=11 // pred_check_branch
          %344 = sbr.rel (%p342) target = $region44
        $region43: #{tpu_custom_call.1} parent=11 // pred_region
          _
        $region44: #{tpu_custom_call.1} parent=11 // pred_fallthru
          _
        // Predicated region
        $region45: #{tpu_custom_call.1} parent=11 // pred_check
          %p345 = pneg %p240
        $region46: #{tpu_custom_call.1} parent=11 // pred_check_branch
          %347 = sbr.rel (%p345) target = $region48
        $region47: #{tpu_custom_call.1} parent=11 // pred_region
          %s349 = ssub.s32 1024, 1024
          %350 = vsyncadd [#allocation12], %s349
          %s351 = sshll.u32 [#allocation11], 4
          %s352 = int_to_ptr.vmem [resolvable:$true] %s351
          %357 = dma.hbm_to_vmem [thread:$0]  %s9, 1024, %s352, [#allocation12], 64, 64, 4
        $region48: #{tpu_custom_call.1} parent=11 // pred_fallthru
          _
      $region12: #{tpu_custom_call.1} parent=5 // pred_fallthru
        _
      %p358 = scmp.lt.s32.totalorder %s25, 2
      // Predicated region
      $region49: #{tpu_custom_call.1} parent=5 // pred_check
        %p359 = pneg %p358
      $region50: #{tpu_custom_call.1} parent=5 // pred_check_branch
        %361 = sbr.rel (%p359) target = $region52
      $region51: #{tpu_custom_call.1} parent=5 // pred_region
        // Predicated region
        $region53: #{tpu_custom_call.1} parent=51 // pred_check
          %p362 = pneg %p45
        $region54: #{tpu_custom_call.1} parent=51 // pred_check_branch
          %364 = sbr.rel (%p362) target = $region56
        $region55: #{tpu_custom_call.1} parent=51 // pred_region
          %s365 = sand.u32 %s35, 1
          %s366 = scalar_lea.sflag [#allocation3], %s365
          %s367 = sand.u32 %s35, 1
          %s368 = smul.addr %s367, 1024
          %s369 = scalar_lea.vmem [#allocation2], %s368
          %s370 = smul.u32 32, %s25
          %s372 = ssub.s32 16384, 16384
          %373 = vsyncadd %s366, %s372
          %s374 = smul.addr %s370, 8
          %s375 = smul.addr %s374, 64
          %s376 = scalar_lea.hbm %s0, %s375
          %s377 = sshll.u32 %s369, 4
          %s378 = int_to_ptr.vmem [resolvable:$true] %s377
          %383 = dma.hbm_to_vmem [thread:$0]  %s376, 16384, %s378, %s366, 512, 512, 32
        $region56: #{tpu_custom_call.1} parent=51 // pred_fallthru
          _
      $region52: #{tpu_custom_call.1} parent=5 // pred_fallthru
        _
      %p384 = scmp.le.s32.totalorder 1, %s25
      %p385 = scmp.lt.s32.totalorder %s25, 3
      %p386 = pnand %p384, %p385
      %p387 = pneg %p386
      // Predicated region
      $region57: #{tpu_custom_call.1} parent=5 // pred_check
        _
      $region58: #{tpu_custom_call.1} parent=5 // pred_check_branch
        %389 = sbr.rel (%p386) target = $region60
      $region59: #{tpu_custom_call.1} parent=5 // pred_region
        %s390 = ssub.s32 %s25, 1
        %s391 = sand.u32 %s38, 1
        %s392 = scalar_lea.sflag [#allocation3], %s391
        %s393 = sand.u32 %s38, 1
        %s394 = smul.addr %s393, 1024
        %s395 = scalar_lea.vmem [#allocation2], %s394
        // Predicated region
        $region61: #{tpu_custom_call.1} parent=59 // pred_check
          %p396 = pneg %p51
        $region62: #{tpu_custom_call.1} parent=59 // pred_check_branch
          %398 = sbr.rel (%p396) target = $region64
        $region63: #{tpu_custom_call.1} parent=59 // pred_region
          %399 = dma.done %s392, 16384
        $region64: #{tpu_custom_call.1} parent=59 // pred_fallthru
          _
        // Predicated region
        $region65: #{tpu_custom_call.1} parent=59 // pred_check
          %p400 = pneg %p72
        $region66: #{tpu_custom_call.1} parent=59 // pred_check_branch
          %402 = sbr.rel (%p400) target = $region68
        $region67: #{tpu_custom_call.1} parent=59 // pred_region
          %403 = dma.done [#allocation6], 8192
        $region68: #{tpu_custom_call.1} parent=59 // pred_fallthru
          _
        // Predicated region
        $region69: #{tpu_custom_call.1} parent=59 // pred_check
          %p404 = pneg %p114
        $region70: #{tpu_custom_call.1} parent=59 // pred_check_branch
          %406 = sbr.rel (%p404) target = $region72
        $region71: #{tpu_custom_call.1} parent=59 // pred_region
          %407 = dma.done [#allocation6], 1024
        $region72: #{tpu_custom_call.1} parent=59 // pred_fallthru
          _
        // Predicated region
        $region73: #{tpu_custom_call.1} parent=59 // pred_check
          %p408 = pneg %p156
        $region74: #{tpu_custom_call.1} parent=59 // pred_check_branch
          %410 = sbr.rel (%p408) target = $region76
        $region75: #{tpu_custom_call.1} parent=59 // pred_region
          %411 = dma.done [#allocation9], 1024
        $region76: #{tpu_custom_call.1} parent=59 // pred_fallthru
          _
        // Predicated region
        $region77: #{tpu_custom_call.1} parent=59 // pred_check
          %p412 = pneg %p198
        $region78: #{tpu_custom_call.1} parent=59 // pred_check_branch
          %414 = sbr.rel (%p412) target = $region80
        $region79: #{tpu_custom_call.1} parent=59 // pred_region
          %415 = dma.done [#allocation9], 1024
        $region80: #{tpu_custom_call.1} parent=59 // pred_fallthru
          _
        // Predicated region
        $region81: #{tpu_custom_call.1} parent=59 // pred_check
          %p416 = pneg %p240
        $region82: #{tpu_custom_call.1} parent=59 // pred_check_branch
          %418 = sbr.rel (%p416) target = $region84
        $region83: #{tpu_custom_call.1} parent=59 // pred_region
          %419 = dma.done [#allocation12], 1024
        $region84: #{tpu_custom_call.1} parent=59 // pred_fallthru
          _
        %s420 = sand.u32 %s38, 1
        %s421 = scalar_lea.sflag [#allocation3], %s420
        %s422 = sand.u32 %s38, 1
        %s423 = smul.addr %s422, 1024
        %s424 = scalar_lea.vmem [#allocation2], %s423
        %p425 = pneg %p51
        %p426 = pneg %p48
        %p427 = pneg %p72
        %p428 = pneg %p69
        %p429 = pneg %p93
        %p430 = pneg %p90
        %p431 = pneg %p114
        %p432 = pneg %p111
        %p433 = pneg %p135
        %p434 = pneg %p132
        %p435 = pneg %p156
        %p436 = pneg %p153
        %p437 = pneg %p177
        %p438 = pneg %p174
        %p439 = pneg %p198
        %p440 = pneg %p195
        %p441 = pneg %p219
        %p442 = pneg %p216
        %p443 = pneg %p240
        %p444 = pneg %p237
        %p445 = pneg %p266
        %p446 = pneg %p263
        %s447 = sand.u32 %s253, 1
        %s448 = scalar_lea.sflag [#allocation4], %s447
        %s449 = sand.u32 %s253, 1
        %s450 = smul.addr %s449, 256
        %s451 = scalar_lea.vmem [#allocation13], %s450
        %s452 = smul.u32 32, %s30
        %s453 = smul.u32 32, %s30
        %v455 = vld [vmem:[%s395] sm:$0xff]
        %v456 = vld [vmem:[%s395 + $0x8] sm:$0xff]
        %v457 = vld [vmem:[%s395 + $0x10] sm:$0xff]
        %v458 = vld [vmem:[%s395 + $0x18] sm:$0xff]
        %v459 = vld [vmem:[%s395 + $0x20] sm:$0xff]
        %v460 = vld [vmem:[%s395 + $0x28] sm:$0xff]
        %v461 = vld [vmem:[%s395 + $0x30] sm:$0xff]
        %v462 = vld [vmem:[%s395 + $0x38] sm:$0xff]
        %v463 = vld [vmem:[%s395 + $0x40] sm:$0xff]
        %v464 = vld [vmem:[%s395 + $0x48] sm:$0xff]
        %v465 = vld [vmem:[%s395 + $0x50] sm:$0xff]
        %v466 = vld [vmem:[%s395 + $0x58] sm:$0xff]
        %v467 = vld [vmem:[%s395 + $0x60] sm:$0xff]
        %v468 = vld [vmem:[%s395 + $0x68] sm:$0xff]
        %v469 = vld [vmem:[%s395 + $0x70] sm:$0xff]
        %v470 = vld [vmem:[%s395 + $0x78] sm:$0xff]
        %v471 = vld [vmem:[%s395 + $0x80] sm:$0xff]
        %v472 = vld [vmem:[%s395 + $0x88] sm:$0xff]
        %v473 = vld [vmem:[%s395 + $0x90] sm:$0xff]
        %v474 = vld [vmem:[%s395 + $0x98] sm:$0xff]
        %v475 = vld [vmem:[%s395 + $0xa0] sm:$0xff]
        %v476 = vld [vmem:[%s395 + $0xa8] sm:$0xff]
        %v477 = vld [vmem:[%s395 + $0xb0] sm:$0xff]
        %v478 = vld [vmem:[%s395 + $0xb8] sm:$0xff]
        %v479 = vld [vmem:[%s395 + $0xc0] sm:$0xff]
        %v480 = vld [vmem:[%s395 + $0xc8] sm:$0xff]
        %v481 = vld [vmem:[%s395 + $0xd0] sm:$0xff]
        %v482 = vld [vmem:[%s395 + $0xd8] sm:$0xff]
        %v483 = vld [vmem:[%s395 + $0xe0] sm:$0xff]
        %v484 = vld [vmem:[%s395 + $0xe8] sm:$0xff]
        %v485 = vld [vmem:[%s395 + $0xf0] sm:$0xff]
        %v486 = vld [vmem:[%s395 + $0xf8] sm:$0xff]
        %v487 = vld [vmem:[%s395 + $0x100] sm:$0xff]
        %v488 = vld [vmem:[%s395 + $0x108] sm:$0xff]
        %v489 = vld [vmem:[%s395 + $0x110] sm:$0xff]
        %v490 = vld [vmem:[%s395 + $0x118] sm:$0xff]
        %v491 = vld [vmem:[%s395 + $0x120] sm:$0xff]
        %v492 = vld [vmem:[%s395 + $0x128] sm:$0xff]
        %v493 = vld [vmem:[%s395 + $0x130] sm:$0xff]
        %v494 = vld [vmem:[%s395 + $0x138] sm:$0xff]
        %v495 = vld [vmem:[%s395 + $0x140] sm:$0xff]
        %v496 = vld [vmem:[%s395 + $0x148] sm:$0xff]
        %v497 = vld [vmem:[%s395 + $0x150] sm:$0xff]
        %v498 = vld [vmem:[%s395 + $0x158] sm:$0xff]
        %v499 = vld [vmem:[%s395 + $0x160] sm:$0xff]
        %v500 = vld [vmem:[%s395 + $0x168] sm:$0xff]
        %v501 = vld [vmem:[%s395 + $0x170] sm:$0xff]
        %v502 = vld [vmem:[%s395 + $0x178] sm:$0xff]
        %v503 = vld [vmem:[%s395 + $0x180] sm:$0xff]
        %v504 = vld [vmem:[%s395 + $0x188] sm:$0xff]
        %v505 = vld [vmem:[%s395 + $0x190] sm:$0xff]
        %v506 = vld [vmem:[%s395 + $0x198] sm:$0xff]
        %v507 = vld [vmem:[%s395 + $0x1a0] sm:$0xff]
        %v508 = vld [vmem:[%s395 + $0x1a8] sm:$0xff]
        %v509 = vld [vmem:[%s395 + $0x1b0] sm:$0xff]
        %v510 = vld [vmem:[%s395 + $0x1b8] sm:$0xff]
        %v511 = vld [vmem:[%s395 + $0x1c0] sm:$0xff]
        %v512 = vld [vmem:[%s395 + $0x1c8] sm:$0xff]
        %v513 = vld [vmem:[%s395 + $0x1d0] sm:$0xff]
        %v514 = vld [vmem:[%s395 + $0x1d8] sm:$0xff]
        %v515 = vld [vmem:[%s395 + $0x1e0] sm:$0xff]
        %v516 = vld [vmem:[%s395 + $0x1e8] sm:$0xff]
        %v517 = vld [vmem:[%s395 + $0x1f0] sm:$0xff]
        %v518 = vld [vmem:[%s395 + $0x1f8] sm:$0xff]
        %v519 = vld [vmem:[%s395 + $0x200] sm:$0xff]
        %v520 = vld [vmem:[%s395 + $0x208] sm:$0xff]
        %v521 = vld [vmem:[%s395 + $0x210] sm:$0xff]
        %v522 = vld [vmem:[%s395 + $0x218] sm:$0xff]
        %v523 = vld [vmem:[%s395 + $0x220] sm:$0xff]
        %v524 = vld [vmem:[%s395 + $0x228] sm:$0xff]
        %v525 = vld [vmem:[%s395 + $0x230] sm:$0xff]
        %v526 = vld [vmem:[%s395 + $0x238] sm:$0xff]
        %v527 = vld [vmem:[%s395 + $0x240] sm:$0xff]
        %v528 = vld [vmem:[%s395 + $0x248] sm:$0xff]
        %v529 = vld [vmem:[%s395 + $0x250] sm:$0xff]
        %v530 = vld [vmem:[%s395 + $0x258] sm:$0xff]
        %v531 = vld [vmem:[%s395 + $0x260] sm:$0xff]
        %v532 = vld [vmem:[%s395 + $0x268] sm:$0xff]
        %v533 = vld [vmem:[%s395 + $0x270] sm:$0xff]
        %v534 = vld [vmem:[%s395 + $0x278] sm:$0xff]
        %v535 = vld [vmem:[%s395 + $0x280] sm:$0xff]
        %v536 = vld [vmem:[%s395 + $0x288] sm:$0xff]
        %v537 = vld [vmem:[%s395 + $0x290] sm:$0xff]
        %v538 = vld [vmem:[%s395 + $0x298] sm:$0xff]
        %v539 = vld [vmem:[%s395 + $0x2a0] sm:$0xff]
        %v540 = vld [vmem:[%s395 + $0x2a8] sm:$0xff]
        %v541 = vld [vmem:[%s395 + $0x2b0] sm:$0xff]
        %v542 = vld [vmem:[%s395 + $0x2b8] sm:$0xff]
        %v543 = vld [vmem:[%s395 + $0x2c0] sm:$0xff]
        %v544 = vld [vmem:[%s395 + $0x2c8] sm:$0xff]
        %v545 = vld [vmem:[%s395 + $0x2d0] sm:$0xff]
        %v546 = vld [vmem:[%s395 + $0x2d8] sm:$0xff]
        %v547 = vld [vmem:[%s395 + $0x2e0] sm:$0xff]
        %v548 = vld [vmem:[%s395 + $0x2e8] sm:$0xff]
        %v549 = vld [vmem:[%s395 + $0x2f0] sm:$0xff]
        %v550 = vld [vmem:[%s395 + $0x2f8] sm:$0xff]
        %v551 = vld [vmem:[%s395 + $0x300] sm:$0xff]
        %v552 = vld [vmem:[%s395 + $0x308] sm:$0xff]
        %v553 = vld [vmem:[%s395 + $0x310] sm:$0xff]
        %v554 = vld [vmem:[%s395 + $0x318] sm:$0xff]
        %v555 = vld [vmem:[%s395 + $0x320] sm:$0xff]
        %v556 = vld [vmem:[%s395 + $0x328] sm:$0xff]
        %v557 = vld [vmem:[%s395 + $0x330] sm:$0xff]
        %v558 = vld [vmem:[%s395 + $0x338] sm:$0xff]
        %v559 = vld [vmem:[%s395 + $0x340] sm:$0xff]
        %v560 = vld [vmem:[%s395 + $0x348] sm:$0xff]
        %v561 = vld [vmem:[%s395 + $0x350] sm:$0xff]
        %v562 = vld [vmem:[%s395 + $0x358] sm:$0xff]
        %v563 = vld [vmem:[%s395 + $0x360] sm:$0xff]
        %v564 = vld [vmem:[%s395 + $0x368] sm:$0xff]
        %v565 = vld [vmem:[%s395 + $0x370] sm:$0xff]
        %v566 = vld [vmem:[%s395 + $0x378] sm:$0xff]
        %v567 = vld [vmem:[%s395 + $0x380] sm:$0xff]
        %v568 = vld [vmem:[%s395 + $0x388] sm:$0xff]
        %v569 = vld [vmem:[%s395 + $0x390] sm:$0xff]
        %v570 = vld [vmem:[%s395 + $0x398] sm:$0xff]
        %v571 = vld [vmem:[%s395 + $0x3a0] sm:$0xff]
        %v572 = vld [vmem:[%s395 + $0x3a8] sm:$0xff]
        %v573 = vld [vmem:[%s395 + $0x3b0] sm:$0xff]
        %v574 = vld [vmem:[%s395 + $0x3b8] sm:$0xff]
        %v575 = vld [vmem:[%s395 + $0x3c0] sm:$0xff]
        %v576 = vld [vmem:[%s395 + $0x3c8] sm:$0xff]
        %v577 = vld [vmem:[%s395 + $0x3d0] sm:$0xff]
        %v578 = vld [vmem:[%s395 + $0x3d8] sm:$0xff]
        %v579 = vld [vmem:[%s395 + $0x3e0] sm:$0xff]
        %v580 = vld [vmem:[%s395 + $0x3e8] sm:$0xff]
        %v581 = vld [vmem:[%s395 + $0x3f0] sm:$0xff]
        %v582 = vld [vmem:[%s395 + $0x3f8] sm:$0xff]
        %v583 = vld [vmem:[#allocation5] sm:$0xf]
        %v584 = vld [vmem:[#allocation5 + $0x4] sm:$0xf]
        %v585 = vld [vmem:[#allocation5 + $0x8] sm:$0xf]
        %v586 = vld [vmem:[#allocation5 + $0xc] sm:$0xf]
        %v587 = vld [vmem:[#allocation5 + $0x10] sm:$0xf]
        %v588 = vld [vmem:[#allocation5 + $0x14] sm:$0xf]
        %v589 = vld [vmem:[#allocation5 + $0x18] sm:$0xf]
        %v590 = vld [vmem:[#allocation5 + $0x1c] sm:$0xf]
        %v591 = vld [vmem:[#allocation5 + $0x20] sm:$0xf]
        %v592 = vld [vmem:[#allocation5 + $0x24] sm:$0xf]
        %v593 = vld [vmem:[#allocation5 + $0x28] sm:$0xf]
        %v594 = vld [vmem:[#allocation5 + $0x2c] sm:$0xf]
        %v595 = vld [vmem:[#allocation5 + $0x30] sm:$0xf]
        %v596 = vld [vmem:[#allocation5 + $0x34] sm:$0xf]
        %v597 = vld [vmem:[#allocation5 + $0x38] sm:$0xf]
        %v598 = vld [vmem:[#allocation5 + $0x3c] sm:$0xf]
        %v599 = vld [vmem:[#allocation5 + $0x40] sm:$0xf]
        %v600 = vld [vmem:[#allocation5 + $0x44] sm:$0xf]
        %v601 = vld [vmem:[#allocation5 + $0x48] sm:$0xf]
        %v602 = vld [vmem:[#allocation5 + $0x4c] sm:$0xf]
        %v603 = vld [vmem:[#allocation5 + $0x50] sm:$0xf]
        %v604 = vld [vmem:[#allocation5 + $0x54] sm:$0xf]
        %v605 = vld [vmem:[#allocation5 + $0x58] sm:$0xf]
        %v606 = vld [vmem:[#allocation5 + $0x5c] sm:$0xf]
        %v607 = vld [vmem:[#allocation5 + $0x60] sm:$0xf]
        %v608 = vld [vmem:[#allocation5 + $0x64] sm:$0xf]
        %v609 = vld [vmem:[#allocation5 + $0x68] sm:$0xf]
        %v610 = vld [vmem:[#allocation5 + $0x6c] sm:$0xf]
        %v611 = vld [vmem:[#allocation5 + $0x70] sm:$0xf]
        %v612 = vld [vmem:[#allocation5 + $0x74] sm:$0xf]
        %v613 = vld [vmem:[#allocation5 + $0x78] sm:$0xf]
        %v614 = vld [vmem:[#allocation5 + $0x7c] sm:$0xf]
        %v615 = vld [vmem:[#allocation5 + $0x80] sm:$0xf]
        %v616 = vld [vmem:[#allocation5 + $0x84] sm:$0xf]
        %v617 = vld [vmem:[#allocation5 + $0x88] sm:$0xf]
        %v618 = vld [vmem:[#allocation5 + $0x8c] sm:$0xf]
        %v619 = vld [vmem:[#allocation5 + $0x90] sm:$0xf]
        %v620 = vld [vmem:[#allocation5 + $0x94] sm:$0xf]
        %v621 = vld [vmem:[#allocation5 + $0x98] sm:$0xf]
        %v622 = vld [vmem:[#allocation5 + $0x9c] sm:$0xf]
        %v623 = vld [vmem:[#allocation5 + $0xa0] sm:$0xf]
        %v624 = vld [vmem:[#allocation5 + $0xa4] sm:$0xf]
        %v625 = vld [vmem:[#allocation5 + $0xa8] sm:$0xf]
        %v626 = vld [vmem:[#allocation5 + $0xac] sm:$0xf]
        %v627 = vld [vmem:[#allocation5 + $0xb0] sm:$0xf]
        %v628 = vld [vmem:[#allocation5 + $0xb4] sm:$0xf]
        %v629 = vld [vmem:[#allocation5 + $0xb8] sm:$0xf]
        %v630 = vld [vmem:[#allocation5 + $0xbc] sm:$0xf]
        %v631 = vld [vmem:[#allocation5 + $0xc0] sm:$0xf]
        %v632 = vld [vmem:[#allocation5 + $0xc4] sm:$0xf]
        %v633 = vld [vmem:[#allocation5 + $0xc8] sm:$0xf]
        %v634 = vld [vmem:[#allocation5 + $0xcc] sm:$0xf]
        %v635 = vld [vmem:[#allocation5 + $0xd0] sm:$0xf]
        %v636 = vld [vmem:[#allocation5 + $0xd4] sm:$0xf]
        %v637 = vld [vmem:[#allocation5 + $0xd8] sm:$0xf]
        %v638 = vld [vmem:[#allocation5 + $0xdc] sm:$0xf]
        %v639 = vld [vmem:[#allocation5 + $0xe0] sm:$0xf]
        %v640 = vld [vmem:[#allocation5 + $0xe4] sm:$0xf]
        %v641 = vld [vmem:[#allocation5 + $0xe8] sm:$0xf]
        %v642 = vld [vmem:[#allocation5 + $0xec] sm:$0xf]
        %v643 = vld [vmem:[#allocation5 + $0xf0] sm:$0xf]
        %v644 = vld [vmem:[#allocation5 + $0xf4] sm:$0xf]
        %v645 = vld [vmem:[#allocation5 + $0xf8] sm:$0xf]
        %v646 = vld [vmem:[#allocation5 + $0xfc] sm:$0xf]
        %v647 = vld [vmem:[#allocation5 + $0x100] sm:$0xf]
        %v648 = vld [vmem:[#allocation5 + $0x104] sm:$0xf]
        %v649 = vld [vmem:[#allocation5 + $0x108] sm:$0xf]
        %v650 = vld [vmem:[#allocation5 + $0x10c] sm:$0xf]
        %v651 = vld [vmem:[#allocation5 + $0x110] sm:$0xf]
        %v652 = vld [vmem:[#allocation5 + $0x114] sm:$0xf]
        %v653 = vld [vmem:[#allocation5 + $0x118] sm:$0xf]
        %v654 = vld [vmem:[#allocation5 + $0x11c] sm:$0xf]
        %v655 = vld [vmem:[#allocation5 + $0x120] sm:$0xf]
        %v656 = vld [vmem:[#allocation5 + $0x124] sm:$0xf]
        %v657 = vld [vmem:[#allocation5 + $0x128] sm:$0xf]
        %v658 = vld [vmem:[#allocation5 + $0x12c] sm:$0xf]
        %v659 = vld [vmem:[#allocation5 + $0x130] sm:$0xf]
        %v660 = vld [vmem:[#allocation5 + $0x134] sm:$0xf]
        %v661 = vld [vmem:[#allocation5 + $0x138] sm:$0xf]
        %v662 = vld [vmem:[#allocation5 + $0x13c] sm:$0xf]
        %v663 = vld [vmem:[#allocation5 + $0x140] sm:$0xf]
        %v664 = vld [vmem:[#allocation5 + $0x144] sm:$0xf]
        %v665 = vld [vmem:[#allocation5 + $0x148] sm:$0xf]
        %v666 = vld [vmem:[#allocation5 + $0x14c] sm:$0xf]
        %v667 = vld [vmem:[#allocation5 + $0x150] sm:$0xf]
        %v668 = vld [vmem:[#allocation5 + $0x154] sm:$0xf]
        %v669 = vld [vmem:[#allocation5 + $0x158] sm:$0xf]
        %v670 = vld [vmem:[#allocation5 + $0x15c] sm:$0xf]
        %v671 = vld [vmem:[#allocation5 + $0x160] sm:$0xf]
        %v672 = vld [vmem:[#allocation5 + $0x164] sm:$0xf]
        %v673 = vld [vmem:[#allocation5 + $0x168] sm:$0xf]
        %v674 = vld [vmem:[#allocation5 + $0x16c] sm:$0xf]
        %v675 = vld [vmem:[#allocation5 + $0x170] sm:$0xf]
        %v676 = vld [vmem:[#allocation5 + $0x174] sm:$0xf]
        %v677 = vld [vmem:[#allocation5 + $0x178] sm:$0xf]
        %v678 = vld [vmem:[#allocation5 + $0x17c] sm:$0xf]
        %v679 = vld [vmem:[#allocation5 + $0x180] sm:$0xf]
        %v680 = vld [vmem:[#allocation5 + $0x184] sm:$0xf]
        %v681 = vld [vmem:[#allocation5 + $0x188] sm:$0xf]
        %v682 = vld [vmem:[#allocation5 + $0x18c] sm:$0xf]
        %v683 = vld [vmem:[#allocation5 + $0x190] sm:$0xf]
        %v684 = vld [vmem:[#allocation5 + $0x194] sm:$0xf]
        %v685 = vld [vmem:[#allocation5 + $0x198] sm:$0xf]
        %v686 = vld [vmem:[#allocation5 + $0x19c] sm:$0xf]
        %v687 = vld [vmem:[#allocation5 + $0x1a0] sm:$0xf]
        %v688 = vld [vmem:[#allocation5 + $0x1a4] sm:$0xf]
        %v689 = vld [vmem:[#allocation5 + $0x1a8] sm:$0xf]
        %v690 = vld [vmem:[#allocation5 + $0x1ac] sm:$0xf]
        %v691 = vld [vmem:[#allocation5 + $0x1b0] sm:$0xf]
        %v692 = vld [vmem:[#allocation5 + $0x1b4] sm:$0xf]
        %v693 = vld [vmem:[#allocation5 + $0x1b8] sm:$0xf]
        %v694 = vld [vmem:[#allocation5 + $0x1bc] sm:$0xf]
        %v695 = vld [vmem:[#allocation5 + $0x1c0] sm:$0xf]
        %v696 = vld [vmem:[#allocation5 + $0x1c4] sm:$0xf]
        %v697 = vld [vmem:[#allocation5 + $0x1c8] sm:$0xf]
        %v698 = vld [vmem:[#allocation5 + $0x1cc] sm:$0xf]
        %v699 = vld [vmem:[#allocation5 + $0x1d0] sm:$0xf]
        %v700 = vld [vmem:[#allocation5 + $0x1d4] sm:$0xf]
        %v701 = vld [vmem:[#allocation5 + $0x1d8] sm:$0xf]
        %v702 = vld [vmem:[#allocation5 + $0x1dc] sm:$0xf]
        %v703 = vld [vmem:[#allocation5 + $0x1e0] sm:$0xf]
        %v704 = vld [vmem:[#allocation5 + $0x1e4] sm:$0xf]
        %v705 = vld [vmem:[#allocation5 + $0x1e8] sm:$0xf]
        %v706 = vld [vmem:[#allocation5 + $0x1ec] sm:$0xf]
        %v707 = vld [vmem:[#allocation5 + $0x1f0] sm:$0xf]
        %v708 = vld [vmem:[#allocation5 + $0x1f4] sm:$0xf]
        %v709 = vld [vmem:[#allocation5 + $0x1f8] sm:$0xf]
        %v710 = vld [vmem:[#allocation5 + $0x1fc] sm:$0xf]
        %v711 = vld [vmem:[%s2] sm:$0x1]
        %v713 = vlaneseq
        %v714 = vshrl.u32 %v713, 7
        %v715 = vsub.s32 0, %v714
        %v716 = vrot.slane %v711, %v715
        %v846 = vunpack.c.l.b16 %v455
        %v847 = vunpack.c.h.b16 %v455
        %v848 = vunpack.c.l.b16 %v456
        %v849 = vunpack.c.h.b16 %v456
        %v850 = vunpack.c.l.b16 %v457
        %v851 = vunpack.c.h.b16 %v457
        %v852 = vunpack.c.l.b16 %v458
        %v853 = vunpack.c.h.b16 %v458
        %v854 = vunpack.c.l.b16 %v459
        %v855 = vunpack.c.h.b16 %v459
        %v856 = vunpack.c.l.b16 %v460
        %v857 = vunpack.c.h.b16 %v460
        %v858 = vunpack.c.l.b16 %v461
        %v859 = vunpack.c.h.b16 %v461
        %v860 = vunpack.c.l.b16 %v462
        %v861 = vunpack.c.h.b16 %v462
        %v862 = vunpack.c.l.b16 %v463
        %v863 = vunpack.c.h.b16 %v463
        %v864 = vunpack.c.l.b16 %v464
        %v865 = vunpack.c.h.b16 %v464
        %v866 = vunpack.c.l.b16 %v465
        %v867 = vunpack.c.h.b16 %v465
        %v868 = vunpack.c.l.b16 %v466
        %v869 = vunpack.c.h.b16 %v466
        %v870 = vunpack.c.l.b16 %v467
        %v871 = vunpack.c.h.b16 %v467
        %v872 = vunpack.c.l.b16 %v468
        %v873 = vunpack.c.h.b16 %v468
        %v874 = vunpack.c.l.b16 %v469
        %v875 = vunpack.c.h.b16 %v469
        %v876 = vunpack.c.l.b16 %v470
        %v877 = vunpack.c.h.b16 %v470
        %v878 = vunpack.c.l.b16 %v471
        %v879 = vunpack.c.h.b16 %v471
        %v880 = vunpack.c.l.b16 %v472
        %v881 = vunpack.c.h.b16 %v472
        %v882 = vunpack.c.l.b16 %v473
        %v883 = vunpack.c.h.b16 %v473
        %v884 = vunpack.c.l.b16 %v474
        %v885 = vunpack.c.h.b16 %v474
        %v886 = vunpack.c.l.b16 %v475
        %v887 = vunpack.c.h.b16 %v475
        %v888 = vunpack.c.l.b16 %v476
        %v889 = vunpack.c.h.b16 %v476
        %v890 = vunpack.c.l.b16 %v477
        %v891 = vunpack.c.h.b16 %v477
        %v892 = vunpack.c.l.b16 %v478
        %v893 = vunpack.c.h.b16 %v478
        %v894 = vunpack.c.l.b16 %v479
        %v895 = vunpack.c.h.b16 %v479
        %v896 = vunpack.c.l.b16 %v480
        %v897 = vunpack.c.h.b16 %v480
        %v898 = vunpack.c.l.b16 %v481
        %v899 = vunpack.c.h.b16 %v481
        %v900 = vunpack.c.l.b16 %v482
        %v901 = vunpack.c.h.b16 %v482
        %v902 = vunpack.c.l.b16 %v483
        %v903 = vunpack.c.h.b16 %v483
        %v904 = vunpack.c.l.b16 %v484
        %v905 = vunpack.c.h.b16 %v484
        %v906 = vunpack.c.l.b16 %v485
        %v907 = vunpack.c.h.b16 %v485
        %v908 = vunpack.c.l.b16 %v486
        %v909 = vunpack.c.h.b16 %v486
        %v910 = vunpack.c.l.b16 %v487
        %v911 = vunpack.c.h.b16 %v487
        %v912 = vunpack.c.l.b16 %v488
        %v913 = vunpack.c.h.b16 %v488
        %v914 = vunpack.c.l.b16 %v489
        %v915 = vunpack.c.h.b16 %v489
        %v916 = vunpack.c.l.b16 %v490
        %v917 = vunpack.c.h.b16 %v490
        %v918 = vunpack.c.l.b16 %v491
        %v919 = vunpack.c.h.b16 %v491
        %v920 = vunpack.c.l.b16 %v492
        %v921 = vunpack.c.h.b16 %v492
        %v922 = vunpack.c.l.b16 %v493
        %v923 = vunpack.c.h.b16 %v493
        %v924 = vunpack.c.l.b16 %v494
        %v925 = vunpack.c.h.b16 %v494
        %v926 = vunpack.c.l.b16 %v495
        %v927 = vunpack.c.h.b16 %v495
        %v928 = vunpack.c.l.b16 %v496
        %v929 = vunpack.c.h.b16 %v496
        %v930 = vunpack.c.l.b16 %v497
        %v931 = vunpack.c.h.b16 %v497
        %v932 = vunpack.c.l.b16 %v498
        %v933 = vunpack.c.h.b16 %v498
        %v934 = vunpack.c.l.b16 %v499
        %v935 = vunpack.c.h.b16 %v499
        %v936 = vunpack.c.l.b16 %v500
        %v937 = vunpack.c.h.b16 %v500
        %v938 = vunpack.c.l.b16 %v501
        %v939 = vunpack.c.h.b16 %v501
        %v940 = vunpack.c.l.b16 %v502
        %v941 = vunpack.c.h.b16 %v502
        %v942 = vunpack.c.l.b16 %v503
        %v943 = vunpack.c.h.b16 %v503
        %v944 = vunpack.c.l.b16 %v504
        %v945 = vunpack.c.h.b16 %v504
        %v946 = vunpack.c.l.b16 %v505
        %v947 = vunpack.c.h.b16 %v505
        %v948 = vunpack.c.l.b16 %v506
        %v949 = vunpack.c.h.b16 %v506
        %v950 = vunpack.c.l.b16 %v507
        %v951 = vunpack.c.h.b16 %v507
        %v952 = vunpack.c.l.b16 %v508
        %v953 = vunpack.c.h.b16 %v508
        %v954 = vunpack.c.l.b16 %v509
        %v955 = vunpack.c.h.b16 %v509
        %v956 = vunpack.c.l.b16 %v510
        %v957 = vunpack.c.h.b16 %v510
        %v958 = vunpack.c.l.b16 %v511
        %v959 = vunpack.c.h.b16 %v511
        %v960 = vunpack.c.l.b16 %v512
        %v961 = vunpack.c.h.b16 %v512
        %v962 = vunpack.c.l.b16 %v513
        %v963 = vunpack.c.h.b16 %v513
        %v964 = vunpack.c.l.b16 %v514
        %v965 = vunpack.c.h.b16 %v514
        %v966 = vunpack.c.l.b16 %v515
        %v967 = vunpack.c.h.b16 %v515
        %v968 = vunpack.c.l.b16 %v516
        %v969 = vunpack.c.h.b16 %v516
        %v970 = vunpack.c.l.b16 %v517
        %v971 = vunpack.c.h.b16 %v517
        %v972 = vunpack.c.l.b16 %v518
        %v973 = vunpack.c.h.b16 %v518
        %v974 = vunpack.c.l.b16 %v519
        %v975 = vunpack.c.h.b16 %v519
        %v976 = vunpack.c.l.b16 %v520
        %v977 = vunpack.c.h.b16 %v520
        %v978 = vunpack.c.l.b16 %v521
        %v979 = vunpack.c.h.b16 %v521
        %v980 = vunpack.c.l.b16 %v522
        %v981 = vunpack.c.h.b16 %v522
        %v982 = vunpack.c.l.b16 %v523
        %v983 = vunpack.c.h.b16 %v523
        %v984 = vunpack.c.l.b16 %v524
        %v985 = vunpack.c.h.b16 %v524
        %v986 = vunpack.c.l.b16 %v525
        %v987 = vunpack.c.h.b16 %v525
        %v988 = vunpack.c.l.b16 %v526
        %v989 = vunpack.c.h.b16 %v526
        %v990 = vunpack.c.l.b16 %v527
        %v991 = vunpack.c.h.b16 %v527
        %v992 = vunpack.c.l.b16 %v528
        %v993 = vunpack.c.h.b16 %v528
        %v994 = vunpack.c.l.b16 %v529
        %v995 = vunpack.c.h.b16 %v529
        %v996 = vunpack.c.l.b16 %v530
        %v997 = vunpack.c.h.b16 %v530
        %v998 = vunpack.c.l.b16 %v531
        %v999 = vunpack.c.h.b16 %v531
        %v1000 = vunpack.c.l.b16 %v532
        %v1001 = vunpack.c.h.b16 %v532
        %v1002 = vunpack.c.l.b16 %v533
        %v1003 = vunpack.c.h.b16 %v533
        %v1004 = vunpack.c.l.b16 %v534
        %v1005 = vunpack.c.h.b16 %v534
        %v1006 = vunpack.c.l.b16 %v535
        %v1007 = vunpack.c.h.b16 %v535
        %v1008 = vunpack.c.l.b16 %v536
        %v1009 = vunpack.c.h.b16 %v536
        %v1010 = vunpack.c.l.b16 %v537
        %v1011 = vunpack.c.h.b16 %v537
        %v1012 = vunpack.c.l.b16 %v538
        %v1013 = vunpack.c.h.b16 %v538
        %v1014 = vunpack.c.l.b16 %v539
        %v1015 = vunpack.c.h.b16 %v539
        %v1016 = vunpack.c.l.b16 %v540
        %v1017 = vunpack.c.h.b16 %v540
        %v1018 = vunpack.c.l.b16 %v541
        %v1019 = vunpack.c.h.b16 %v541
        %v1020 = vunpack.c.l.b16 %v542
        %v1021 = vunpack.c.h.b16 %v542
        %v1022 = vunpack.c.l.b16 %v543
        %v1023 = vunpack.c.h.b16 %v543
        %v1024 = vunpack.c.l.b16 %v544
        %v1025 = vunpack.c.h.b16 %v544
        %v1026 = vunpack.c.l.b16 %v545
        %v1027 = vunpack.c.h.b16 %v545
        %v1028 = vunpack.c.l.b16 %v546
        %v1029 = vunpack.c.h.b16 %v546
        %v1030 = vunpack.c.l.b16 %v547
        %v1031 = vunpack.c.h.b16 %v547
        %v1032 = vunpack.c.l.b16 %v548
        %v1033 = vunpack.c.h.b16 %v548
        %v1034 = vunpack.c.l.b16 %v549
        %v1035 = vunpack.c.h.b16 %v549
        %v1036 = vunpack.c.l.b16 %v550
        %v1037 = vunpack.c.h.b16 %v550
        %v1038 = vunpack.c.l.b16 %v551
        %v1039 = vunpack.c.h.b16 %v551
        %v1040 = vunpack.c.l.b16 %v552
        %v1041 = vunpack.c.h.b16 %v552
        %v1042 = vunpack.c.l.b16 %v553
        %v1043 = vunpack.c.h.b16 %v553
        %v1044 = vunpack.c.l.b16 %v554
        %v1045 = vunpack.c.h.b16 %v554
        %v1046 = vunpack.c.l.b16 %v555
        %v1047 = vunpack.c.h.b16 %v555
        %v1048 = vunpack.c.l.b16 %v556
        %v1049 = vunpack.c.h.b16 %v556
        %v1050 = vunpack.c.l.b16 %v557
        %v1051 = vunpack.c.h.b16 %v557
        %v1052 = vunpack.c.l.b16 %v558
        %v1053 = vunpack.c.h.b16 %v558
        %v1054 = vunpack.c.l.b16 %v559
        %v1055 = vunpack.c.h.b16 %v559
        %v1056 = vunpack.c.l.b16 %v560
        %v1057 = vunpack.c.h.b16 %v560
        %v1058 = vunpack.c.l.b16 %v561
        %v1059 = vunpack.c.h.b16 %v561
        %v1060 = vunpack.c.l.b16 %v562
        %v1061 = vunpack.c.h.b16 %v562
        %v1062 = vunpack.c.l.b16 %v563
        %v1063 = vunpack.c.h.b16 %v563
        %v1064 = vunpack.c.l.b16 %v564
        %v1065 = vunpack.c.h.b16 %v564
        %v1066 = vunpack.c.l.b16 %v565
        %v1067 = vunpack.c.h.b16 %v565
        %v1068 = vunpack.c.l.b16 %v566
        %v1069 = vunpack.c.h.b16 %v566
        %v1070 = vunpack.c.l.b16 %v567
        %v1071 = vunpack.c.h.b16 %v567
        %v1072 = vunpack.c.l.b16 %v568
        %v1073 = vunpack.c.h.b16 %v568
        %v1074 = vunpack.c.l.b16 %v569
        %v1075 = vunpack.c.h.b16 %v569
        %v1076 = vunpack.c.l.b16 %v570
        %v1077 = vunpack.c.h.b16 %v570
        %v1078 = vunpack.c.l.b16 %v571
        %v1079 = vunpack.c.h.b16 %v571
        %v1080 = vunpack.c.l.b16 %v572
        %v1081 = vunpack.c.h.b16 %v572
        %v1082 = vunpack.c.l.b16 %v573
        %v1083 = vunpack.c.h.b16 %v573
        %v1084 = vunpack.c.l.b16 %v574
        %v1085 = vunpack.c.h.b16 %v574
        %v1086 = vunpack.c.l.b16 %v575
        %v1087 = vunpack.c.h.b16 %v575
        %v1088 = vunpack.c.l.b16 %v576
        %v1089 = vunpack.c.h.b16 %v576
        %v1090 = vunpack.c.l.b16 %v577
        %v1091 = vunpack.c.h.b16 %v577
        %v1092 = vunpack.c.l.b16 %v578
        %v1093 = vunpack.c.h.b16 %v578
        %v1094 = vunpack.c.l.b16 %v579
        %v1095 = vunpack.c.h.b16 %v579
        %v1096 = vunpack.c.l.b16 %v580
        %v1097 = vunpack.c.h.b16 %v580
        %v1098 = vunpack.c.l.b16 %v581
        %v1099 = vunpack.c.h.b16 %v581
        %v1100 = vunpack.c.l.b16 %v582
        %v1101 = vunpack.c.h.b16 %v582
        %v1102 = vpack.c.b16 %v854, %v846
        %v1103 = vpack.c.b16 %v855, %v847
        %v1104 = vpack.c.b16 %v856, %v848
        %v1105 = vpack.c.b16 %v857, %v849
        %v1106 = vpack.c.b16 %v858, %v850
        %v1107 = vpack.c.b16 %v859, %v851
        %v1108 = vpack.c.b16 %v860, %v852
        %v1109 = vpack.c.b16 %v861, %v853
        %v1110 = vpack.c.b16 %v870, %v862
        %v1111 = vpack.c.b16 %v871, %v863
        %v1112 = vpack.c.b16 %v872, %v864
        %v1113 = vpack.c.b16 %v873, %v865
        %v1114 = vpack.c.b16 %v874, %v866
        %v1115 = vpack.c.b16 %v875, %v867
        %v1116 = vpack.c.b16 %v876, %v868
        %v1117 = vpack.c.b16 %v877, %v869
        %v1118 = vpack.c.b16 %v886, %v878
        %v1119 = vpack.c.b16 %v887, %v879
        %v1120 = vpack.c.b16 %v888, %v880
        %v1121 = vpack.c.b16 %v889, %v881
        %v1122 = vpack.c.b16 %v890, %v882
        %v1123 = vpack.c.b16 %v891, %v883
        %v1124 = vpack.c.b16 %v892, %v884
        %v1125 = vpack.c.b16 %v893, %v885
        %v1126 = vpack.c.b16 %v902, %v894
        %v1127 = vpack.c.b16 %v903, %v895
        %v1128 = vpack.c.b16 %v904, %v896
        %v1129 = vpack.c.b16 %v905, %v897
        %v1130 = vpack.c.b16 %v906, %v898
        %v1131 = vpack.c.b16 %v907, %v899
        %v1132 = vpack.c.b16 %v908, %v900
        %v1133 = vpack.c.b16 %v909, %v901
        %v1134 = vpack.c.b16 %v918, %v910
        %v1135 = vpack.c.b16 %v919, %v911
        %v1136 = vpack.c.b16 %v920, %v912
        %v1137 = vpack.c.b16 %v921, %v913
        %v1138 = vpack.c.b16 %v922, %v914
        %v1139 = vpack.c.b16 %v923, %v915
        %v1140 = vpack.c.b16 %v924, %v916
        %v1141 = vpack.c.b16 %v925, %v917
        %v1142 = vpack.c.b16 %v934, %v926
        %v1143 = vpack.c.b16 %v935, %v927
        %v1144 = vpack.c.b16 %v936, %v928
        %v1145 = vpack.c.b16 %v937, %v929
        %v1146 = vpack.c.b16 %v938, %v930
        %v1147 = vpack.c.b16 %v939, %v931
        %v1148 = vpack.c.b16 %v940, %v932
        %v1149 = vpack.c.b16 %v941, %v933
        %v1150 = vpack.c.b16 %v950, %v942
        %v1151 = vpack.c.b16 %v951, %v943
        %v1152 = vpack.c.b16 %v952, %v944
        %v1153 = vpack.c.b16 %v953, %v945
        %v1154 = vpack.c.b16 %v954, %v946
        %v1155 = vpack.c.b16 %v955, %v947
        %v1156 = vpack.c.b16 %v956, %v948
        %v1157 = vpack.c.b16 %v957, %v949
        %v1158 = vpack.c.b16 %v966, %v958
        %v1159 = vpack.c.b16 %v967, %v959
        %v1160 = vpack.c.b16 %v968, %v960
        %v1161 = vpack.c.b16 %v969, %v961
        %v1162 = vpack.c.b16 %v970, %v962
        %v1163 = vpack.c.b16 %v971, %v963
        %v1164 = vpack.c.b16 %v972, %v964
        %v1165 = vpack.c.b16 %v973, %v965
        %v1166 = vpack.c.b16 %v982, %v974
        %v1167 = vpack.c.b16 %v983, %v975
        %v1168 = vpack.c.b16 %v984, %v976
        %v1169 = vpack.c.b16 %v985, %v977
        %v1170 = vpack.c.b16 %v986, %v978
        %v1171 = vpack.c.b16 %v987, %v979
        %v1172 = vpack.c.b16 %v988, %v980
        %v1173 = vpack.c.b16 %v989, %v981
        %v1174 = vpack.c.b16 %v998, %v990
        %v1175 = vpack.c.b16 %v999, %v991
        %v1176 = vpack.c.b16 %v1000, %v992
        %v1177 = vpack.c.b16 %v1001, %v993
        %v1178 = vpack.c.b16 %v1002, %v994
        %v1179 = vpack.c.b16 %v1003, %v995
        %v1180 = vpack.c.b16 %v1004, %v996
        %v1181 = vpack.c.b16 %v1005, %v997
        %v1182 = vpack.c.b16 %v1014, %v1006
        %v1183 = vpack.c.b16 %v1015, %v1007
        %v1184 = vpack.c.b16 %v1016, %v1008
        %v1185 = vpack.c.b16 %v1017, %v1009
        %v1186 = vpack.c.b16 %v1018, %v1010
        %v1187 = vpack.c.b16 %v1019, %v1011
        %v1188 = vpack.c.b16 %v1020, %v1012
        %v1189 = vpack.c.b16 %v1021, %v1013
        %v1190 = vpack.c.b16 %v1030, %v1022
        %v1191 = vpack.c.b16 %v1031, %v1023
        %v1192 = vpack.c.b16 %v1032, %v1024
        %v1193 = vpack.c.b16 %v1033, %v1025
        %v1194 = vpack.c.b16 %v1034, %v1026
        %v1195 = vpack.c.b16 %v1035, %v1027
        %v1196 = vpack.c.b16 %v1036, %v1028
        %v1197 = vpack.c.b16 %v1037, %v1029
        %v1198 = vpack.c.b16 %v1046, %v1038
        %v1199 = vpack.c.b16 %v1047, %v1039
        %v1200 = vpack.c.b16 %v1048, %v1040
        %v1201 = vpack.c.b16 %v1049, %v1041
        %v1202 = vpack.c.b16 %v1050, %v1042
        %v1203 = vpack.c.b16 %v1051, %v1043
        %v1204 = vpack.c.b16 %v1052, %v1044
        %v1205 = vpack.c.b16 %v1053, %v1045
        %v1206 = vpack.c.b16 %v1062, %v1054
        %v1207 = vpack.c.b16 %v1063, %v1055
        %v1208 = vpack.c.b16 %v1064, %v1056
        %v1209 = vpack.c.b16 %v1065, %v1057
        %v1210 = vpack.c.b16 %v1066, %v1058
        %v1211 = vpack.c.b16 %v1067, %v1059
        %v1212 = vpack.c.b16 %v1068, %v1060
        %v1213 = vpack.c.b16 %v1069, %v1061
        %v1214 = vpack.c.b16 %v1078, %v1070
        %v1215 = vpack.c.b16 %v1079, %v1071
        %v1216 = vpack.c.b16 %v1080, %v1072
        %v1217 = vpack.c.b16 %v1081, %v1073
        %v1218 = vpack.c.b16 %v1082, %v1074
        %v1219 = vpack.c.b16 %v1083, %v1075
        %v1220 = vpack.c.b16 %v1084, %v1076
        %v1221 = vpack.c.b16 %v1085, %v1077
        %v1222 = vpack.c.b16 %v1094, %v1086
        %v1223 = vpack.c.b16 %v1095, %v1087
        %v1224 = vpack.c.b16 %v1096, %v1088
        %v1225 = vpack.c.b16 %v1097, %v1089
        %v1226 = vpack.c.b16 %v1098, %v1090
        %v1227 = vpack.c.b16 %v1099, %v1091
        %v1228 = vpack.c.b16 %v1100, %v1092
        %v1229 = vpack.c.b16 %v1101, %v1093
        %v1486 = vunpack.c.l.b16 %v583
        %v1487 = vunpack.c.l.b16 %v584
        %v1488 = vunpack.c.l.b16 %v585
        %v1489 = vunpack.c.l.b16 %v586
        %v1490 = vunpack.c.l.b16 %v587
        %v1491 = vunpack.c.l.b16 %v588
        %v1492 = vunpack.c.l.b16 %v589
        %v1493 = vunpack.c.l.b16 %v590
        %v1494 = vunpack.c.l.b16 %v591
        %v1495 = vunpack.c.l.b16 %v592
        %v1496 = vunpack.c.l.b16 %v593
        %v1497 = vunpack.c.l.b16 %v594
        %v1498 = vunpack.c.l.b16 %v595
        %v1499 = vunpack.c.l.b16 %v596
        %v1500 = vunpack.c.l.b16 %v597
        %v1501 = vunpack.c.l.b16 %v598
        %v1502 = vunpack.c.l.b16 %v599
        %v1503 = vunpack.c.l.b16 %v600
        %v1504 = vunpack.c.l.b16 %v601
        %v1505 = vunpack.c.l.b16 %v602
        %v1506 = vunpack.c.l.b16 %v603
        %v1507 = vunpack.c.l.b16 %v604
        %v1508 = vunpack.c.l.b16 %v605
        %v1509 = vunpack.c.l.b16 %v606
        %v1510 = vunpack.c.l.b16 %v607
        %v1511 = vunpack.c.l.b16 %v608
        %v1512 = vunpack.c.l.b16 %v609
        %v1513 = vunpack.c.l.b16 %v610
        %v1514 = vunpack.c.l.b16 %v611
        %v1515 = vunpack.c.l.b16 %v612
        %v1516 = vunpack.c.l.b16 %v613
        %v1517 = vunpack.c.l.b16 %v614
        %v1518 = vunpack.c.l.b16 %v615
        %v1519 = vunpack.c.l.b16 %v616
        %v1520 = vunpack.c.l.b16 %v617
        %v1521 = vunpack.c.l.b16 %v618
        %v1522 = vunpack.c.l.b16 %v619
        %v1523 = vunpack.c.l.b16 %v620
        %v1524 = vunpack.c.l.b16 %v621
        %v1525 = vunpack.c.l.b16 %v622
        %v1526 = vunpack.c.l.b16 %v623
        %v1527 = vunpack.c.l.b16 %v624
        %v1528 = vunpack.c.l.b16 %v625
        %v1529 = vunpack.c.l.b16 %v626
        %v1530 = vunpack.c.l.b16 %v627
        %v1531 = vunpack.c.l.b16 %v628
        %v1532 = vunpack.c.l.b16 %v629
        %v1533 = vunpack.c.l.b16 %v630
        %v1534 = vunpack.c.l.b16 %v631
        %v1535 = vunpack.c.l.b16 %v632
        %v1536 = vunpack.c.l.b16 %v633
        %v1537 = vunpack.c.l.b16 %v634
        %v1538 = vunpack.c.l.b16 %v635
        %v1539 = vunpack.c.l.b16 %v636
        %v1540 = vunpack.c.l.b16 %v637
        %v1541 = vunpack.c.l.b16 %v638
        %v1542 = vunpack.c.l.b16 %v639
        %v1543 = vunpack.c.l.b16 %v640
        %v1544 = vunpack.c.l.b16 %v641
        %v1545 = vunpack.c.l.b16 %v642
        %v1546 = vunpack.c.l.b16 %v643
        %v1547 = vunpack.c.l.b16 %v644
        %v1548 = vunpack.c.l.b16 %v645
        %v1549 = vunpack.c.l.b16 %v646
        %v1550 = vunpack.c.l.b16 %v647
        %v1551 = vunpack.c.l.b16 %v648
        %v1552 = vunpack.c.l.b16 %v649
        %v1553 = vunpack.c.l.b16 %v650
        %v1554 = vunpack.c.l.b16 %v651
        %v1555 = vunpack.c.l.b16 %v652
        %v1556 = vunpack.c.l.b16 %v653
        %v1557 = vunpack.c.l.b16 %v654
        %v1558 = vunpack.c.l.b16 %v655
        %v1559 = vunpack.c.l.b16 %v656
        %v1560 = vunpack.c.l.b16 %v657
        %v1561 = vunpack.c.l.b16 %v658
        %v1562 = vunpack.c.l.b16 %v659
        %v1563 = vunpack.c.l.b16 %v660
        %v1564 = vunpack.c.l.b16 %v661
        %v1565 = vunpack.c.l.b16 %v662
        %v1566 = vunpack.c.l.b16 %v663
        %v1567 = vunpack.c.l.b16 %v664
        %v1568 = vunpack.c.l.b16 %v665
        %v1569 = vunpack.c.l.b16 %v666
        %v1570 = vunpack.c.l.b16 %v667
        %v1571 = vunpack.c.l.b16 %v668
        %v1572 = vunpack.c.l.b16 %v669
        %v1573 = vunpack.c.l.b16 %v670
        %v1574 = vunpack.c.l.b16 %v671
        %v1575 = vunpack.c.l.b16 %v672
        %v1576 = vunpack.c.l.b16 %v673
        %v1577 = vunpack.c.l.b16 %v674
        %v1578 = vunpack.c.l.b16 %v675
        %v1579 = vunpack.c.l.b16 %v676
        %v1580 = vunpack.c.l.b16 %v677
        %v1581 = vunpack.c.l.b16 %v678
        %v1582 = vunpack.c.l.b16 %v679
        %v1583 = vunpack.c.l.b16 %v680
        %v1584 = vunpack.c.l.b16 %v681
        %v1585 = vunpack.c.l.b16 %v682
        %v1586 = vunpack.c.l.b16 %v683
        %v1587 = vunpack.c.l.b16 %v684
        %v1588 = vunpack.c.l.b16 %v685
        %v1589 = vunpack.c.l.b16 %v686
        %v1590 = vunpack.c.l.b16 %v687
        %v1591 = vunpack.c.l.b16 %v688
        %v1592 = vunpack.c.l.b16 %v689
        %v1593 = vunpack.c.l.b16 %v690
        %v1594 = vunpack.c.l.b16 %v691
        %v1595 = vunpack.c.l.b16 %v692
        %v1596 = vunpack.c.l.b16 %v693
        %v1597 = vunpack.c.l.b16 %v694
        %v1598 = vunpack.c.l.b16 %v695
        %v1599 = vunpack.c.l.b16 %v696
        %v1600 = vunpack.c.l.b16 %v697
        %v1601 = vunpack.c.l.b16 %v698
        %v1602 = vunpack.c.l.b16 %v699
        %v1603 = vunpack.c.l.b16 %v700
        %v1604 = vunpack.c.l.b16 %v701
        %v1605 = vunpack.c.l.b16 %v702
        %v1606 = vunpack.c.l.b16 %v703
        %v1607 = vunpack.c.l.b16 %v704
        %v1608 = vunpack.c.l.b16 %v705
        %v1609 = vunpack.c.l.b16 %v706
        %v1610 = vunpack.c.l.b16 %v707
        %v1611 = vunpack.c.l.b16 %v708
        %v1612 = vunpack.c.l.b16 %v709
        %v1613 = vunpack.c.l.b16 %v710
        %v1614 = vpack.c.b16 %v1487, %v1486
        %v1615 = vpack.c.b16 %v1489, %v1488
        %v1616 = vpack.c.b16 %v1491, %v1490
        %v1617 = vpack.c.b16 %v1493, %v1492
        %v1618 = vpack.c.b16 %v1495, %v1494
        %v1619 = vpack.c.b16 %v1497, %v1496
        %v1620 = vpack.c.b16 %v1499, %v1498
        %v1621 = vpack.c.b16 %v1501, %v1500
        %v1622 = vpack.c.b16 %v1503, %v1502
        %v1623 = vpack.c.b16 %v1505, %v1504
        %v1624 = vpack.c.b16 %v1507, %v1506
        %v1625 = vpack.c.b16 %v1509, %v1508
        %v1626 = vpack.c.b16 %v1511, %v1510
        %v1627 = vpack.c.b16 %v1513, %v1512
        %v1628 = vpack.c.b16 %v1515, %v1514
        %v1629 = vpack.c.b16 %v1517, %v1516
        %v1630 = vpack.c.b16 %v1519, %v1518
        %v1631 = vpack.c.b16 %v1521, %v1520
        %v1632 = vpack.c.b16 %v1523, %v1522
        %v1633 = vpack.c.b16 %v1525, %v1524
        %v1634 = vpack.c.b16 %v1527, %v1526
        %v1635 = vpack.c.b16 %v1529, %v1528
        %v1636 = vpack.c.b16 %v1531, %v1530
        %v1637 = vpack.c.b16 %v1533, %v1532
        %v1638 = vpack.c.b16 %v1535, %v1534
        %v1639 = vpack.c.b16 %v1537, %v1536
        %v1640 = vpack.c.b16 %v1539, %v1538
        %v1641 = vpack.c.b16 %v1541, %v1540
        %v1642 = vpack.c.b16 %v1543, %v1542
        %v1643 = vpack.c.b16 %v1545, %v1544
        %v1644 = vpack.c.b16 %v1547, %v1546
        %v1645 = vpack.c.b16 %v1549, %v1548
        %v1646 = vpack.c.b16 %v1551, %v1550
        %v1647 = vpack.c.b16 %v1553, %v1552
        %v1648 = vpack.c.b16 %v1555, %v1554
        %v1649 = vpack.c.b16 %v1557, %v1556
        %v1650 = vpack.c.b16 %v1559, %v1558
        %v1651 = vpack.c.b16 %v1561, %v1560
        %v1652 = vpack.c.b16 %v1563, %v1562
        %v1653 = vpack.c.b16 %v1565, %v1564
        %v1654 = vpack.c.b16 %v1567, %v1566
        %v1655 = vpack.c.b16 %v1569, %v1568
        %v1656 = vpack.c.b16 %v1571, %v1570
        %v1657 = vpack.c.b16 %v1573, %v1572
        %v1658 = vpack.c.b16 %v1575, %v1574
        %v1659 = vpack.c.b16 %v1577, %v1576
        %v1660 = vpack.c.b16 %v1579, %v1578
        %v1661 = vpack.c.b16 %v1581, %v1580
        %v1662 = vpack.c.b16 %v1583, %v1582
        %v1663 = vpack.c.b16 %v1585, %v1584
        %v1664 = vpack.c.b16 %v1587, %v1586
        %v1665 = vpack.c.b16 %v1589, %v1588
        %v1666 = vpack.c.b16 %v1591, %v1590
        %v1667 = vpack.c.b16 %v1593, %v1592
        %v1668 = vpack.c.b16 %v1595, %v1594
        %v1669 = vpack.c.b16 %v1597, %v1596
        %v1670 = vpack.c.b16 %v1599, %v1598
        %v1671 = vpack.c.b16 %v1601, %v1600
        %v1672 = vpack.c.b16 %v1603, %v1602
        %v1673 = vpack.c.b16 %v1605, %v1604
        %v1674 = vpack.c.b16 %v1607, %v1606
        %v1675 = vpack.c.b16 %v1609, %v1608
        %v1676 = vpack.c.b16 %v1611, %v1610
        %v1677 = vpack.c.b16 %v1613, %v1612
        %1742 = vmatprep.subr.bf16.mxu0 0
        %1743 = vmatpush1.bf16.msra.mxu0 %v1614
        %1744 = vmatprep.subr.bf16.mxu0 0
        %1745 = vmatpush1.bf16.msra.mxu0 %v1615
        %1746 = vmatprep.subr.bf16.mxu0 0
        %1747 = vmatpush1.bf16.msra.mxu0 %v1616
        %1748 = vmatprep.subr.bf16.mxu0 0
        %1749 = vmatpush1.bf16.msra.mxu0 %v1617
        %1750 = vmatprep.subr.bf16.mxu0 0
        %1751 = vmatpush1.bf16.msra.mxu0 %v1618
        %1752 = vmatprep.subr.bf16.mxu0 0
        %1753 = vmatpush1.bf16.msra.mxu0 %v1619
        %1754 = vmatprep.subr.bf16.mxu0 0
        %1755 = vmatpush1.bf16.msra.mxu0 %v1620
        %1756 = vmatprep.subr.bf16.mxu0 0
        %1757 = vmatpush1.bf16.msra.mxu0 %v1621
        %1758 = vmatprep.subr.bf16.mxu0 0
        %1759 = vmatpush1.bf16.msra.mxu0 %v1622
        %1760 = vmatprep.subr.bf16.mxu0 0
        %1761 = vmatpush1.bf16.msra.mxu0 %v1623
        %1762 = vmatprep.subr.bf16.mxu0 0
        %1763 = vmatpush1.bf16.msra.mxu0 %v1624
        %1764 = vmatprep.subr.bf16.mxu0 0
        %1765 = vmatpush1.bf16.msra.mxu0 %v1625
        %1766 = vmatprep.subr.bf16.mxu0 0
        %1767 = vmatpush1.bf16.msra.mxu0 %v1626
        %1768 = vmatprep.subr.bf16.mxu0 0
        %1769 = vmatpush1.bf16.msra.mxu0 %v1627
        %1770 = vmatprep.subr.bf16.mxu0 0
        %1771 = vmatpush1.bf16.msra.mxu0 %v1628
        %1772 = vmatprep.subr.bf16.mxu0 0
        %1773 = vmatpush1.bf16.msra.mxu0 %v1629
        %1774 = vmatprep.mubr.bf16.mxu0 %v1103
        %1775 = vmatmul.mubr.bf16.gmra.mrb[0].mxu0 %v1102
        %v1776 = vpop.f32.mrb[0].mxu0
        %v1777 = vadd.f32 %v716, %v1776
        %v1778 = vpop.f32.mrb[0].mxu0
        %v1779 = vpop.f32.mrb[0].mxu0
        %v1780 = vadd.f32 %v716, %v1779
        %v1781 = vpop.f32.mrb[0].mxu0
        %1782 = vmatprep.mubr.bf16.mxu0 %v1111
        %1783 = vmatmul.mubr.bf16.gmra.mrb[0].mxu0 %v1110
        %v1784 = vpop.f32.mrb[0].mxu0
        %v1785 = vadd.f32 %v716, %v1784
        %v1786 = vpop.f32.mrb[0].mxu0
        %v1787 = vpop.f32.mrb[0].mxu0
        %v1788 = vadd.f32 %v716, %v1787
        %v1789 = vpop.f32.mrb[0].mxu0
        %1790 = vmatprep.mubr.bf16.mxu0 %v1119
        %1791 = vmatmul.mubr.bf16.gmra.mrb[0].mxu0 %v1118
        %v1792 = vpop.f32.mrb[0].mxu0
        %v1793 = vadd.f32 %v716, %v1792
        %v1794 = vpop.f32.mrb[0].mxu0
        %v1795 = vpop.f32.mrb[0].mxu0
        %v1796 = vadd.f32 %v716, %v1795
        %v1797 = vpop.f32.mrb[0].mxu0
        %1798 = vmatprep.mubr.bf16.mxu0 %v1127
        %1799 = vmatmul.mubr.bf16.gmra.mrb[0].mxu0 %v1126
        %v1800 = vpop.f32.mrb[0].mxu0
        %v1801 = vadd.f32 %v716, %v1800
        %v1802 = vpop.f32.mrb[0].mxu0
        %v1803 = vpop.f32.mrb[0].mxu0
        %v1804 = vadd.f32 %v716, %v1803
        %v1805 = vpop.f32.mrb[0].mxu0
        %1806 = vmatprep.mubr.bf16.mxu0 %v1135
        %1807 = vmatmul.mubr.bf16.gmra.mrb[0].mxu0 %v1134
        %v1808 = vpop.f32.mrb[0].mxu0
        %v1809 = vadd.f32 %v716, %v1808
        %v1810 = vpop.f32.mrb[0].mxu0
        %v1811 = vpop.f32.mrb[0].mxu0
        %v1812 = vadd.f32 %v716, %v1811
        %v1813 = vpop.f32.mrb[0].mxu0
        %1814 = vmatprep.mubr.bf16.mxu0 %v1143
        %1815 = vmatmul.mubr.bf16.gmra.mrb[0].mxu0 %v1142
        %v1816 = vpop.f32.mrb[0].mxu0
        %v1817 = vadd.f32 %v716, %v1816
        %v1818 = vpop.f32.mrb[0].mxu0
        %v1819 = vpop.f32.mrb[0].mxu0
        %v1820 = vadd.f32 %v716, %v1819
        %v1821 = vpop.f32.mrb[0].mxu0
        %1822 = vmatprep.mubr.bf16.mxu0 %v1151
        %1823 = vmatmul.mubr.bf16.gmra.mrb[0].mxu0 %v1150
        %v1824 = vpop.f32.mrb[0].mxu0
        %v1825 = vadd.f32 %v716, %v1824
        %v1826 = vpop.f32.mrb[0].mxu0
        %v1827 = vpop.f32.mrb[0].mxu0
        %v1828 = vadd.f32 %v716, %v1827
        %v1829 = vpop.f32.mrb[0].mxu0
        %1830 = vmatprep.mubr.bf16.mxu0 %v1159
        %1831 = vmatmul.mubr.bf16.gmra.mrb[0].mxu0 %v1158
        %v1832 = vpop.f32.mrb[0].mxu0
        %v1833 = vadd.f32 %v716, %v1832
        %v1834 = vpop.f32.mrb[0].mxu0
        %v1835 = vpop.f32.mrb[0].mxu0
        %v1836 = vadd.f32 %v716, %v1835
        %v1837 = vpop.f32.mrb[0].mxu0
        %1838 = vmatprep.mubr.bf16.mxu0 %v1167
        %1839 = vmatmul.mubr.bf16.gmra.mrb[0].mxu0 %v1166
        %v1840 = vpop.f32.mrb[0].mxu0
        %v1841 = vadd.f32 %v716, %v1840
        %v1842 = vpop.f32.mrb[0].mxu0
        %v1843 = vpop.f32.mrb[0].mxu0
        %v1844 = vadd.f32 %v716, %v1843
        %v1845 = vpop.f32.mrb[0].mxu0
        %1846 = vmatprep.mubr.bf16.mxu0 %v1175
        %1847 = vmatmul.mubr.bf16.gmra.mrb[0].mxu0 %v1174
        %v1848 = vpop.f32.mrb[0].mxu0
        %v1849 = vadd.f32 %v716, %v1848
        %v1850 = vpop.f32.mrb[0].mxu0
        %v1851 = vpop.f32.mrb[0].mxu0
        %v1852 = vadd.f32 %v716, %v1851
        %v1853 = vpop.f32.mrb[0].mxu0
        %1854 = vmatprep.mubr.bf16.mxu0 %v1183
        %1855 = vmatmul.mubr.bf16.gmra.mrb[0].mxu0 %v1182
        %v1856 = vpop.f32.mrb[0].mxu0
        %v1857 = vadd.f32 %v716, %v1856
        %v1858 = vpop.f32.mrb[0].mxu0
        %v1859 = vpop.f32.mrb[0].mxu0
        %v1860 = vadd.f32 %v716, %v1859
        %v1861 = vpop.f32.mrb[0].mxu0
        %1862 = vmatprep.mubr.bf16.mxu0 %v1191
        %1863 = vmatmul.mubr.bf16.gmra.mrb[0].mxu0 %v1190
        %v1864 = vpop.f32.mrb[0].mxu0
        %v1865 = vadd.f32 %v716, %v1864
        %v1866 = vpop.f32.mrb[0].mxu0
        %v1867 = vpop.f32.mrb[0].mxu0
        %v1868 = vadd.f32 %v716, %v1867
        %v1869 = vpop.f32.mrb[0].mxu0
        %1870 = vmatprep.mubr.bf16.mxu0 %v1199
        %1871 = vmatmul.mubr.bf16.gmra.mrb[0].mxu0 %v1198
        %v1872 = vpop.f32.mrb[0].mxu0
        %v1873 = vadd.f32 %v716, %v1872
        %v1874 = vpop.f32.mrb[0].mxu0
        %v1875 = vpop.f32.mrb[0].mxu0
        %v1876 = vadd.f32 %v716, %v1875
        %v1877 = vpop.f32.mrb[0].mxu0
        %1878 = vmatprep.mubr.bf16.mxu0 %v1207
        %1879 = vmatmul.mubr.bf16.gmra.mrb[0].mxu0 %v1206
        %v1880 = vpop.f32.mrb[0].mxu0
        %v1881 = vadd.f32 %v716, %v1880
        %v1882 = vpop.f32.mrb[0].mxu0
        %v1883 = vpop.f32.mrb[0].mxu0
        %v1884 = vadd.f32 %v716, %v1883
        %v1885 = vpop.f32.mrb[0].mxu0
        %1886 = vmatprep.mubr.bf16.mxu0 %v1215
        %1887 = vmatmul.mubr.bf16.gmra.mrb[0].mxu0 %v1214
        %v1888 = vpop.f32.mrb[0].mxu0
        %v1889 = vadd.f32 %v716, %v1888
        %v1890 = vpop.f32.mrb[0].mxu0
        %v1891 = vpop.f32.mrb[0].mxu0
        %v1892 = vadd.f32 %v716, %v1891
        %v1893 = vpop.f32.mrb[0].mxu0
        %1894 = vmatprep.mubr.bf16.mxu0 %v1223
        %1895 = vmatmul.mubr.bf16.gmra.mrb[0].mxu0 %v1222
        %v1896 = vpop.f32.mrb[0].mxu0
        %v1897 = vadd.f32 %v716, %v1896
        %v1898 = vpop.f32.mrb[0].mxu0
        %v1899 = vpop.f32.mrb[0].mxu0
        %v1900 = vadd.f32 %v716, %v1899
        %v1901 = vpop.f32.mrb[0].mxu0
        %1902 = vdwg.mxu0
        %1903 = vmatprep.subr.bf16.mxu0 0
        %1904 = vmatpush1.bf16.msra.mxu0 %v1630
        %1905 = vmatprep.subr.bf16.mxu0 0
        %1906 = vmatpush1.bf16.msra.mxu0 %v1631
        %1907 = vmatprep.subr.bf16.mxu0 0
        %1908 = vmatpush1.bf16.msra.mxu0 %v1632
        %1909 = vmatprep.subr.bf16.mxu0 0
        %1910 = vmatpush1.bf16.msra.mxu0 %v1633
        %1911 = vmatprep.subr.bf16.mxu0 0
        %1912 = vmatpush1.bf16.msra.mxu0 %v1634
        %1913 = vmatprep.subr.bf16.mxu0 0
        %1914 = vmatpush1.bf16.msra.mxu0 %v1635
        %1915 = vmatprep.subr.bf16.mxu0 0
        %1916 = vmatpush1.bf16.msra.mxu0 %v1636
        %1917 = vmatprep.subr.bf16.mxu0 0
        %1918 = vmatpush1.bf16.msra.mxu0 %v1637
        %1919 = vmatprep.subr.bf16.mxu0 0
        %1920 = vmatpush1.bf16.msra.mxu0 %v1638
        %1921 = vmatprep.subr.bf16.mxu0 0
        %1922 = vmatpush1.bf16.msra.mxu0 %v1639
        %1923 = vmatprep.subr.bf16.mxu0 0
        %1924 = vmatpush1.bf16.msra.mxu0 %v1640
        %1925 = vmatprep.subr.bf16.mxu0 0
        %1926 = vmatpush1.bf16.msra.mxu0 %v1641
        %1927 = vmatprep.subr.bf16.mxu0 0
        %1928 = vmatpush1.bf16.msra.mxu0 %v1642
        %1929 = vmatprep.subr.bf16.mxu0 0
        %1930 = vmatpush1.bf16.msra.mxu0 %v1643
        %1931 = vmatprep.subr.bf16.mxu0 0
        %1932 = vmatpush1.bf16.msra.mxu0 %v1644
        %1933 = vmatprep.subr.bf16.mxu0 0
        %1934 = vmatpush1.bf16.msra.mxu0 %v1645
        %1935 = vmatprep.mubr.bf16.mxu0 %v1105
        %1936 = vmatmul.mubr.bf16.gmra.mrb[0].mxu0 %v1104
        %v1937 = vpop.f32.mrb[0].mxu0
        %v1938 = vadd.f32 %v1777, %v1937
        %v1939 = vpop.f32.mrb[0].mxu0
        %v1940 = vpop.f32.mrb[0].mxu0
        %v1941 = vadd.f32 %v1780, %v1940
        %v1942 = vpop.f32.mrb[0].mxu0
        %1943 = vmatprep.mubr.bf16.mxu0 %v1113
        %1944 = vmatmul.mubr.bf16.gmra.mrb[0].mxu0 %v1112
        %v1945 = vpop.f32.mrb[0].mxu0
        %v1946 = vadd.f32 %v1785, %v1945
        %v1947 = vpop.f32.mrb[0].mxu0
        %v1948 = vpop.f32.mrb[0].mxu0
        %v1949 = vadd.f32 %v1788, %v1948
        %v1950 = vpop.f32.mrb[0].mxu0
        %1951 = vmatprep.mubr.bf16.mxu0 %v1121
        %1952 = vmatmul.mubr.bf16.gmra.mrb[0].mxu0 %v1120
        %v1953 = vpop.f32.mrb[0].mxu0
        %v1954 = vadd.f32 %v1793, %v1953
        %v1955 = vpop.f32.mrb[0].mxu0
        %v1956 = vpop.f32.mrb[0].mxu0
        %v1957 = vadd.f32 %v1796, %v1956
        %v1958 = vpop.f32.mrb[0].mxu0
        %1959 = vmatprep.mubr.bf16.mxu0 %v1129
        %1960 = vmatmul.mubr.bf16.gmra.mrb[0].mxu0 %v1128
        %v1961 = vpop.f32.mrb[0].mxu0
        %v1962 = vadd.f32 %v1801, %v1961
        %v1963 = vpop.f32.mrb[0].mxu0
        %v1964 = vpop.f32.mrb[0].mxu0
        %v1965 = vadd.f32 %v1804, %v1964
        %v1966 = vpop.f32.mrb[0].mxu0
        %1967 = vmatprep.mubr.bf16.mxu0 %v1137
        %1968 = vmatmul.mubr.bf16.gmra.mrb[0].mxu0 %v1136
        %v1969 = vpop.f32.mrb[0].mxu0
        %v1970 = vadd.f32 %v1809, %v1969
        %v1971 = vpop.f32.mrb[0].mxu0
        %v1972 = vpop.f32.mrb[0].mxu0
        %v1973 = vadd.f32 %v1812, %v1972
        %v1974 = vpop.f32.mrb[0].mxu0
        %1975 = vmatprep.mubr.bf16.mxu0 %v1145
        %1976 = vmatmul.mubr.bf16.gmra.mrb[0].mxu0 %v1144
        %v1977 = vpop.f32.mrb[0].mxu0
        %v1978 = vadd.f32 %v1817, %v1977
        %v1979 = vpop.f32.mrb[0].mxu0
        %v1980 = vpop.f32.mrb[0].mxu0
        %v1981 = vadd.f32 %v1820, %v1980
        %v1982 = vpop.f32.mrb[0].mxu0
        %1983 = vmatprep.mubr.bf16.mxu0 %v1153
        %1984 = vmatmul.mubr.bf16.gmra.mrb[0].mxu0 %v1152
        %v1985 = vpop.f32.mrb[0].mxu0
        %v1986 = vadd.f32 %v1825, %v1985
        %v1987 = vpop.f32.mrb[0].mxu0
        %v1988 = vpop.f32.mrb[0].mxu0
        %v1989 = vadd.f32 %v1828, %v1988
        %v1990 = vpop.f32.mrb[0].mxu0
        %1991 = vmatprep.mubr.bf16.mxu0 %v1161
        %1992 = vmatmul.mubr.bf16.gmra.mrb[0].mxu0 %v1160
        %v1993 = vpop.f32.mrb[0].mxu0
        %v1994 = vadd.f32 %v1833, %v1993
        %v1995 = vpop.f32.mrb[0].mxu0
        %v1996 = vpop.f32.mrb[0].mxu0
        %v1997 = vadd.f32 %v1836, %v1996
        %v1998 = vpop.f32.mrb[0].mxu0
        %1999 = vmatprep.mubr.bf16.mxu0 %v1169
        %2000 = vmatmul.mubr.bf16.gmra.mrb[0].mxu0 %v1168
        %v2001 = vpop.f32.mrb[0].mxu0
        %v2002 = vadd.f32 %v1841, %v2001
        %v2003 = vpop.f32.mrb[0].mxu0
        %v2004 = vpop.f32.mrb[0].mxu0
        %v2005 = vadd.f32 %v1844, %v2004
        %v2006 = vpop.f32.mrb[0].mxu0
        %2007 = vmatprep.mubr.bf16.mxu0 %v1177
        %2008 = vmatmul.mubr.bf16.gmra.mrb[0].mxu0 %v1176
        %v2009 = vpop.f32.mrb[0].mxu0
        %v2010 = vadd.f32 %v1849, %v2009
        %v2011 = vpop.f32.mrb[0].mxu0
        %v2012 = vpop.f32.mrb[0].mxu0
        %v2013 = vadd.f32 %v1852, %v2012
        %v2014 = vpop.f32.mrb[0].mxu0
        %2015 = vmatprep.mubr.bf16.mxu0 %v1185
        %2016 = vmatmul.mubr.bf16.gmra.mrb[0].mxu0 %v1184
        %v2017 = vpop.f32.mrb[0].mxu0
        %v2018 = vadd.f32 %v1857, %v2017
        %v2019 = vpop.f32.mrb[0].mxu0
        %v2020 = vpop.f32.mrb[0].mxu0
        %v2021 = vadd.f32 %v1860, %v2020
        %v2022 = vpop.f32.mrb[0].mxu0
        %2023 = vmatprep.mubr.bf16.mxu0 %v1193
        %2024 = vmatmul.mubr.bf16.gmra.mrb[0].mxu0 %v1192
        %v2025 = vpop.f32.mrb[0].mxu0
        %v2026 = vadd.f32 %v1865, %v2025
        %v2027 = vpop.f32.mrb[0].mxu0
        %v2028 = vpop.f32.mrb[0].mxu0
        %v2029 = vadd.f32 %v1868, %v2028
        %v2030 = vpop.f32.mrb[0].mxu0
        %2031 = vmatprep.mubr.bf16.mxu0 %v1201
        %2032 = vmatmul.mubr.bf16.gmra.mrb[0].mxu0 %v1200
        %v2033 = vpop.f32.mrb[0].mxu0
        %v2034 = vadd.f32 %v1873, %v2033
        %v2035 = vpop.f32.mrb[0].mxu0
        %v2036 = vpop.f32.mrb[0].mxu0
        %v2037 = vadd.f32 %v1876, %v2036
        %v2038 = vpop.f32.mrb[0].mxu0
        %2039 = vmatprep.mubr.bf16.mxu0 %v1209
        %2040 = vmatmul.mubr.bf16.gmra.mrb[0].mxu0 %v1208
        %v2041 = vpop.f32.mrb[0].mxu0
        %v2042 = vadd.f32 %v1881, %v2041
        %v2043 = vpop.f32.mrb[0].mxu0
        %v2044 = vpop.f32.mrb[0].mxu0
        %v2045 = vadd.f32 %v1884, %v2044
        %v2046 = vpop.f32.mrb[0].mxu0
        %2047 = vmatprep.mubr.bf16.mxu0 %v1217
        %2048 = vmatmul.mubr.bf16.gmra.mrb[0].mxu0 %v1216
        %v2049 = vpop.f32.mrb[0].mxu0
        %v2050 = vadd.f32 %v1889, %v2049
        %v2051 = vpop.f32.mrb[0].mxu0
        %v2052 = vpop.f32.mrb[0].mxu0
        %v2053 = vadd.f32 %v1892, %v2052
        %v2054 = vpop.f32.mrb[0].mxu0
        %2055 = vmatprep.mubr.bf16.mxu0 %v1225
        %2056 = vmatmul.mubr.bf16.gmra.mrb[0].mxu0 %v1224
        %v2057 = vpop.f32.mrb[0].mxu0
        %v2058 = vadd.f32 %v1897, %v2057
        %v2059 = vpop.f32.mrb[0].mxu0
        %v2060 = vpop.f32.mrb[0].mxu0
        %v2061 = vadd.f32 %v1900, %v2060
        %v2062 = vpop.f32.mrb[0].mxu0
        %2063 = vdwg.mxu0
        %2064 = vmatprep.subr.bf16.mxu0 0
        %2065 = vmatpush1.bf16.msra.mxu0 %v1646
        %2066 = vmatprep.subr.bf16.mxu0 0
        %2067 = vmatpush1.bf16.msra.mxu0 %v1647
        %2068 = vmatprep.subr.bf16.mxu0 0
        %2069 = vmatpush1.bf16.msra.mxu0 %v1648
        %2070 = vmatprep.subr.bf16.mxu0 0
        %2071 = vmatpush1.bf16.msra.mxu0 %v1649
        %2072 = vmatprep.subr.bf16.mxu0 0
        %2073 = vmatpush1.bf16.msra.mxu0 %v1650
        %2074 = vmatprep.subr.bf16.mxu0 0
        %2075 = vmatpush1.bf16.msra.mxu0 %v1651
        %2076 = vmatprep.subr.bf16.mxu0 0
        %2077 = vmatpush1.bf16.msra.mxu0 %v1652
        %2078 = vmatprep.subr.bf16.mxu0 0
        %2079 = vmatpush1.bf16.msra.mxu0 %v1653
        %2080 = vmatprep.subr.bf16.mxu0 0
        %2081 = vmatpush1.bf16.msra.mxu0 %v1654
        %2082 = vmatprep.subr.bf16.mxu0 0
        %2083 = vmatpush1.bf16.msra.mxu0 %v1655
        %2084 = vmatprep.subr.bf16.mxu0 0
        %2085 = vmatpush1.bf16.msra.mxu0 %v1656
        %2086 = vmatprep.subr.bf16.mxu0 0
        %2087 = vmatpush1.bf16.msra.mxu0 %v1657
        %2088 = vmatprep.subr.bf16.mxu0 0
        %2089 = vmatpush1.bf16.msra.mxu0 %v1658
        %2090 = vmatprep.subr.bf16.mxu0 0
        %2091 = vmatpush1.bf16.msra.mxu0 %v1659
        %2092 = vmatprep.subr.bf16.mxu0 0
        %2093 = vmatpush1.bf16.msra.mxu0 %v1660
        %2094 = vmatprep.subr.bf16.mxu0 0
        %2095 = vmatpush1.bf16.msra.mxu0 %v1661
        %2096 = vmatprep.mubr.bf16.mxu0 %v1107
        %2097 = vmatmul.mubr.bf16.gmra.mrb[0].mxu0 %v1106
        %v2098 = vpop.f32.mrb[0].mxu0
        %v2099 = vadd.f32 %v1938, %v2098
        %v2100 = vpop.f32.mrb[0].mxu0
        %v2101 = vpop.f32.mrb[0].mxu0
        %v2102 = vadd.f32 %v1941, %v2101
        %v2103 = vpop.f32.mrb[0].mxu0
        %2104 = vmatprep.mubr.bf16.mxu0 %v1115
        %2105 = vmatmul.mubr.bf16.gmra.mrb[0].mxu0 %v1114
        %v2106 = vpop.f32.mrb[0].mxu0
        %v2107 = vadd.f32 %v1946, %v2106
        %v2108 = vpop.f32.mrb[0].mxu0
        %v2109 = vpop.f32.mrb[0].mxu0
        %v2110 = vadd.f32 %v1949, %v2109
        %v2111 = vpop.f32.mrb[0].mxu0
        %2112 = vmatprep.mubr.bf16.mxu0 %v1123
        %2113 = vmatmul.mubr.bf16.gmra.mrb[0].mxu0 %v1122
        %v2114 = vpop.f32.mrb[0].mxu0
        %v2115 = vadd.f32 %v1954, %v2114
        %v2116 = vpop.f32.mrb[0].mxu0
        %v2117 = vpop.f32.mrb[0].mxu0
        %v2118 = vadd.f32 %v1957, %v2117
        %v2119 = vpop.f32.mrb[0].mxu0
        %2120 = vmatprep.mubr.bf16.mxu0 %v1131
        %2121 = vmatmul.mubr.bf16.gmra.mrb[0].mxu0 %v1130
        %v2122 = vpop.f32.mrb[0].mxu0
        %v2123 = vadd.f32 %v1962, %v2122
        %v2124 = vpop.f32.mrb[0].mxu0
        %v2125 = vpop.f32.mrb[0].mxu0
        %v2126 = vadd.f32 %v1965, %v2125
        %v2127 = vpop.f32.mrb[0].mxu0
        %2128 = vmatprep.mubr.bf16.mxu0 %v1139
        %2129 = vmatmul.mubr.bf16.gmra.mrb[0].mxu0 %v1138
        %v2130 = vpop.f32.mrb[0].mxu0
        %v2131 = vadd.f32 %v1970, %v2130
        %v2132 = vpop.f32.mrb[0].mxu0
        %v2133 = vpop.f32.mrb[0].mxu0
        %v2134 = vadd.f32 %v1973, %v2133
        %v2135 = vpop.f32.mrb[0].mxu0
        %2136 = vmatprep.mubr.bf16.mxu0 %v1147
        %2137 = vmatmul.mubr.bf16.gmra.mrb[0].mxu0 %v1146
        %v2138 = vpop.f32.mrb[0].mxu0
        %v2139 = vadd.f32 %v1978, %v2138
        %v2140 = vpop.f32.mrb[0].mxu0
        %v2141 = vpop.f32.mrb[0].mxu0
        %v2142 = vadd.f32 %v1981, %v2141
        %v2143 = vpop.f32.mrb[0].mxu0
        %2144 = vmatprep.mubr.bf16.mxu0 %v1155
        %2145 = vmatmul.mubr.bf16.gmra.mrb[0].mxu0 %v1154
        %v2146 = vpop.f32.mrb[0].mxu0
        %v2147 = vadd.f32 %v1986, %v2146
        %v2148 = vpop.f32.mrb[0].mxu0
        %v2149 = vpop.f32.mrb[0].mxu0
        %v2150 = vadd.f32 %v1989, %v2149
        %v2151 = vpop.f32.mrb[0].mxu0
        %2152 = vmatprep.mubr.bf16.mxu0 %v1163
        %2153 = vmatmul.mubr.bf16.gmra.mrb[0].mxu0 %v1162
        %v2154 = vpop.f32.mrb[0].mxu0
        %v2155 = vadd.f32 %v1994, %v2154
        %v2156 = vpop.f32.mrb[0].mxu0
        %v2157 = vpop.f32.mrb[0].mxu0
        %v2158 = vadd.f32 %v1997, %v2157
        %v2159 = vpop.f32.mrb[0].mxu0
        %2160 = vmatprep.mubr.bf16.mxu0 %v1171
        %2161 = vmatmul.mubr.bf16.gmra.mrb[0].mxu0 %v1170
        %v2162 = vpop.f32.mrb[0].mxu0
        %v2163 = vadd.f32 %v2002, %v2162
        %v2164 = vpop.f32.mrb[0].mxu0
        %v2165 = vpop.f32.mrb[0].mxu0
        %v2166 = vadd.f32 %v2005, %v2165
        %v2167 = vpop.f32.mrb[0].mxu0
        %2168 = vmatprep.mubr.bf16.mxu0 %v1179
        %2169 = vmatmul.mubr.bf16.gmra.mrb[0].mxu0 %v1178
        %v2170 = vpop.f32.mrb[0].mxu0
        %v2171 = vadd.f32 %v2010, %v2170
        %v2172 = vpop.f32.mrb[0].mxu0
        %v2173 = vpop.f32.mrb[0].mxu0
        %v2174 = vadd.f32 %v2013, %v2173
        %v2175 = vpop.f32.mrb[0].mxu0
        %2176 = vmatprep.mubr.bf16.mxu0 %v1187
        %2177 = vmatmul.mubr.bf16.gmra.mrb[0].mxu0 %v1186
        %v2178 = vpop.f32.mrb[0].mxu0
        %v2179 = vadd.f32 %v2018, %v2178
        %v2180 = vpop.f32.mrb[0].mxu0
        %v2181 = vpop.f32.mrb[0].mxu0
        %v2182 = vadd.f32 %v2021, %v2181
        %v2183 = vpop.f32.mrb[0].mxu0
        %2184 = vmatprep.mubr.bf16.mxu0 %v1195
        %2185 = vmatmul.mubr.bf16.gmra.mrb[0].mxu0 %v1194
        %v2186 = vpop.f32.mrb[0].mxu0
        %v2187 = vadd.f32 %v2026, %v2186
        %v2188 = vpop.f32.mrb[0].mxu0
        %v2189 = vpop.f32.mrb[0].mxu0
        %v2190 = vadd.f32 %v2029, %v2189
        %v2191 = vpop.f32.mrb[0].mxu0
        %2192 = vmatprep.mubr.bf16.mxu0 %v1203
        %2193 = vmatmul.mubr.bf16.gmra.mrb[0].mxu0 %v1202
        %v2194 = vpop.f32.mrb[0].mxu0
        %v2195 = vadd.f32 %v2034, %v2194
        %v2196 = vpop.f32.mrb[0].mxu0
        %v2197 = vpop.f32.mrb[0].mxu0
        %v2198 = vadd.f32 %v2037, %v2197
        %v2199 = vpop.f32.mrb[0].mxu0
        %2200 = vmatprep.mubr.bf16.mxu0 %v1211
        %2201 = vmatmul.mubr.bf16.gmra.mrb[0].mxu0 %v1210
        %v2202 = vpop.f32.mrb[0].mxu0
        %v2203 = vadd.f32 %v2042, %v2202
        %v2204 = vpop.f32.mrb[0].mxu0
        %v2205 = vpop.f32.mrb[0].mxu0
        %v2206 = vadd.f32 %v2045, %v2205
        %v2207 = vpop.f32.mrb[0].mxu0
        %2208 = vmatprep.mubr.bf16.mxu0 %v1219
        %2209 = vmatmul.mubr.bf16.gmra.mrb[0].mxu0 %v1218
        %v2210 = vpop.f32.mrb[0].mxu0
        %v2211 = vadd.f32 %v2050, %v2210
        %v2212 = vpop.f32.mrb[0].mxu0
        %v2213 = vpop.f32.mrb[0].mxu0
        %v2214 = vadd.f32 %v2053, %v2213
        %v2215 = vpop.f32.mrb[0].mxu0
        %2216 = vmatprep.mubr.bf16.mxu0 %v1227
        %2217 = vmatmul.mubr.bf16.gmra.mrb[0].mxu0 %v1226
        %v2218 = vpop.f32.mrb[0].mxu0
        %v2219 = vadd.f32 %v2058, %v2218
        %v2220 = vpop.f32.mrb[0].mxu0
        %v2221 = vpop.f32.mrb[0].mxu0
        %v2222 = vadd.f32 %v2061, %v2221
        %v2223 = vpop.f32.mrb[0].mxu0
        %2224 = vdwg.mxu0
        %2225 = vmatprep.subr.bf16.mxu0 0
        %2226 = vmatpush1.bf16.msra.mxu0 %v1662
        %2227 = vmatprep.subr.bf16.mxu0 0
        %2228 = vmatpush1.bf16.msra.mxu0 %v1663
        %2229 = vmatprep.subr.bf16.mxu0 0
        %2230 = vmatpush1.bf16.msra.mxu0 %v1664
        %2231 = vmatprep.subr.bf16.mxu0 0
        %2232 = vmatpush1.bf16.msra.mxu0 %v1665
        %2233 = vmatprep.subr.bf16.mxu0 0
        %2234 = vmatpush1.bf16.msra.mxu0 %v1666
        %2235 = vmatprep.subr.bf16.mxu0 0
        %2236 = vmatpush1.bf16.msra.mxu0 %v1667
        %2237 = vmatprep.subr.bf16.mxu0 0
        %2238 = vmatpush1.bf16.msra.mxu0 %v1668
        %2239 = vmatprep.subr.bf16.mxu0 0
        %2240 = vmatpush1.bf16.msra.mxu0 %v1669
        %2241 = vmatprep.subr.bf16.mxu0 0
        %2242 = vmatpush1.bf16.msra.mxu0 %v1670
        %2243 = vmatprep.subr.bf16.mxu0 0
        %2244 = vmatpush1.bf16.msra.mxu0 %v1671
        %2245 = vmatprep.subr.bf16.mxu0 0
        %2246 = vmatpush1.bf16.msra.mxu0 %v1672
        %2247 = vmatprep.subr.bf16.mxu0 0
        %2248 = vmatpush1.bf16.msra.mxu0 %v1673
        %2249 = vmatprep.subr.bf16.mxu0 0
        %2250 = vmatpush1.bf16.msra.mxu0 %v1674
        %2251 = vmatprep.subr.bf16.mxu0 0
        %2252 = vmatpush1.bf16.msra.mxu0 %v1675
        %2253 = vmatprep.subr.bf16.mxu0 0
        %2254 = vmatpush1.bf16.msra.mxu0 %v1676
        %2255 = vmatprep.subr.bf16.mxu0 0
        %2256 = vmatpush1.bf16.msra.mxu0 %v1677
        %2257 = vmatprep.mubr.bf16.mxu0 %v1109
        %2258 = vmatmul.mubr.bf16.gmra.mrb[0].mxu0 %v1108
        %v2259 = vpop.f32.mrb[0].mxu0
        %v2260 = vadd.f32 %v2099, %v2259
        %v2261 = vpop.f32.mrb[0].mxu0
        %v2262 = vpop.f32.mrb[0].mxu0
        %v2263 = vadd.f32 %v2102, %v2262
        %v2264 = vpop.f32.mrb[0].mxu0
        %2265 = vmatprep.mubr.bf16.mxu0 %v1117
        %2266 = vmatmul.mubr.bf16.gmra.mrb[0].mxu0 %v1116
        %v2267 = vpop.f32.mrb[0].mxu0
        %v2268 = vadd.f32 %v2107, %v2267
        %v2269 = vpop.f32.mrb[0].mxu0
        %v2270 = vpop.f32.mrb[0].mxu0
        %v2271 = vadd.f32 %v2110, %v2270
        %v2272 = vpop.f32.mrb[0].mxu0
        %2273 = vmatprep.mubr.bf16.mxu0 %v1125
        %2274 = vmatmul.mubr.bf16.gmra.mrb[0].mxu0 %v1124
        %v2275 = vpop.f32.mrb[0].mxu0
        %v2276 = vadd.f32 %v2115, %v2275
        %v2277 = vpop.f32.mrb[0].mxu0
        %v2278 = vpop.f32.mrb[0].mxu0
        %v2279 = vadd.f32 %v2118, %v2278
        %v2280 = vpop.f32.mrb[0].mxu0
        %2281 = vmatprep.mubr.bf16.mxu0 %v1133
        %2282 = vmatmul.mubr.bf16.gmra.mrb[0].mxu0 %v1132
        %v2283 = vpop.f32.mrb[0].mxu0
        %v2284 = vadd.f32 %v2123, %v2283
        %v2285 = vpop.f32.mrb[0].mxu0
        %v2286 = vpop.f32.mrb[0].mxu0
        %v2287 = vadd.f32 %v2126, %v2286
        %v2288 = vpop.f32.mrb[0].mxu0
        %2289 = vmatprep.mubr.bf16.mxu0 %v1141
        %2290 = vmatmul.mubr.bf16.gmra.mrb[0].mxu0 %v1140
        %v2291 = vpop.f32.mrb[0].mxu0
        %v2292 = vadd.f32 %v2131, %v2291
        %v2293 = vpop.f32.mrb[0].mxu0
        %v2294 = vpop.f32.mrb[0].mxu0
        %v2295 = vadd.f32 %v2134, %v2294
        %v2296 = vpop.f32.mrb[0].mxu0
        %2297 = vmatprep.mubr.bf16.mxu0 %v1149
        %2298 = vmatmul.mubr.bf16.gmra.mrb[0].mxu0 %v1148
        %v2299 = vpop.f32.mrb[0].mxu0
        %v2300 = vadd.f32 %v2139, %v2299
        %v2301 = vpop.f32.mrb[0].mxu0
        %v2302 = vpop.f32.mrb[0].mxu0
        %v2303 = vadd.f32 %v2142, %v2302
        %v2304 = vpop.f32.mrb[0].mxu0
        %2305 = vmatprep.mubr.bf16.mxu0 %v1157
        %2306 = vmatmul.mubr.bf16.gmra.mrb[0].mxu0 %v1156
        %v2307 = vpop.f32.mrb[0].mxu0
        %v2308 = vadd.f32 %v2147, %v2307
        %v2309 = vpop.f32.mrb[0].mxu0
        %v2310 = vpop.f32.mrb[0].mxu0
        %v2311 = vadd.f32 %v2150, %v2310
        %v2312 = vpop.f32.mrb[0].mxu0
        %2313 = vmatprep.mubr.bf16.mxu0 %v1165
        %2314 = vmatmul.mubr.bf16.gmra.mrb[0].mxu0 %v1164
        %v2315 = vpop.f32.mrb[0].mxu0
        %v2316 = vadd.f32 %v2155, %v2315
        %v2317 = vpop.f32.mrb[0].mxu0
        %v2318 = vpop.f32.mrb[0].mxu0
        %v2319 = vadd.f32 %v2158, %v2318
        %v2320 = vpop.f32.mrb[0].mxu0
        %2321 = vmatprep.mubr.bf16.mxu0 %v1173
        %2322 = vmatmul.mubr.bf16.gmra.mrb[0].mxu0 %v1172
        %v2323 = vpop.f32.mrb[0].mxu0
        %v2324 = vadd.f32 %v2163, %v2323
        %v2325 = vpop.f32.mrb[0].mxu0
        %v2326 = vpop.f32.mrb[0].mxu0
        %v2327 = vadd.f32 %v2166, %v2326
        %v2328 = vpop.f32.mrb[0].mxu0
        %2329 = vmatprep.mubr.bf16.mxu0 %v1181
        %2330 = vmatmul.mubr.bf16.gmra.mrb[0].mxu0 %v1180
        %v2331 = vpop.f32.mrb[0].mxu0
        %v2332 = vadd.f32 %v2171, %v2331
        %v2333 = vpop.f32.mrb[0].mxu0
        %v2334 = vpop.f32.mrb[0].mxu0
        %v2335 = vadd.f32 %v2174, %v2334
        %v2336 = vpop.f32.mrb[0].mxu0
        %2337 = vmatprep.mubr.bf16.mxu0 %v1189
        %2338 = vmatmul.mubr.bf16.gmra.mrb[0].mxu0 %v1188
        %v2339 = vpop.f32.mrb[0].mxu0
        %v2340 = vadd.f32 %v2179, %v2339
        %v2341 = vpop.f32.mrb[0].mxu0
        %v2342 = vpop.f32.mrb[0].mxu0
        %v2343 = vadd.f32 %v2182, %v2342
        %v2344 = vpop.f32.mrb[0].mxu0
        %2345 = vmatprep.mubr.bf16.mxu0 %v1197
        %2346 = vmatmul.mubr.bf16.gmra.mrb[0].mxu0 %v1196
        %v2347 = vpop.f32.mrb[0].mxu0
        %v2348 = vadd.f32 %v2187, %v2347
        %v2349 = vpop.f32.mrb[0].mxu0
        %v2350 = vpop.f32.mrb[0].mxu0
        %v2351 = vadd.f32 %v2190, %v2350
        %v2352 = vpop.f32.mrb[0].mxu0
        %2353 = vmatprep.mubr.bf16.mxu0 %v1205
        %2354 = vmatmul.mubr.bf16.gmra.mrb[0].mxu0 %v1204
        %v2355 = vpop.f32.mrb[0].mxu0
        %v2356 = vadd.f32 %v2195, %v2355
        %v2357 = vpop.f32.mrb[0].mxu0
        %v2358 = vpop.f32.mrb[0].mxu0
        %v2359 = vadd.f32 %v2198, %v2358
        %v2360 = vpop.f32.mrb[0].mxu0
        %2361 = vmatprep.mubr.bf16.mxu0 %v1213
        %2362 = vmatmul.mubr.bf16.gmra.mrb[0].mxu0 %v1212
        %v2363 = vpop.f32.mrb[0].mxu0
        %v2364 = vadd.f32 %v2203, %v2363
        %v2365 = vpop.f32.mrb[0].mxu0
        %v2366 = vpop.f32.mrb[0].mxu0
        %v2367 = vadd.f32 %v2206, %v2366
        %v2368 = vpop.f32.mrb[0].mxu0
        %2369 = vmatprep.mubr.bf16.mxu0 %v1221
        %2370 = vmatmul.mubr.bf16.gmra.mrb[0].mxu0 %v1220
        %v2371 = vpop.f32.mrb[0].mxu0
        %v2372 = vadd.f32 %v2211, %v2371
        %v2373 = vpop.f32.mrb[0].mxu0
        %v2374 = vpop.f32.mrb[0].mxu0
        %v2375 = vadd.f32 %v2214, %v2374
        %v2376 = vpop.f32.mrb[0].mxu0
        %2377 = vmatprep.mubr.bf16.mxu0 %v1229
        %2378 = vmatmul.mubr.bf16.gmra.mrb[0].mxu0 %v1228
        %v2379 = vpop.f32.mrb[0].mxu0
        %v2380 = vadd.f32 %v2219, %v2379
        %v2381 = vpop.f32.mrb[0].mxu0
        %v2382 = vpop.f32.mrb[0].mxu0
        %v2383 = vadd.f32 %v2222, %v2382
        %v2384 = vpop.f32.mrb[0].mxu0
        %2385 = vdwg.mxu0
        %v2386 = vmax.f32 %v2260, 0.0
        %v2387 = vmax.f32 %v2263, 0.0
        %v2388 = vmax.f32 %v2268, 0.0
        %v2389 = vmax.f32 %v2271, 0.0
        %v2390 = vmax.f32 %v2276, 0.0
        %v2391 = vmax.f32 %v2279, 0.0
        %v2392 = vmax.f32 %v2284, 0.0
        %v2393 = vmax.f32 %v2287, 0.0
        %v2394 = vmax.f32 %v2292, 0.0
        %v2395 = vmax.f32 %v2295, 0.0
        %v2396 = vmax.f32 %v2300, 0.0
        %v2397 = vmax.f32 %v2303, 0.0
        %v2398 = vmax.f32 %v2308, 0.0
        %v2399 = vmax.f32 %v2311, 0.0
        %v2400 = vmax.f32 %v2316, 0.0
        %v2401 = vmax.f32 %v2319, 0.0
        %v2402 = vmax.f32 %v2324, 0.0
        %v2403 = vmax.f32 %v2327, 0.0
        %v2404 = vmax.f32 %v2332, 0.0
        %v2405 = vmax.f32 %v2335, 0.0
        %v2406 = vmax.f32 %v2340, 0.0
        %v2407 = vmax.f32 %v2343, 0.0
        %v2408 = vmax.f32 %v2348, 0.0
        %v2409 = vmax.f32 %v2351, 0.0
        %v2410 = vmax.f32 %v2356, 0.0
        %v2411 = vmax.f32 %v2359, 0.0
        %v2412 = vmax.f32 %v2364, 0.0
        %v2413 = vmax.f32 %v2367, 0.0
        %v2414 = vmax.f32 %v2372, 0.0
        %v2415 = vmax.f32 %v2375, 0.0
        %v2416 = vmax.f32 %v2380, 0.0
        %v2417 = vmax.f32 %v2383, 0.0
        %v2418 = vpack.c.bf16 %v2387, %v2386
        %v2419 = vpack.c.bf16 %v2389, %v2388
        %v2420 = vpack.c.bf16 %v2391, %v2390
        %v2421 = vpack.c.bf16 %v2393, %v2392
        %v2422 = vpack.c.bf16 %v2395, %v2394
        %v2423 = vpack.c.bf16 %v2397, %v2396
        %v2424 = vpack.c.bf16 %v2399, %v2398
        %v2425 = vpack.c.bf16 %v2401, %v2400
        %v2426 = vpack.c.bf16 %v2403, %v2402
        %v2427 = vpack.c.bf16 %v2405, %v2404
        %v2428 = vpack.c.bf16 %v2407, %v2406
        %v2429 = vpack.c.bf16 %v2409, %v2408
        %v2430 = vpack.c.bf16 %v2411, %v2410
        %v2431 = vpack.c.bf16 %v2413, %v2412
        %v2432 = vpack.c.bf16 %v2415, %v2414
        %v2433 = vpack.c.bf16 %v2417, %v2416
        %v2434 = vld [vmem:[#allocation7] sm:$0xf]
        %v2435 = vld [vmem:[#allocation7 + $0x4] sm:$0xf]
        %v2436 = vld [vmem:[#allocation7 + $0x8] sm:$0xf]
        %v2437 = vld [vmem:[#allocation7 + $0xc] sm:$0xf]
        %v2438 = vld [vmem:[#allocation7 + $0x10] sm:$0xf]
        %v2439 = vld [vmem:[#allocation7 + $0x14] sm:$0xf]
        %v2440 = vld [vmem:[#allocation7 + $0x18] sm:$0xf]
        %v2441 = vld [vmem:[#allocation7 + $0x1c] sm:$0xf]
        %v2442 = vld [vmem:[#allocation7 + $0x20] sm:$0xf]
        %v2443 = vld [vmem:[#allocation7 + $0x24] sm:$0xf]
        %v2444 = vld [vmem:[#allocation7 + $0x28] sm:$0xf]
        %v2445 = vld [vmem:[#allocation7 + $0x2c] sm:$0xf]
        %v2446 = vld [vmem:[#allocation7 + $0x30] sm:$0xf]
        %v2447 = vld [vmem:[#allocation7 + $0x34] sm:$0xf]
        %v2448 = vld [vmem:[#allocation7 + $0x38] sm:$0xf]
        %v2449 = vld [vmem:[#allocation7 + $0x3c] sm:$0xf]
        %v2450 = vld [vmem:[%s4] sm:$0x1]
        %v2452 = vlaneseq
        %v2453 = vshrl.u32 %v2452, 7
        %v2454 = vsub.s32 0, %v2453
        %v2455 = vrot.slane %v2450, %v2454
        %v2473 = vunpack.c.l.b16 %v2434
        %v2474 = vunpack.c.l.b16 %v2435
        %v2475 = vunpack.c.l.b16 %v2436
        %v2476 = vunpack.c.l.b16 %v2437
        %v2477 = vunpack.c.l.b16 %v2438
        %v2478 = vunpack.c.l.b16 %v2439
        %v2479 = vunpack.c.l.b16 %v2440
        %v2480 = vunpack.c.l.b16 %v2441
        %v2481 = vunpack.c.l.b16 %v2442
        %v2482 = vunpack.c.l.b16 %v2443
        %v2483 = vunpack.c.l.b16 %v2444
        %v2484 = vunpack.c.l.b16 %v2445
        %v2485 = vunpack.c.l.b16 %v2446
        %v2486 = vunpack.c.l.b16 %v2447
        %v2487 = vunpack.c.l.b16 %v2448
        %v2488 = vunpack.c.l.b16 %v2449
        %v2489 = vpack.c.b16 %v2474, %v2473
        %v2490 = vpack.c.b16 %v2476, %v2475
        %v2491 = vpack.c.b16 %v2478, %v2477
        %v2492 = vpack.c.b16 %v2480, %v2479
        %v2493 = vpack.c.b16 %v2482, %v2481
        %v2494 = vpack.c.b16 %v2484, %v2483
        %v2495 = vpack.c.b16 %v2486, %v2485
        %v2496 = vpack.c.b16 %v2488, %v2487
        %2505 = vmatprep.subr.bf16.mxu0 0
        %2506 = vmatpush1.bf16.msra.mxu0 %v2489
        %2507 = vmatprep.subr.bf16.mxu0 0
        %2508 = vmatpush1.bf16.msra.mxu0 %v2490
        %2509 = vmatprep.subr.bf16.mxu0 0
        %2510 = vmatpush1.bf16.msra.mxu0 %v2491
        %2511 = vmatprep.subr.bf16.mxu0 0
        %2512 = vmatpush1.bf16.msra.mxu0 %v2492
        %2513 = vmatprep.subr.bf16.mxu0 0
        %2514 = vmatpush1.bf16.msra.mxu0 %v2493
        %2515 = vmatprep.subr.bf16.mxu0 0
        %2516 = vmatpush1.bf16.msra.mxu0 %v2494
        %2517 = vmatprep.subr.bf16.mxu0 0
        %2518 = vmatpush1.bf16.msra.mxu0 %v2495
        %2519 = vmatprep.subr.bf16.mxu0 0
        %2520 = vmatpush1.bf16.msra.mxu0 %v2496
        %2521 = vmatprep.subr.bf16.mxu0 0
        %2522 = vmatpush1.bf16.msra.mxu0 0
        %2523 = vmatprep.subr.bf16.mxu0 0
        %2524 = vmatpush1.bf16.msra.mxu0 0
        %2525 = vmatprep.subr.bf16.mxu0 0
        %2526 = vmatpush1.bf16.msra.mxu0 0
        %2527 = vmatprep.subr.bf16.mxu0 0
        %2528 = vmatpush1.bf16.msra.mxu0 0
        %2529 = vmatprep.subr.bf16.mxu0 0
        %2530 = vmatpush1.bf16.msra.mxu0 0
        %2531 = vmatprep.subr.bf16.mxu0 0
        %2532 = vmatpush1.bf16.msra.mxu0 0
        %2533 = vmatprep.subr.bf16.mxu0 0
        %2534 = vmatpush1.bf16.msra.mxu0 0
        %2535 = vmatprep.subr.bf16.mxu0 0
        %2536 = vmatpush1.bf16.msra.mxu0 0
        %2537 = vmatprep.mubr.bf16.mxu0 0
        %2538 = vmatmul.mubr.bf16.gmra.mrb[0].mxu0 %v2418
        %v2539 = vpop.f32.mrb[0].mxu0
        %v2540 = vadd.f32 %v2455, %v2539
        %v2541 = vpop.f32.mrb[0].mxu0
        %v2542 = vpop.f32.mrb[0].mxu0
        %v2543 = vadd.f32 %v2455, %v2542
        %v2544 = vpop.f32.mrb[0].mxu0
        %2545 = vmatprep.mubr.bf16.mxu0 0
        %2546 = vmatmul.mubr.bf16.gmra.mrb[0].mxu0 %v2419
        %v2547 = vpop.f32.mrb[0].mxu0
        %v2548 = vadd.f32 %v2455, %v2547
        %v2549 = vpop.f32.mrb[0].mxu0
        %v2550 = vpop.f32.mrb[0].mxu0
        %v2551 = vadd.f32 %v2455, %v2550
        %v2552 = vpop.f32.mrb[0].mxu0
        %2553 = vmatprep.mubr.bf16.mxu0 0
        %2554 = vmatmul.mubr.bf16.gmra.mrb[0].mxu0 %v2420
        %v2555 = vpop.f32.mrb[0].mxu0
        %v2556 = vadd.f32 %v2455, %v2555
        %v2557 = vpop.f32.mrb[0].mxu0
        %v2558 = vpop.f32.mrb[0].mxu0
        %v2559 = vadd.f32 %v2455, %v2558
        %v2560 = vpop.f32.mrb[0].mxu0
        %2561 = vmatprep.mubr.bf16.mxu0 0
        %2562 = vmatmul.mubr.bf16.gmra.mrb[0].mxu0 %v2421
        %v2563 = vpop.f32.mrb[0].mxu0
        %v2564 = vadd.f32 %v2455, %v2563
        %v2565 = vpop.f32.mrb[0].mxu0
        %v2566 = vpop.f32.mrb[0].mxu0
        %v2567 = vadd.f32 %v2455, %v2566
        %v2568 = vpop.f32.mrb[0].mxu0
        %2569 = vmatprep.mubr.bf16.mxu0 0
        %2570 = vmatmul.mubr.bf16.gmra.mrb[0].mxu0 %v2422
        %v2571 = vpop.f32.mrb[0].mxu0
        %v2572 = vadd.f32 %v2455, %v2571
        %v2573 = vpop.f32.mrb[0].mxu0
        %v2574 = vpop.f32.mrb[0].mxu0
        %v2575 = vadd.f32 %v2455, %v2574
        %v2576 = vpop.f32.mrb[0].mxu0
        %2577 = vmatprep.mubr.bf16.mxu0 0
        %2578 = vmatmul.mubr.bf16.gmra.mrb[0].mxu0 %v2423
        %v2579 = vpop.f32.mrb[0].mxu0
        %v2580 = vadd.f32 %v2455, %v2579
        %v2581 = vpop.f32.mrb[0].mxu0
        %v2582 = vpop.f32.mrb[0].mxu0
        %v2583 = vadd.f32 %v2455, %v2582
        %v2584 = vpop.f32.mrb[0].mxu0
        %2585 = vmatprep.mubr.bf16.mxu0 0
        %2586 = vmatmul.mubr.bf16.gmra.mrb[0].mxu0 %v2424
        %v2587 = vpop.f32.mrb[0].mxu0
        %v2588 = vadd.f32 %v2455, %v2587
        %v2589 = vpop.f32.mrb[0].mxu0
        %v2590 = vpop.f32.mrb[0].mxu0
        %v2591 = vadd.f32 %v2455, %v2590
        %v2592 = vpop.f32.mrb[0].mxu0
        %2593 = vmatprep.mubr.bf16.mxu0 0
        %2594 = vmatmul.mubr.bf16.gmra.mrb[0].mxu0 %v2425
        %v2595 = vpop.f32.mrb[0].mxu0
        %v2596 = vadd.f32 %v2455, %v2595
        %v2597 = vpop.f32.mrb[0].mxu0
        %v2598 = vpop.f32.mrb[0].mxu0
        %v2599 = vadd.f32 %v2455, %v2598
        %v2600 = vpop.f32.mrb[0].mxu0
        %2601 = vmatprep.mubr.bf16.mxu0 0
        %2602 = vmatmul.mubr.bf16.gmra.mrb[0].mxu0 %v2426
        %v2603 = vpop.f32.mrb[0].mxu0
        %v2604 = vadd.f32 %v2455, %v2603
        %v2605 = vpop.f32.mrb[0].mxu0
        %v2606 = vpop.f32.mrb[0].mxu0
        %v2607 = vadd.f32 %v2455, %v2606
        %v2608 = vpop.f32.mrb[0].mxu0
        %2609 = vmatprep.mubr.bf16.mxu0 0
        %2610 = vmatmul.mubr.bf16.gmra.mrb[0].mxu0 %v2427
        %v2611 = vpop.f32.mrb[0].mxu0
        %v2612 = vadd.f32 %v2455, %v2611
        %v2613 = vpop.f32.mrb[0].mxu0
        %v2614 = vpop.f32.mrb[0].mxu0
        %v2615 = vadd.f32 %v2455, %v2614
        %v2616 = vpop.f32.mrb[0].mxu0
        %2617 = vmatprep.mubr.bf16.mxu0 0
        %2618 = vmatmul.mubr.bf16.gmra.mrb[0].mxu0 %v2428
        %v2619 = vpop.f32.mrb[0].mxu0
        %v2620 = vadd.f32 %v2455, %v2619
        %v2621 = vpop.f32.mrb[0].mxu0
        %v2622 = vpop.f32.mrb[0].mxu0
        %v2623 = vadd.f32 %v2455, %v2622
        %v2624 = vpop.f32.mrb[0].mxu0
        %2625 = vmatprep.mubr.bf16.mxu0 0
        %2626 = vmatmul.mubr.bf16.gmra.mrb[0].mxu0 %v2429
        %v2627 = vpop.f32.mrb[0].mxu0
        %v2628 = vadd.f32 %v2455, %v2627
        %v2629 = vpop.f32.mrb[0].mxu0
        %v2630 = vpop.f32.mrb[0].mxu0
        %v2631 = vadd.f32 %v2455, %v2630
        %v2632 = vpop.f32.mrb[0].mxu0
        %2633 = vmatprep.mubr.bf16.mxu0 0
        %2634 = vmatmul.mubr.bf16.gmra.mrb[0].mxu0 %v2430
        %v2635 = vpop.f32.mrb[0].mxu0
        %v2636 = vadd.f32 %v2455, %v2635
        %v2637 = vpop.f32.mrb[0].mxu0
        %v2638 = vpop.f32.mrb[0].mxu0
        %v2639 = vadd.f32 %v2455, %v2638
        %v2640 = vpop.f32.mrb[0].mxu0
        %2641 = vmatprep.mubr.bf16.mxu0 0
        %2642 = vmatmul.mubr.bf16.gmra.mrb[0].mxu0 %v2431
        %v2643 = vpop.f32.mrb[0].mxu0
        %v2644 = vadd.f32 %v2455, %v2643
        %v2645 = vpop.f32.mrb[0].mxu0
        %v2646 = vpop.f32.mrb[0].mxu0
        %v2647 = vadd.f32 %v2455, %v2646
        %v2648 = vpop.f32.mrb[0].mxu0
        %2649 = vmatprep.mubr.bf16.mxu0 0
        %2650 = vmatmul.mubr.bf16.gmra.mrb[0].mxu0 %v2432
        %v2651 = vpop.f32.mrb[0].mxu0
        %v2652 = vadd.f32 %v2455, %v2651
        %v2653 = vpop.f32.mrb[0].mxu0
        %v2654 = vpop.f32.mrb[0].mxu0
        %v2655 = vadd.f32 %v2455, %v2654
        %v2656 = vpop.f32.mrb[0].mxu0
        %2657 = vmatprep.mubr.bf16.mxu0 0
        %2658 = vmatmul.mubr.bf16.gmra.mrb[0].mxu0 %v2433
        %v2659 = vpop.f32.mrb[0].mxu0
        %v2660 = vadd.f32 %v2455, %v2659
        %v2661 = vpop.f32.mrb[0].mxu0
        %v2662 = vpop.f32.mrb[0].mxu0
        %v2663 = vadd.f32 %v2455, %v2662
        %v2664 = vpop.f32.mrb[0].mxu0
        %2665 = vdwg.mxu0
        %v2666 = vmax.f32 %v2540, 0.0
        %v2667 = vmax.f32 %v2543, 0.0
        %v2668 = vmax.f32 %v2548, 0.0
        %v2669 = vmax.f32 %v2551, 0.0
        %v2670 = vmax.f32 %v2556, 0.0
        %v2671 = vmax.f32 %v2559, 0.0
        %v2672 = vmax.f32 %v2564, 0.0
        %v2673 = vmax.f32 %v2567, 0.0
        %v2674 = vmax.f32 %v2572, 0.0
        %v2675 = vmax.f32 %v2575, 0.0
        %v2676 = vmax.f32 %v2580, 0.0
        %v2677 = vmax.f32 %v2583, 0.0
        %v2678 = vmax.f32 %v2588, 0.0
        %v2679 = vmax.f32 %v2591, 0.0
        %v2680 = vmax.f32 %v2596, 0.0
        %v2681 = vmax.f32 %v2599, 0.0
        %v2682 = vmax.f32 %v2604, 0.0
        %v2683 = vmax.f32 %v2607, 0.0
        %v2684 = vmax.f32 %v2612, 0.0
        %v2685 = vmax.f32 %v2615, 0.0
        %v2686 = vmax.f32 %v2620, 0.0
        %v2687 = vmax.f32 %v2623, 0.0
        %v2688 = vmax.f32 %v2628, 0.0
        %v2689 = vmax.f32 %v2631, 0.0
        %v2690 = vmax.f32 %v2636, 0.0
        %v2691 = vmax.f32 %v2639, 0.0
        %v2692 = vmax.f32 %v2644, 0.0
        %v2693 = vmax.f32 %v2647, 0.0
        %v2694 = vmax.f32 %v2652, 0.0
        %v2695 = vmax.f32 %v2655, 0.0
        %v2696 = vmax.f32 %v2660, 0.0
        %v2697 = vmax.f32 %v2663, 0.0
        %v2698 = vpack.c.bf16 %v2667, %v2666
        %v2699 = vpack.c.bf16 %v2669, %v2668
        %v2700 = vpack.c.bf16 %v2671, %v2670
        %v2701 = vpack.c.bf16 %v2673, %v2672
        %v2702 = vpack.c.bf16 %v2675, %v2674
        %v2703 = vpack.c.bf16 %v2677, %v2676
        %v2704 = vpack.c.bf16 %v2679, %v2678
        %v2705 = vpack.c.bf16 %v2681, %v2680
        %v2706 = vpack.c.bf16 %v2683, %v2682
        %v2707 = vpack.c.bf16 %v2685, %v2684
        %v2708 = vpack.c.bf16 %v2687, %v2686
        %v2709 = vpack.c.bf16 %v2689, %v2688
        %v2710 = vpack.c.bf16 %v2691, %v2690
        %v2711 = vpack.c.bf16 %v2693, %v2692
        %v2712 = vpack.c.bf16 %v2695, %v2694
        %v2713 = vpack.c.bf16 %v2697, %v2696
        %v2714 = vld [vmem:[#allocation8] sm:$0xf]
        %v2715 = vld [vmem:[#allocation8 + $0x4] sm:$0xf]
        %v2716 = vld [vmem:[#allocation8 + $0x8] sm:$0xf]
        %v2717 = vld [vmem:[#allocation8 + $0xc] sm:$0xf]
        %v2718 = vld [vmem:[#allocation8 + $0x10] sm:$0xf]
        %v2719 = vld [vmem:[#allocation8 + $0x14] sm:$0xf]
        %v2720 = vld [vmem:[#allocation8 + $0x18] sm:$0xf]
        %v2721 = vld [vmem:[#allocation8 + $0x1c] sm:$0xf]
        %v2722 = vld [vmem:[#allocation8 + $0x20] sm:$0xf]
        %v2723 = vld [vmem:[#allocation8 + $0x24] sm:$0xf]
        %v2724 = vld [vmem:[#allocation8 + $0x28] sm:$0xf]
        %v2725 = vld [vmem:[#allocation8 + $0x2c] sm:$0xf]
        %v2726 = vld [vmem:[#allocation8 + $0x30] sm:$0xf]
        %v2727 = vld [vmem:[#allocation8 + $0x34] sm:$0xf]
        %v2728 = vld [vmem:[#allocation8 + $0x38] sm:$0xf]
        %v2729 = vld [vmem:[#allocation8 + $0x3c] sm:$0xf]
        %v2730 = vld [vmem:[%s6] sm:$0x1]
        %v2732 = vlaneseq
        %v2733 = vshrl.u32 %v2732, 7
        %v2734 = vsub.s32 0, %v2733
        %v2735 = vrot.slane %v2730, %v2734
        %v2753 = vunpack.c.l.b16 %v2714
        %v2754 = vunpack.c.l.b16 %v2715
        %v2755 = vunpack.c.l.b16 %v2716
        %v2756 = vunpack.c.l.b16 %v2717
        %v2757 = vunpack.c.l.b16 %v2718
        %v2758 = vunpack.c.l.b16 %v2719
        %v2759 = vunpack.c.l.b16 %v2720
        %v2760 = vunpack.c.l.b16 %v2721
        %v2761 = vunpack.c.l.b16 %v2722
        %v2762 = vunpack.c.l.b16 %v2723
        %v2763 = vunpack.c.l.b16 %v2724
        %v2764 = vunpack.c.l.b16 %v2725
        %v2765 = vunpack.c.l.b16 %v2726
        %v2766 = vunpack.c.l.b16 %v2727
        %v2767 = vunpack.c.l.b16 %v2728
        %v2768 = vunpack.c.l.b16 %v2729
        %v2769 = vpack.c.b16 %v2754, %v2753
        %v2770 = vpack.c.b16 %v2756, %v2755
        %v2771 = vpack.c.b16 %v2758, %v2757
        %v2772 = vpack.c.b16 %v2760, %v2759
        %v2773 = vpack.c.b16 %v2762, %v2761
        %v2774 = vpack.c.b16 %v2764, %v2763
        %v2775 = vpack.c.b16 %v2766, %v2765
        %v2776 = vpack.c.b16 %v2768, %v2767
        %2785 = vmatprep.subr.bf16.mxu0 0
        %2786 = vmatpush1.bf16.msra.mxu0 %v2769
        %2787 = vmatprep.subr.bf16.mxu0 0
        %2788 = vmatpush1.bf16.msra.mxu0 %v2770
        %2789 = vmatprep.subr.bf16.mxu0 0
        %2790 = vmatpush1.bf16.msra.mxu0 %v2771
        %2791 = vmatprep.subr.bf16.mxu0 0
        %2792 = vmatpush1.bf16.msra.mxu0 %v2772
        %2793 = vmatprep.subr.bf16.mxu0 0
        %2794 = vmatpush1.bf16.msra.mxu0 %v2773
        %2795 = vmatprep.subr.bf16.mxu0 0
        %2796 = vmatpush1.bf16.msra.mxu0 %v2774
        %2797 = vmatprep.subr.bf16.mxu0 0
        %2798 = vmatpush1.bf16.msra.mxu0 %v2775
        %2799 = vmatprep.subr.bf16.mxu0 0
        %2800 = vmatpush1.bf16.msra.mxu0 %v2776
        %2801 = vmatprep.subr.bf16.mxu0 0
        %2802 = vmatpush1.bf16.msra.mxu0 0
        %2803 = vmatprep.subr.bf16.mxu0 0
        %2804 = vmatpush1.bf16.msra.mxu0 0
        %2805 = vmatprep.subr.bf16.mxu0 0
        %2806 = vmatpush1.bf16.msra.mxu0 0
        %2807 = vmatprep.subr.bf16.mxu0 0
        %2808 = vmatpush1.bf16.msra.mxu0 0
        %2809 = vmatprep.subr.bf16.mxu0 0
        %2810 = vmatpush1.bf16.msra.mxu0 0
        %2811 = vmatprep.subr.bf16.mxu0 0
        %2812 = vmatpush1.bf16.msra.mxu0 0
        %2813 = vmatprep.subr.bf16.mxu0 0
        %2814 = vmatpush1.bf16.msra.mxu0 0
        %2815 = vmatprep.subr.bf16.mxu0 0
        %2816 = vmatpush1.bf16.msra.mxu0 0
        %2817 = vmatprep.mubr.bf16.mxu0 0
        %2818 = vmatmul.mubr.bf16.gmra.mrb[0].mxu0 %v2698
        %v2819 = vpop.f32.mrb[0].mxu0
        %v2820 = vadd.f32 %v2735, %v2819
        %v2821 = vpop.f32.mrb[0].mxu0
        %v2822 = vpop.f32.mrb[0].mxu0
        %v2823 = vadd.f32 %v2735, %v2822
        %v2824 = vpop.f32.mrb[0].mxu0
        %2825 = vmatprep.mubr.bf16.mxu0 0
        %2826 = vmatmul.mubr.bf16.gmra.mrb[0].mxu0 %v2699
        %v2827 = vpop.f32.mrb[0].mxu0
        %v2828 = vadd.f32 %v2735, %v2827
        %v2829 = vpop.f32.mrb[0].mxu0
        %v2830 = vpop.f32.mrb[0].mxu0
        %v2831 = vadd.f32 %v2735, %v2830
        %v2832 = vpop.f32.mrb[0].mxu0
        %2833 = vmatprep.mubr.bf16.mxu0 0
        %2834 = vmatmul.mubr.bf16.gmra.mrb[0].mxu0 %v2700
        %v2835 = vpop.f32.mrb[0].mxu0
        %v2836 = vadd.f32 %v2735, %v2835
        %v2837 = vpop.f32.mrb[0].mxu0
        %v2838 = vpop.f32.mrb[0].mxu0
        %v2839 = vadd.f32 %v2735, %v2838
        %v2840 = vpop.f32.mrb[0].mxu0
        %2841 = vmatprep.mubr.bf16.mxu0 0
        %2842 = vmatmul.mubr.bf16.gmra.mrb[0].mxu0 %v2701
        %v2843 = vpop.f32.mrb[0].mxu0
        %v2844 = vadd.f32 %v2735, %v2843
        %v2845 = vpop.f32.mrb[0].mxu0
        %v2846 = vpop.f32.mrb[0].mxu0
        %v2847 = vadd.f32 %v2735, %v2846
        %v2848 = vpop.f32.mrb[0].mxu0
        %2849 = vmatprep.mubr.bf16.mxu0 0
        %2850 = vmatmul.mubr.bf16.gmra.mrb[0].mxu0 %v2702
        %v2851 = vpop.f32.mrb[0].mxu0
        %v2852 = vadd.f32 %v2735, %v2851
        %v2853 = vpop.f32.mrb[0].mxu0
        %v2854 = vpop.f32.mrb[0].mxu0
        %v2855 = vadd.f32 %v2735, %v2854
        %v2856 = vpop.f32.mrb[0].mxu0
        %2857 = vmatprep.mubr.bf16.mxu0 0
        %2858 = vmatmul.mubr.bf16.gmra.mrb[0].mxu0 %v2703
        %v2859 = vpop.f32.mrb[0].mxu0
        %v2860 = vadd.f32 %v2735, %v2859
        %v2861 = vpop.f32.mrb[0].mxu0
        %v2862 = vpop.f32.mrb[0].mxu0
        %v2863 = vadd.f32 %v2735, %v2862
        %v2864 = vpop.f32.mrb[0].mxu0
        %2865 = vmatprep.mubr.bf16.mxu0 0
        %2866 = vmatmul.mubr.bf16.gmra.mrb[0].mxu0 %v2704
        %v2867 = vpop.f32.mrb[0].mxu0
        %v2868 = vadd.f32 %v2735, %v2867
        %v2869 = vpop.f32.mrb[0].mxu0
        %v2870 = vpop.f32.mrb[0].mxu0
        %v2871 = vadd.f32 %v2735, %v2870
        %v2872 = vpop.f32.mrb[0].mxu0
        %2873 = vmatprep.mubr.bf16.mxu0 0
        %2874 = vmatmul.mubr.bf16.gmra.mrb[0].mxu0 %v2705
        %v2875 = vpop.f32.mrb[0].mxu0
        %v2876 = vadd.f32 %v2735, %v2875
        %v2877 = vpop.f32.mrb[0].mxu0
        %v2878 = vpop.f32.mrb[0].mxu0
        %v2879 = vadd.f32 %v2735, %v2878
        %v2880 = vpop.f32.mrb[0].mxu0
        %2881 = vmatprep.mubr.bf16.mxu0 0
        %2882 = vmatmul.mubr.bf16.gmra.mrb[0].mxu0 %v2706
        %v2883 = vpop.f32.mrb[0].mxu0
        %v2884 = vadd.f32 %v2735, %v2883
        %v2885 = vpop.f32.mrb[0].mxu0
        %v2886 = vpop.f32.mrb[0].mxu0
        %v2887 = vadd.f32 %v2735, %v2886
        %v2888 = vpop.f32.mrb[0].mxu0
        %2889 = vmatprep.mubr.bf16.mxu0 0
        %2890 = vmatmul.mubr.bf16.gmra.mrb[0].mxu0 %v2707
        %v2891 = vpop.f32.mrb[0].mxu0
        %v2892 = vadd.f32 %v2735, %v2891
        %v2893 = vpop.f32.mrb[0].mxu0
        %v2894 = vpop.f32.mrb[0].mxu0
        %v2895 = vadd.f32 %v2735, %v2894
        %v2896 = vpop.f32.mrb[0].mxu0
        %2897 = vmatprep.mubr.bf16.mxu0 0
        %2898 = vmatmul.mubr.bf16.gmra.mrb[0].mxu0 %v2708
        %v2899 = vpop.f32.mrb[0].mxu0
        %v2900 = vadd.f32 %v2735, %v2899
        %v2901 = vpop.f32.mrb[0].mxu0
        %v2902 = vpop.f32.mrb[0].mxu0
        %v2903 = vadd.f32 %v2735, %v2902
        %v2904 = vpop.f32.mrb[0].mxu0
        %2905 = vmatprep.mubr.bf16.mxu0 0
        %2906 = vmatmul.mubr.bf16.gmra.mrb[0].mxu0 %v2709
        %v2907 = vpop.f32.mrb[0].mxu0
        %v2908 = vadd.f32 %v2735, %v2907
        %v2909 = vpop.f32.mrb[0].mxu0
        %v2910 = vpop.f32.mrb[0].mxu0
        %v2911 = vadd.f32 %v2735, %v2910
        %v2912 = vpop.f32.mrb[0].mxu0
        %2913 = vmatprep.mubr.bf16.mxu0 0
        %2914 = vmatmul.mubr.bf16.gmra.mrb[0].mxu0 %v2710
        %v2915 = vpop.f32.mrb[0].mxu0
        %v2916 = vadd.f32 %v2735, %v2915
        %v2917 = vpop.f32.mrb[0].mxu0
        %v2918 = vpop.f32.mrb[0].mxu0
        %v2919 = vadd.f32 %v2735, %v2918
        %v2920 = vpop.f32.mrb[0].mxu0
        %2921 = vmatprep.mubr.bf16.mxu0 0
        %2922 = vmatmul.mubr.bf16.gmra.mrb[0].mxu0 %v2711
        %v2923 = vpop.f32.mrb[0].mxu0
        %v2924 = vadd.f32 %v2735, %v2923
        %v2925 = vpop.f32.mrb[0].mxu0
        %v2926 = vpop.f32.mrb[0].mxu0
        %v2927 = vadd.f32 %v2735, %v2926
        %v2928 = vpop.f32.mrb[0].mxu0
        %2929 = vmatprep.mubr.bf16.mxu0 0
        %2930 = vmatmul.mubr.bf16.gmra.mrb[0].mxu0 %v2712
        %v2931 = vpop.f32.mrb[0].mxu0
        %v2932 = vadd.f32 %v2735, %v2931
        %v2933 = vpop.f32.mrb[0].mxu0
        %v2934 = vpop.f32.mrb[0].mxu0
        %v2935 = vadd.f32 %v2735, %v2934
        %v2936 = vpop.f32.mrb[0].mxu0
        %2937 = vmatprep.mubr.bf16.mxu0 0
        %2938 = vmatmul.mubr.bf16.gmra.mrb[0].mxu0 %v2713
        %v2939 = vpop.f32.mrb[0].mxu0
        %v2940 = vadd.f32 %v2735, %v2939
        %v2941 = vpop.f32.mrb[0].mxu0
        %v2942 = vpop.f32.mrb[0].mxu0
        %v2943 = vadd.f32 %v2735, %v2942
        %v2944 = vpop.f32.mrb[0].mxu0
        %2945 = vdwg.mxu0
        %v2946 = vmax.f32 %v2820, 0.0
        %v2947 = vmax.f32 %v2823, 0.0
        %v2948 = vmax.f32 %v2828, 0.0
        %v2949 = vmax.f32 %v2831, 0.0
        %v2950 = vmax.f32 %v2836, 0.0
        %v2951 = vmax.f32 %v2839, 0.0
        %v2952 = vmax.f32 %v2844, 0.0
        %v2953 = vmax.f32 %v2847, 0.0
        %v2954 = vmax.f32 %v2852, 0.0
        %v2955 = vmax.f32 %v2855, 0.0
        %v2956 = vmax.f32 %v2860, 0.0
        %v2957 = vmax.f32 %v2863, 0.0
        %v2958 = vmax.f32 %v2868, 0.0
        %v2959 = vmax.f32 %v2871, 0.0
        %v2960 = vmax.f32 %v2876, 0.0
        %v2961 = vmax.f32 %v2879, 0.0
        %v2962 = vmax.f32 %v2884, 0.0
        %v2963 = vmax.f32 %v2887, 0.0
        %v2964 = vmax.f32 %v2892, 0.0
        %v2965 = vmax.f32 %v2895, 0.0
        %v2966 = vmax.f32 %v2900, 0.0
        %v2967 = vmax.f32 %v2903, 0.0
        %v2968 = vmax.f32 %v2908, 0.0
        %v2969 = vmax.f32 %v2911, 0.0
        %v2970 = vmax.f32 %v2916, 0.0
        %v2971 = vmax.f32 %v2919, 0.0
        %v2972 = vmax.f32 %v2924, 0.0
        %v2973 = vmax.f32 %v2927, 0.0
        %v2974 = vmax.f32 %v2932, 0.0
        %v2975 = vmax.f32 %v2935, 0.0
        %v2976 = vmax.f32 %v2940, 0.0
        %v2977 = vmax.f32 %v2943, 0.0
        %v2978 = vpack.c.bf16 %v2947, %v2946
        %v2979 = vpack.c.bf16 %v2949, %v2948
        %v2980 = vpack.c.bf16 %v2951, %v2950
        %v2981 = vpack.c.bf16 %v2953, %v2952
        %v2982 = vpack.c.bf16 %v2955, %v2954
        %v2983 = vpack.c.bf16 %v2957, %v2956
        %v2984 = vpack.c.bf16 %v2959, %v2958
        %v2985 = vpack.c.bf16 %v2961, %v2960
        %v2986 = vpack.c.bf16 %v2963, %v2962
        %v2987 = vpack.c.bf16 %v2965, %v2964
        %v2988 = vpack.c.bf16 %v2967, %v2966
        %v2989 = vpack.c.bf16 %v2969, %v2968
        %v2990 = vpack.c.bf16 %v2971, %v2970
        %v2991 = vpack.c.bf16 %v2973, %v2972
        %v2992 = vpack.c.bf16 %v2975, %v2974
        %v2993 = vpack.c.bf16 %v2977, %v2976
        %v2994 = vld [vmem:[#allocation10] sm:$0xf]
        %v2995 = vld [vmem:[#allocation10 + $0x4] sm:$0xf]
        %v2996 = vld [vmem:[#allocation10 + $0x8] sm:$0xf]
        %v2997 = vld [vmem:[#allocation10 + $0xc] sm:$0xf]
        %v2998 = vld [vmem:[#allocation10 + $0x10] sm:$0xf]
        %v2999 = vld [vmem:[#allocation10 + $0x14] sm:$0xf]
        %v3000 = vld [vmem:[#allocation10 + $0x18] sm:$0xf]
        %v3001 = vld [vmem:[#allocation10 + $0x1c] sm:$0xf]
        %v3002 = vld [vmem:[#allocation10 + $0x20] sm:$0xf]
        %v3003 = vld [vmem:[#allocation10 + $0x24] sm:$0xf]
        %v3004 = vld [vmem:[#allocation10 + $0x28] sm:$0xf]
        %v3005 = vld [vmem:[#allocation10 + $0x2c] sm:$0xf]
        %v3006 = vld [vmem:[#allocation10 + $0x30] sm:$0xf]
        %v3007 = vld [vmem:[#allocation10 + $0x34] sm:$0xf]
        %v3008 = vld [vmem:[#allocation10 + $0x38] sm:$0xf]
        %v3009 = vld [vmem:[#allocation10 + $0x3c] sm:$0xf]
        %v3010 = vld [vmem:[%s8] sm:$0x1]
        %v3012 = vlaneseq
        %v3013 = vshrl.u32 %v3012, 7
        %v3014 = vsub.s32 0, %v3013
        %v3015 = vrot.slane %v3010, %v3014
        %v3033 = vunpack.c.l.b16 %v2994
        %v3034 = vunpack.c.l.b16 %v2995
        %v3035 = vunpack.c.l.b16 %v2996
        %v3036 = vunpack.c.l.b16 %v2997
        %v3037 = vunpack.c.l.b16 %v2998
        %v3038 = vunpack.c.l.b16 %v2999
        %v3039 = vunpack.c.l.b16 %v3000
        %v3040 = vunpack.c.l.b16 %v3001
        %v3041 = vunpack.c.l.b16 %v3002
        %v3042 = vunpack.c.l.b16 %v3003
        %v3043 = vunpack.c.l.b16 %v3004
        %v3044 = vunpack.c.l.b16 %v3005
        %v3045 = vunpack.c.l.b16 %v3006
        %v3046 = vunpack.c.l.b16 %v3007
        %v3047 = vunpack.c.l.b16 %v3008
        %v3048 = vunpack.c.l.b16 %v3009
        %v3049 = vpack.c.b16 %v3034, %v3033
        %v3050 = vpack.c.b16 %v3036, %v3035
        %v3051 = vpack.c.b16 %v3038, %v3037
        %v3052 = vpack.c.b16 %v3040, %v3039
        %v3053 = vpack.c.b16 %v3042, %v3041
        %v3054 = vpack.c.b16 %v3044, %v3043
        %v3055 = vpack.c.b16 %v3046, %v3045
        %v3056 = vpack.c.b16 %v3048, %v3047
        %3065 = vmatprep.subr.bf16.mxu0 0
        %3066 = vmatpush1.bf16.msra.mxu0 %v3049
        %3067 = vmatprep.subr.bf16.mxu0 0
        %3068 = vmatpush1.bf16.msra.mxu0 %v3050
        %3069 = vmatprep.subr.bf16.mxu0 0
        %3070 = vmatpush1.bf16.msra.mxu0 %v3051
        %3071 = vmatprep.subr.bf16.mxu0 0
        %3072 = vmatpush1.bf16.msra.mxu0 %v3052
        %3073 = vmatprep.subr.bf16.mxu0 0
        %3074 = vmatpush1.bf16.msra.mxu0 %v3053
        %3075 = vmatprep.subr.bf16.mxu0 0
        %3076 = vmatpush1.bf16.msra.mxu0 %v3054
        %3077 = vmatprep.subr.bf16.mxu0 0
        %3078 = vmatpush1.bf16.msra.mxu0 %v3055
        %3079 = vmatprep.subr.bf16.mxu0 0
        %3080 = vmatpush1.bf16.msra.mxu0 %v3056
        %3081 = vmatprep.subr.bf16.mxu0 0
        %3082 = vmatpush1.bf16.msra.mxu0 0
        %3083 = vmatprep.subr.bf16.mxu0 0
        %3084 = vmatpush1.bf16.msra.mxu0 0
        %3085 = vmatprep.subr.bf16.mxu0 0
        %3086 = vmatpush1.bf16.msra.mxu0 0
        %3087 = vmatprep.subr.bf16.mxu0 0
        %3088 = vmatpush1.bf16.msra.mxu0 0
        %3089 = vmatprep.subr.bf16.mxu0 0
        %3090 = vmatpush1.bf16.msra.mxu0 0
        %3091 = vmatprep.subr.bf16.mxu0 0
        %3092 = vmatpush1.bf16.msra.mxu0 0
        %3093 = vmatprep.subr.bf16.mxu0 0
        %3094 = vmatpush1.bf16.msra.mxu0 0
        %3095 = vmatprep.subr.bf16.mxu0 0
        %3096 = vmatpush1.bf16.msra.mxu0 0
        %3097 = vmatprep.mubr.bf16.mxu0 0
        %3098 = vmatmul.mubr.bf16.gmra.mrb[0].mxu0 %v2978
        %v3099 = vpop.f32.mrb[0].mxu0
        %v3100 = vadd.f32 %v3015, %v3099
        %v3101 = vpop.f32.mrb[0].mxu0
        %v3102 = vpop.f32.mrb[0].mxu0
        %v3103 = vadd.f32 %v3015, %v3102
        %v3104 = vpop.f32.mrb[0].mxu0
        %3105 = vmatprep.mubr.bf16.mxu0 0
        %3106 = vmatmul.mubr.bf16.gmra.mrb[0].mxu0 %v2979
        %v3107 = vpop.f32.mrb[0].mxu0
        %v3108 = vadd.f32 %v3015, %v3107
        %v3109 = vpop.f32.mrb[0].mxu0
        %v3110 = vpop.f32.mrb[0].mxu0
        %v3111 = vadd.f32 %v3015, %v3110
        %v3112 = vpop.f32.mrb[0].mxu0
        %3113 = vmatprep.mubr.bf16.mxu0 0
        %3114 = vmatmul.mubr.bf16.gmra.mrb[0].mxu0 %v2980
        %v3115 = vpop.f32.mrb[0].mxu0
        %v3116 = vadd.f32 %v3015, %v3115
        %v3117 = vpop.f32.mrb[0].mxu0
        %v3118 = vpop.f32.mrb[0].mxu0
        %v3119 = vadd.f32 %v3015, %v3118
        %v3120 = vpop.f32.mrb[0].mxu0
        %3121 = vmatprep.mubr.bf16.mxu0 0
        %3122 = vmatmul.mubr.bf16.gmra.mrb[0].mxu0 %v2981
        %v3123 = vpop.f32.mrb[0].mxu0
        %v3124 = vadd.f32 %v3015, %v3123
        %v3125 = vpop.f32.mrb[0].mxu0
        %v3126 = vpop.f32.mrb[0].mxu0
        %v3127 = vadd.f32 %v3015, %v3126
        %v3128 = vpop.f32.mrb[0].mxu0
        %3129 = vmatprep.mubr.bf16.mxu0 0
        %3130 = vmatmul.mubr.bf16.gmra.mrb[0].mxu0 %v2982
        %v3131 = vpop.f32.mrb[0].mxu0
        %v3132 = vadd.f32 %v3015, %v3131
        %v3133 = vpop.f32.mrb[0].mxu0
        %v3134 = vpop.f32.mrb[0].mxu0
        %v3135 = vadd.f32 %v3015, %v3134
        %v3136 = vpop.f32.mrb[0].mxu0
        %3137 = vmatprep.mubr.bf16.mxu0 0
        %3138 = vmatmul.mubr.bf16.gmra.mrb[0].mxu0 %v2983
        %v3139 = vpop.f32.mrb[0].mxu0
        %v3140 = vadd.f32 %v3015, %v3139
        %v3141 = vpop.f32.mrb[0].mxu0
        %v3142 = vpop.f32.mrb[0].mxu0
        %v3143 = vadd.f32 %v3015, %v3142
        %v3144 = vpop.f32.mrb[0].mxu0
        %3145 = vmatprep.mubr.bf16.mxu0 0
        %3146 = vmatmul.mubr.bf16.gmra.mrb[0].mxu0 %v2984
        %v3147 = vpop.f32.mrb[0].mxu0
        %v3148 = vadd.f32 %v3015, %v3147
        %v3149 = vpop.f32.mrb[0].mxu0
        %v3150 = vpop.f32.mrb[0].mxu0
        %v3151 = vadd.f32 %v3015, %v3150
        %v3152 = vpop.f32.mrb[0].mxu0
        %3153 = vmatprep.mubr.bf16.mxu0 0
        %3154 = vmatmul.mubr.bf16.gmra.mrb[0].mxu0 %v2985
        %v3155 = vpop.f32.mrb[0].mxu0
        %v3156 = vadd.f32 %v3015, %v3155
        %v3157 = vpop.f32.mrb[0].mxu0
        %v3158 = vpop.f32.mrb[0].mxu0
        %v3159 = vadd.f32 %v3015, %v3158
        %v3160 = vpop.f32.mrb[0].mxu0
        %3161 = vmatprep.mubr.bf16.mxu0 0
        %3162 = vmatmul.mubr.bf16.gmra.mrb[0].mxu0 %v2986
        %v3163 = vpop.f32.mrb[0].mxu0
        %v3164 = vadd.f32 %v3015, %v3163
        %v3165 = vpop.f32.mrb[0].mxu0
        %v3166 = vpop.f32.mrb[0].mxu0
        %v3167 = vadd.f32 %v3015, %v3166
        %v3168 = vpop.f32.mrb[0].mxu0
        %3169 = vmatprep.mubr.bf16.mxu0 0
        %3170 = vmatmul.mubr.bf16.gmra.mrb[0].mxu0 %v2987
        %v3171 = vpop.f32.mrb[0].mxu0
        %v3172 = vadd.f32 %v3015, %v3171
        %v3173 = vpop.f32.mrb[0].mxu0
        %v3174 = vpop.f32.mrb[0].mxu0
        %v3175 = vadd.f32 %v3015, %v3174
        %v3176 = vpop.f32.mrb[0].mxu0
        %3177 = vmatprep.mubr.bf16.mxu0 0
        %3178 = vmatmul.mubr.bf16.gmra.mrb[0].mxu0 %v2988
        %v3179 = vpop.f32.mrb[0].mxu0
        %v3180 = vadd.f32 %v3015, %v3179
        %v3181 = vpop.f32.mrb[0].mxu0
        %v3182 = vpop.f32.mrb[0].mxu0
        %v3183 = vadd.f32 %v3015, %v3182
        %v3184 = vpop.f32.mrb[0].mxu0
        %3185 = vmatprep.mubr.bf16.mxu0 0
        %3186 = vmatmul.mubr.bf16.gmra.mrb[0].mxu0 %v2989
        %v3187 = vpop.f32.mrb[0].mxu0
        %v3188 = vadd.f32 %v3015, %v3187
        %v3189 = vpop.f32.mrb[0].mxu0
        %v3190 = vpop.f32.mrb[0].mxu0
        %v3191 = vadd.f32 %v3015, %v3190
        %v3192 = vpop.f32.mrb[0].mxu0
        %3193 = vmatprep.mubr.bf16.mxu0 0
        %3194 = vmatmul.mubr.bf16.gmra.mrb[0].mxu0 %v2990
        %v3195 = vpop.f32.mrb[0].mxu0
        %v3196 = vadd.f32 %v3015, %v3195
        %v3197 = vpop.f32.mrb[0].mxu0
        %v3198 = vpop.f32.mrb[0].mxu0
        %v3199 = vadd.f32 %v3015, %v3198
        %v3200 = vpop.f32.mrb[0].mxu0
        %3201 = vmatprep.mubr.bf16.mxu0 0
        %3202 = vmatmul.mubr.bf16.gmra.mrb[0].mxu0 %v2991
        %v3203 = vpop.f32.mrb[0].mxu0
        %v3204 = vadd.f32 %v3015, %v3203
        %v3205 = vpop.f32.mrb[0].mxu0
        %v3206 = vpop.f32.mrb[0].mxu0
        %v3207 = vadd.f32 %v3015, %v3206
        %v3208 = vpop.f32.mrb[0].mxu0
        %3209 = vmatprep.mubr.bf16.mxu0 0
        %3210 = vmatmul.mubr.bf16.gmra.mrb[0].mxu0 %v2992
        %v3211 = vpop.f32.mrb[0].mxu0
        %v3212 = vadd.f32 %v3015, %v3211
        %v3213 = vpop.f32.mrb[0].mxu0
        %v3214 = vpop.f32.mrb[0].mxu0
        %v3215 = vadd.f32 %v3015, %v3214
        %v3216 = vpop.f32.mrb[0].mxu0
        %3217 = vmatprep.mubr.bf16.mxu0 0
        %3218 = vmatmul.mubr.bf16.gmra.mrb[0].mxu0 %v2993
        %v3219 = vpop.f32.mrb[0].mxu0
        %v3220 = vadd.f32 %v3015, %v3219
        %v3221 = vpop.f32.mrb[0].mxu0
        %v3222 = vpop.f32.mrb[0].mxu0
        %v3223 = vadd.f32 %v3015, %v3222
        %v3224 = vpop.f32.mrb[0].mxu0
        %3225 = vdwg.mxu0
        %v3226 = vmax.f32 %v3100, 0.0
        %v3227 = vmax.f32 %v3103, 0.0
        %v3228 = vmax.f32 %v3108, 0.0
        %v3229 = vmax.f32 %v3111, 0.0
        %v3230 = vmax.f32 %v3116, 0.0
        %v3231 = vmax.f32 %v3119, 0.0
        %v3232 = vmax.f32 %v3124, 0.0
        %v3233 = vmax.f32 %v3127, 0.0
        %v3234 = vmax.f32 %v3132, 0.0
        %v3235 = vmax.f32 %v3135, 0.0
        %v3236 = vmax.f32 %v3140, 0.0
        %v3237 = vmax.f32 %v3143, 0.0
        %v3238 = vmax.f32 %v3148, 0.0
        %v3239 = vmax.f32 %v3151, 0.0
        %v3240 = vmax.f32 %v3156, 0.0
        %v3241 = vmax.f32 %v3159, 0.0
        %v3242 = vmax.f32 %v3164, 0.0
        %v3243 = vmax.f32 %v3167, 0.0
        %v3244 = vmax.f32 %v3172, 0.0
        %v3245 = vmax.f32 %v3175, 0.0
        %v3246 = vmax.f32 %v3180, 0.0
        %v3247 = vmax.f32 %v3183, 0.0
        %v3248 = vmax.f32 %v3188, 0.0
        %v3249 = vmax.f32 %v3191, 0.0
        %v3250 = vmax.f32 %v3196, 0.0
        %v3251 = vmax.f32 %v3199, 0.0
        %v3252 = vmax.f32 %v3204, 0.0
        %v3253 = vmax.f32 %v3207, 0.0
        %v3254 = vmax.f32 %v3212, 0.0
        %v3255 = vmax.f32 %v3215, 0.0
        %v3256 = vmax.f32 %v3220, 0.0
        %v3257 = vmax.f32 %v3223, 0.0
        %v3258 = vpack.c.bf16 %v3227, %v3226
        %v3259 = vpack.c.bf16 %v3229, %v3228
        %v3260 = vpack.c.bf16 %v3231, %v3230
        %v3261 = vpack.c.bf16 %v3233, %v3232
        %v3262 = vpack.c.bf16 %v3235, %v3234
        %v3263 = vpack.c.bf16 %v3237, %v3236
        %v3264 = vpack.c.bf16 %v3239, %v3238
        %v3265 = vpack.c.bf16 %v3241, %v3240
        %v3266 = vpack.c.bf16 %v3243, %v3242
        %v3267 = vpack.c.bf16 %v3245, %v3244
        %v3268 = vpack.c.bf16 %v3247, %v3246
        %v3269 = vpack.c.bf16 %v3249, %v3248
        %v3270 = vpack.c.bf16 %v3251, %v3250
        %v3271 = vpack.c.bf16 %v3253, %v3252
        %v3272 = vpack.c.bf16 %v3255, %v3254
        %v3273 = vpack.c.bf16 %v3257, %v3256
        %v3274 = vld [vmem:[#allocation11] sm:$0xf]
        %v3275 = vld [vmem:[#allocation11 + $0x4] sm:$0xf]
        %v3276 = vld [vmem:[#allocation11 + $0x8] sm:$0xf]
        %v3277 = vld [vmem:[#allocation11 + $0xc] sm:$0xf]
        %v3278 = vld [vmem:[#allocation11 + $0x10] sm:$0xf]
        %v3279 = vld [vmem:[#allocation11 + $0x14] sm:$0xf]
        %v3280 = vld [vmem:[#allocation11 + $0x18] sm:$0xf]
        %v3281 = vld [vmem:[#allocation11 + $0x1c] sm:$0xf]
        %v3282 = vld [vmem:[#allocation11 + $0x20] sm:$0xf]
        %v3283 = vld [vmem:[#allocation11 + $0x24] sm:$0xf]
        %v3284 = vld [vmem:[#allocation11 + $0x28] sm:$0xf]
        %v3285 = vld [vmem:[#allocation11 + $0x2c] sm:$0xf]
        %v3286 = vld [vmem:[#allocation11 + $0x30] sm:$0xf]
        %v3287 = vld [vmem:[#allocation11 + $0x34] sm:$0xf]
        %v3288 = vld [vmem:[#allocation11 + $0x38] sm:$0xf]
        %v3289 = vld [vmem:[#allocation11 + $0x3c] sm:$0xf]
        %v3306 = vunpack.c.l.b16 %v3274
        %v3307 = vunpack.c.l.b16 %v3275
        %v3308 = vunpack.c.l.b16 %v3276
        %v3309 = vunpack.c.l.b16 %v3277
        %v3310 = vunpack.c.l.b16 %v3278
        %v3311 = vunpack.c.l.b16 %v3279
        %v3312 = vunpack.c.l.b16 %v3280
        %v3313 = vunpack.c.l.b16 %v3281
        %v3314 = vunpack.c.l.b16 %v3282
        %v3315 = vunpack.c.l.b16 %v3283
        %v3316 = vunpack.c.l.b16 %v3284
        %v3317 = vunpack.c.l.b16 %v3285
        %v3318 = vunpack.c.l.b16 %v3286
        %v3319 = vunpack.c.l.b16 %v3287
        %v3320 = vunpack.c.l.b16 %v3288
        %v3321 = vunpack.c.l.b16 %v3289
        %v3322 = vpack.c.b16 %v3307, %v3306
        %v3323 = vpack.c.b16 %v3309, %v3308
        %v3324 = vpack.c.b16 %v3311, %v3310
        %v3325 = vpack.c.b16 %v3313, %v3312
        %v3326 = vpack.c.b16 %v3315, %v3314
        %v3327 = vpack.c.b16 %v3317, %v3316
        %v3328 = vpack.c.b16 %v3319, %v3318
        %v3329 = vpack.c.b16 %v3321, %v3320
        %3338 = vmatprep.subr.bf16.mxu0 0
        %3339 = vmatpush1.bf16.msra.mxu0 %v3322
        %3340 = vmatprep.subr.bf16.mxu0 0
        %3341 = vmatpush1.bf16.msra.mxu0 %v3323
        %3342 = vmatprep.subr.bf16.mxu0 0
        %3343 = vmatpush1.bf16.msra.mxu0 %v3324
        %3344 = vmatprep.subr.bf16.mxu0 0
        %3345 = vmatpush1.bf16.msra.mxu0 %v3325
        %3346 = vmatprep.subr.bf16.mxu0 0
        %3347 = vmatpush1.bf16.msra.mxu0 %v3326
        %3348 = vmatprep.subr.bf16.mxu0 0
        %3349 = vmatpush1.bf16.msra.mxu0 %v3327
        %3350 = vmatprep.subr.bf16.mxu0 0
        %3351 = vmatpush1.bf16.msra.mxu0 %v3328
        %3352 = vmatprep.subr.bf16.mxu0 0
        %3353 = vmatpush1.bf16.msra.mxu0 %v3329
        %3354 = vmatprep.subr.bf16.mxu0 0
        %3355 = vmatpush1.bf16.msra.mxu0 0
        %3356 = vmatprep.subr.bf16.mxu0 0
        %3357 = vmatpush1.bf16.msra.mxu0 0
        %3358 = vmatprep.subr.bf16.mxu0 0
        %3359 = vmatpush1.bf16.msra.mxu0 0
        %3360 = vmatprep.subr.bf16.mxu0 0
        %3361 = vmatpush1.bf16.msra.mxu0 0
        %3362 = vmatprep.subr.bf16.mxu0 0
        %3363 = vmatpush1.bf16.msra.mxu0 0
        %3364 = vmatprep.subr.bf16.mxu0 0
        %3365 = vmatpush1.bf16.msra.mxu0 0
        %3366 = vmatprep.subr.bf16.mxu0 0
        %3367 = vmatpush1.bf16.msra.mxu0 0
        %3368 = vmatprep.subr.bf16.mxu0 0
        %3369 = vmatpush1.bf16.msra.mxu0 0
        %3370 = vmatprep.mubr.bf16.mxu0 0
        %3371 = vmatmul.mubr.bf16.gmra.mrb[0].mxu0 %v3258
        %v3372 = vpop.f32.mrb[0].mxu0
        %v3373 = vadd.f32 0.0, %v3372
        %v3374 = vpop.f32.mrb[0].mxu0
        %v3375 = vpop.f32.mrb[0].mxu0
        %v3376 = vadd.f32 0.0, %v3375
        %v3377 = vpop.f32.mrb[0].mxu0
        %3378 = vmatprep.mubr.bf16.mxu0 0
        %3379 = vmatmul.mubr.bf16.gmra.mrb[0].mxu0 %v3259
        %v3380 = vpop.f32.mrb[0].mxu0
        %v3381 = vadd.f32 0.0, %v3380
        %v3382 = vpop.f32.mrb[0].mxu0
        %v3383 = vpop.f32.mrb[0].mxu0
        %v3384 = vadd.f32 0.0, %v3383
        %v3385 = vpop.f32.mrb[0].mxu0
        %3386 = vmatprep.mubr.bf16.mxu0 0
        %3387 = vmatmul.mubr.bf16.gmra.mrb[0].mxu0 %v3260
        %v3388 = vpop.f32.mrb[0].mxu0
        %v3389 = vadd.f32 0.0, %v3388
        %v3390 = vpop.f32.mrb[0].mxu0
        %v3391 = vpop.f32.mrb[0].mxu0
        %v3392 = vadd.f32 0.0, %v3391
        %v3393 = vpop.f32.mrb[0].mxu0
        %3394 = vmatprep.mubr.bf16.mxu0 0
        %3395 = vmatmul.mubr.bf16.gmra.mrb[0].mxu0 %v3261
        %v3396 = vpop.f32.mrb[0].mxu0
        %v3397 = vadd.f32 0.0, %v3396
        %v3398 = vpop.f32.mrb[0].mxu0
        %v3399 = vpop.f32.mrb[0].mxu0
        %v3400 = vadd.f32 0.0, %v3399
        %v3401 = vpop.f32.mrb[0].mxu0
        %3402 = vmatprep.mubr.bf16.mxu0 0
        %3403 = vmatmul.mubr.bf16.gmra.mrb[0].mxu0 %v3262
        %v3404 = vpop.f32.mrb[0].mxu0
        %v3405 = vadd.f32 0.0, %v3404
        %v3406 = vpop.f32.mrb[0].mxu0
        %v3407 = vpop.f32.mrb[0].mxu0
        %v3408 = vadd.f32 0.0, %v3407
        %v3409 = vpop.f32.mrb[0].mxu0
        %3410 = vmatprep.mubr.bf16.mxu0 0
        %3411 = vmatmul.mubr.bf16.gmra.mrb[0].mxu0 %v3263
        %v3412 = vpop.f32.mrb[0].mxu0
        %v3413 = vadd.f32 0.0, %v3412
        %v3414 = vpop.f32.mrb[0].mxu0
        %v3415 = vpop.f32.mrb[0].mxu0
        %v3416 = vadd.f32 0.0, %v3415
        %v3417 = vpop.f32.mrb[0].mxu0
        %3418 = vmatprep.mubr.bf16.mxu0 0
        %3419 = vmatmul.mubr.bf16.gmra.mrb[0].mxu0 %v3264
        %v3420 = vpop.f32.mrb[0].mxu0
        %v3421 = vadd.f32 0.0, %v3420
        %v3422 = vpop.f32.mrb[0].mxu0
        %v3423 = vpop.f32.mrb[0].mxu0
        %v3424 = vadd.f32 0.0, %v3423
        %v3425 = vpop.f32.mrb[0].mxu0
        %3426 = vmatprep.mubr.bf16.mxu0 0
        %3427 = vmatmul.mubr.bf16.gmra.mrb[0].mxu0 %v3265
        %v3428 = vpop.f32.mrb[0].mxu0
        %v3429 = vadd.f32 0.0, %v3428
        %v3430 = vpop.f32.mrb[0].mxu0
        %v3431 = vpop.f32.mrb[0].mxu0
        %v3432 = vadd.f32 0.0, %v3431
        %v3433 = vpop.f32.mrb[0].mxu0
        %3434 = vmatprep.mubr.bf16.mxu0 0
        %3435 = vmatmul.mubr.bf16.gmra.mrb[0].mxu0 %v3266
        %v3436 = vpop.f32.mrb[0].mxu0
        %v3437 = vadd.f32 0.0, %v3436
        %v3438 = vpop.f32.mrb[0].mxu0
        %v3439 = vpop.f32.mrb[0].mxu0
        %v3440 = vadd.f32 0.0, %v3439
        %v3441 = vpop.f32.mrb[0].mxu0
        %3442 = vmatprep.mubr.bf16.mxu0 0
        %3443 = vmatmul.mubr.bf16.gmra.mrb[0].mxu0 %v3267
        %v3444 = vpop.f32.mrb[0].mxu0
        %v3445 = vadd.f32 0.0, %v3444
        %v3446 = vpop.f32.mrb[0].mxu0
        %v3447 = vpop.f32.mrb[0].mxu0
        %v3448 = vadd.f32 0.0, %v3447
        %v3449 = vpop.f32.mrb[0].mxu0
        %3450 = vmatprep.mubr.bf16.mxu0 0
        %3451 = vmatmul.mubr.bf16.gmra.mrb[0].mxu0 %v3268
        %v3452 = vpop.f32.mrb[0].mxu0
        %v3453 = vadd.f32 0.0, %v3452
        %v3454 = vpop.f32.mrb[0].mxu0
        %v3455 = vpop.f32.mrb[0].mxu0
        %v3456 = vadd.f32 0.0, %v3455
        %v3457 = vpop.f32.mrb[0].mxu0
        %3458 = vmatprep.mubr.bf16.mxu0 0
        %3459 = vmatmul.mubr.bf16.gmra.mrb[0].mxu0 %v3269
        %v3460 = vpop.f32.mrb[0].mxu0
        %v3461 = vadd.f32 0.0, %v3460
        %v3462 = vpop.f32.mrb[0].mxu0
        %v3463 = vpop.f32.mrb[0].mxu0
        %v3464 = vadd.f32 0.0, %v3463
        %v3465 = vpop.f32.mrb[0].mxu0
        %3466 = vmatprep.mubr.bf16.mxu0 0
        %3467 = vmatmul.mubr.bf16.gmra.mrb[0].mxu0 %v3270
        %v3468 = vpop.f32.mrb[0].mxu0
        %v3469 = vadd.f32 0.0, %v3468
        %v3470 = vpop.f32.mrb[0].mxu0
        %v3471 = vpop.f32.mrb[0].mxu0
        %v3472 = vadd.f32 0.0, %v3471
        %v3473 = vpop.f32.mrb[0].mxu0
        %3474 = vmatprep.mubr.bf16.mxu0 0
        %3475 = vmatmul.mubr.bf16.gmra.mrb[0].mxu0 %v3271
        %v3476 = vpop.f32.mrb[0].mxu0
        %v3477 = vadd.f32 0.0, %v3476
        %v3478 = vpop.f32.mrb[0].mxu0
        %v3479 = vpop.f32.mrb[0].mxu0
        %v3480 = vadd.f32 0.0, %v3479
        %v3481 = vpop.f32.mrb[0].mxu0
        %3482 = vmatprep.mubr.bf16.mxu0 0
        %3483 = vmatmul.mubr.bf16.gmra.mrb[0].mxu0 %v3272
        %v3484 = vpop.f32.mrb[0].mxu0
        %v3485 = vadd.f32 0.0, %v3484
        %v3486 = vpop.f32.mrb[0].mxu0
        %v3487 = vpop.f32.mrb[0].mxu0
        %v3488 = vadd.f32 0.0, %v3487
        %v3489 = vpop.f32.mrb[0].mxu0
        %3490 = vmatprep.mubr.bf16.mxu0 0
        %3491 = vmatmul.mubr.bf16.gmra.mrb[0].mxu0 %v3273
        %v3492 = vpop.f32.mrb[0].mxu0
        %v3493 = vadd.f32 0.0, %v3492
        %v3494 = vpop.f32.mrb[0].mxu0
        %v3495 = vpop.f32.mrb[0].mxu0
        %v3496 = vadd.f32 0.0, %v3495
        %v3497 = vpop.f32.mrb[0].mxu0
        %3498 = vdwg.mxu0
        %v3499 = vand.u32 2147483647, %v3373
        %v3500 = vand.u32 2147483647, %v3376
        %v3501 = vand.u32 2147483647, %v3381
        %v3502 = vand.u32 2147483647, %v3384
        %v3503 = vand.u32 2147483647, %v3389
        %v3504 = vand.u32 2147483647, %v3392
        %v3505 = vand.u32 2147483647, %v3397
        %v3506 = vand.u32 2147483647, %v3400
        %v3507 = vand.u32 2147483647, %v3405
        %v3508 = vand.u32 2147483647, %v3408
        %v3509 = vand.u32 2147483647, %v3413
        %v3510 = vand.u32 2147483647, %v3416
        %v3511 = vand.u32 2147483647, %v3421
        %v3512 = vand.u32 2147483647, %v3424
        %v3513 = vand.u32 2147483647, %v3429
        %v3514 = vand.u32 2147483647, %v3432
        %v3515 = vand.u32 2147483647, %v3437
        %v3516 = vand.u32 2147483647, %v3440
        %v3517 = vand.u32 2147483647, %v3445
        %v3518 = vand.u32 2147483647, %v3448
        %v3519 = vand.u32 2147483647, %v3453
        %v3520 = vand.u32 2147483647, %v3456
        %v3521 = vand.u32 2147483647, %v3461
        %v3522 = vand.u32 2147483647, %v3464
        %v3523 = vand.u32 2147483647, %v3469
        %v3524 = vand.u32 2147483647, %v3472
        %v3525 = vand.u32 2147483647, %v3477
        %v3526 = vand.u32 2147483647, %v3480
        %v3527 = vand.u32 2147483647, %v3485
        %v3528 = vand.u32 2147483647, %v3488
        %v3529 = vand.u32 2147483647, %v3493
        %v3530 = vand.u32 2147483647, %v3496
        %v3531 = vsub.f32 0.0, %v3499
        %v3532 = vsub.f32 0.0, %v3500
        %v3533 = vsub.f32 0.0, %v3501
        %v3534 = vsub.f32 0.0, %v3502
        %v3535 = vsub.f32 0.0, %v3503
        %v3536 = vsub.f32 0.0, %v3504
        %v3537 = vsub.f32 0.0, %v3505
        %v3538 = vsub.f32 0.0, %v3506
        %v3539 = vsub.f32 0.0, %v3507
        %v3540 = vsub.f32 0.0, %v3508
        %v3541 = vsub.f32 0.0, %v3509
        %v3542 = vsub.f32 0.0, %v3510
        %v3543 = vsub.f32 0.0, %v3511
        %v3544 = vsub.f32 0.0, %v3512
        %v3545 = vsub.f32 0.0, %v3513
        %v3546 = vsub.f32 0.0, %v3514
        %v3547 = vsub.f32 0.0, %v3515
        %v3548 = vsub.f32 0.0, %v3516
        %v3549 = vsub.f32 0.0, %v3517
        %v3550 = vsub.f32 0.0, %v3518
        %v3551 = vsub.f32 0.0, %v3519
        %v3552 = vsub.f32 0.0, %v3520
        %v3553 = vsub.f32 0.0, %v3521
        %v3554 = vsub.f32 0.0, %v3522
        %v3555 = vsub.f32 0.0, %v3523
        %v3556 = vsub.f32 0.0, %v3524
        %v3557 = vsub.f32 0.0, %v3525
        %v3558 = vsub.f32 0.0, %v3526
        %v3559 = vsub.f32 0.0, %v3527
        %v3560 = vsub.f32 0.0, %v3528
        %v3561 = vsub.f32 0.0, %v3529
        %v3562 = vsub.f32 0.0, %v3530
        %v3563 = vmul.f32 %v3531, 1.442695
        %v3564 = vpow.pop %v3563
        %v3565 = vmul.f32 %v3532, 1.442695
        %v3566 = vpow.pop %v3565
        %v3567 = vmul.f32 %v3533, 1.442695
        %v3568 = vpow.pop %v3567
        %v3569 = vmul.f32 %v3534, 1.442695
        %v3570 = vpow.pop %v3569
        %v3571 = vmul.f32 %v3535, 1.442695
        %v3572 = vpow.pop %v3571
        %v3573 = vmul.f32 %v3536, 1.442695
        %v3574 = vpow.pop %v3573
        %v3575 = vmul.f32 %v3537, 1.442695
        %v3576 = vpow.pop %v3575
        %v3577 = vmul.f32 %v3538, 1.442695
        %v3578 = vpow.pop %v3577
        %v3579 = vmul.f32 %v3539, 1.442695
        %v3580 = vpow.pop %v3579
        %v3581 = vmul.f32 %v3540, 1.442695
        %v3582 = vpow.pop %v3581
        %v3583 = vmul.f32 %v3541, 1.442695
        %v3584 = vpow.pop %v3583
        %v3585 = vmul.f32 %v3542, 1.442695
        %v3586 = vpow.pop %v3585
        %v3587 = vmul.f32 %v3543, 1.442695
        %v3588 = vpow.pop %v3587
        %v3589 = vmul.f32 %v3544, 1.442695
        %v3590 = vpow.pop %v3589
        %v3591 = vmul.f32 %v3545, 1.442695
        %v3592 = vpow.pop %v3591
        %v3593 = vmul.f32 %v3546, 1.442695
        %v3594 = vpow.pop %v3593
        %v3595 = vmul.f32 %v3547, 1.442695
        %v3596 = vpow.pop %v3595
        %v3597 = vmul.f32 %v3548, 1.442695
        %v3598 = vpow.pop %v3597
        %v3599 = vmul.f32 %v3549, 1.442695
        %v3600 = vpow.pop %v3599
        %v3601 = vmul.f32 %v3550, 1.442695
        %v3602 = vpow.pop %v3601
        %v3603 = vmul.f32 %v3551, 1.442695
        %v3604 = vpow.pop %v3603
        %v3605 = vmul.f32 %v3552, 1.442695
        %v3606 = vpow.pop %v3605
        %v3607 = vmul.f32 %v3553, 1.442695
        %v3608 = vpow.pop %v3607
        %v3609 = vmul.f32 %v3554, 1.442695
        %v3610 = vpow.pop %v3609
        %v3611 = vmul.f32 %v3555, 1.442695
        %v3612 = vpow.pop %v3611
        %v3613 = vmul.f32 %v3556, 1.442695
        %v3614 = vpow.pop %v3613
        %v3615 = vmul.f32 %v3557, 1.442695
        %v3616 = vpow.pop %v3615
        %v3617 = vmul.f32 %v3558, 1.442695
        %v3618 = vpow.pop %v3617
        %v3619 = vmul.f32 %v3559, 1.442695
        %v3620 = vpow.pop %v3619
        %v3621 = vmul.f32 %v3560, 1.442695
        %v3622 = vpow.pop %v3621
        %v3623 = vmul.f32 %v3561, 1.442695
        %v3624 = vpow.pop %v3623
        %v3625 = vmul.f32 %v3562, 1.442695
        %v3626 = vpow.pop %v3625
        %v3627 = vadd.f32 %v3564, 1.0
        %v3628 = vadd.f32 %v3566, 1.0
        %v3629 = vadd.f32 %v3568, 1.0
        %v3630 = vadd.f32 %v3570, 1.0
        %v3631 = vadd.f32 %v3572, 1.0
        %v3632 = vadd.f32 %v3574, 1.0
        %v3633 = vadd.f32 %v3576, 1.0
        %v3634 = vadd.f32 %v3578, 1.0
        %v3635 = vadd.f32 %v3580, 1.0
        %v3636 = vadd.f32 %v3582, 1.0
        %v3637 = vadd.f32 %v3584, 1.0
        %v3638 = vadd.f32 %v3586, 1.0
        %v3639 = vadd.f32 %v3588, 1.0
        %v3640 = vadd.f32 %v3590, 1.0
        %v3641 = vadd.f32 %v3592, 1.0
        %v3642 = vadd.f32 %v3594, 1.0
        %v3643 = vadd.f32 %v3596, 1.0
        %v3644 = vadd.f32 %v3598, 1.0
        %v3645 = vadd.f32 %v3600, 1.0
        %v3646 = vadd.f32 %v3602, 1.0
        %v3647 = vadd.f32 %v3604, 1.0
        %v3648 = vadd.f32 %v3606, 1.0
        %v3649 = vadd.f32 %v3608, 1.0
        %v3650 = vadd.f32 %v3610, 1.0
        %v3651 = vadd.f32 %v3612, 1.0
        %v3652 = vadd.f32 %v3614, 1.0
        %v3653 = vadd.f32 %v3616, 1.0
        %v3654 = vadd.f32 %v3618, 1.0
        %v3655 = vadd.f32 %v3620, 1.0
        %v3656 = vadd.f32 %v3622, 1.0
        %v3657 = vadd.f32 %v3624, 1.0
        %v3658 = vadd.f32 %v3626, 1.0
        %v3659 = vrcp.pop %v3627
        %v3660 = vrcp.pop %v3628
        %v3661 = vrcp.pop %v3629
        %v3662 = vrcp.pop %v3630
        %v3663 = vrcp.pop %v3631
        %v3664 = vrcp.pop %v3632
        %v3665 = vrcp.pop %v3633
        %v3666 = vrcp.pop %v3634
        %v3667 = vrcp.pop %v3635
        %v3668 = vrcp.pop %v3636
        %v3669 = vrcp.pop %v3637
        %v3670 = vrcp.pop %v3638
        %v3671 = vrcp.pop %v3639
        %v3672 = vrcp.pop %v3640
        %v3673 = vrcp.pop %v3641
        %v3674 = vrcp.pop %v3642
        %v3675 = vrcp.pop %v3643
        %v3676 = vrcp.pop %v3644
        %v3677 = vrcp.pop %v3645
        %v3678 = vrcp.pop %v3646
        %v3679 = vrcp.pop %v3647
        %v3680 = vrcp.pop %v3648
        %v3681 = vrcp.pop %v3649
        %v3682 = vrcp.pop %v3650
        %v3683 = vrcp.pop %v3651
        %v3684 = vrcp.pop %v3652
        %v3685 = vrcp.pop %v3653
        %v3686 = vrcp.pop %v3654
        %v3687 = vrcp.pop %v3655
        %v3688 = vrcp.pop %v3656
        %v3689 = vrcp.pop %v3657
        %v3690 = vrcp.pop %v3658
        %vm3691 = vcmp.ge.f32.partialorder %v3373, 0.0
        %vm3692 = vcmp.ge.f32.partialorder %v3376, 0.0
        %vm3693 = vcmp.ge.f32.partialorder %v3381, 0.0
        %vm3694 = vcmp.ge.f32.partialorder %v3384, 0.0
        %vm3695 = vcmp.ge.f32.partialorder %v3389, 0.0
        %vm3696 = vcmp.ge.f32.partialorder %v3392, 0.0
        %vm3697 = vcmp.ge.f32.partialorder %v3397, 0.0
        %vm3698 = vcmp.ge.f32.partialorder %v3400, 0.0
        %vm3699 = vcmp.ge.f32.partialorder %v3405, 0.0
        %vm3700 = vcmp.ge.f32.partialorder %v3408, 0.0
        %vm3701 = vcmp.ge.f32.partialorder %v3413, 0.0
        %vm3702 = vcmp.ge.f32.partialorder %v3416, 0.0
        %vm3703 = vcmp.ge.f32.partialorder %v3421, 0.0
        %vm3704 = vcmp.ge.f32.partialorder %v3424, 0.0
        %vm3705 = vcmp.ge.f32.partialorder %v3429, 0.0
        %vm3706 = vcmp.ge.f32.partialorder %v3432, 0.0
        %vm3707 = vcmp.ge.f32.partialorder %v3437, 0.0
        %vm3708 = vcmp.ge.f32.partialorder %v3440, 0.0
        %vm3709 = vcmp.ge.f32.partialorder %v3445, 0.0
        %vm3710 = vcmp.ge.f32.partialorder %v3448, 0.0
        %vm3711 = vcmp.ge.f32.partialorder %v3453, 0.0
        %vm3712 = vcmp.ge.f32.partialorder %v3456, 0.0
        %vm3713 = vcmp.ge.f32.partialorder %v3461, 0.0
        %vm3714 = vcmp.ge.f32.partialorder %v3464, 0.0
        %vm3715 = vcmp.ge.f32.partialorder %v3469, 0.0
        %vm3716 = vcmp.ge.f32.partialorder %v3472, 0.0
        %vm3717 = vcmp.ge.f32.partialorder %v3477, 0.0
        %vm3718 = vcmp.ge.f32.partialorder %v3480, 0.0
        %vm3719 = vcmp.ge.f32.partialorder %v3485, 0.0
        %vm3720 = vcmp.ge.f32.partialorder %v3488, 0.0
        %vm3721 = vcmp.ge.f32.partialorder %v3493, 0.0
        %vm3722 = vcmp.ge.f32.partialorder %v3496, 0.0
        %v3723 = vmul.f32 %v3564, %v3659
        %v3724 = vmul.f32 %v3566, %v3660
        %v3725 = vmul.f32 %v3568, %v3661
        %v3726 = vmul.f32 %v3570, %v3662
        %v3727 = vmul.f32 %v3572, %v3663
        %v3728 = vmul.f32 %v3574, %v3664
        %v3729 = vmul.f32 %v3576, %v3665
        %v3730 = vmul.f32 %v3578, %v3666
        %v3731 = vmul.f32 %v3580, %v3667
        %v3732 = vmul.f32 %v3582, %v3668
        %v3733 = vmul.f32 %v3584, %v3669
        %v3734 = vmul.f32 %v3586, %v3670
        %v3735 = vmul.f32 %v3588, %v3671
        %v3736 = vmul.f32 %v3590, %v3672
        %v3737 = vmul.f32 %v3592, %v3673
        %v3738 = vmul.f32 %v3594, %v3674
        %v3739 = vmul.f32 %v3596, %v3675
        %v3740 = vmul.f32 %v3598, %v3676
        %v3741 = vmul.f32 %v3600, %v3677
        %v3742 = vmul.f32 %v3602, %v3678
        %v3743 = vmul.f32 %v3604, %v3679
        %v3744 = vmul.f32 %v3606, %v3680
        %v3745 = vmul.f32 %v3608, %v3681
        %v3746 = vmul.f32 %v3610, %v3682
        %v3747 = vmul.f32 %v3612, %v3683
        %v3748 = vmul.f32 %v3614, %v3684
        %v3749 = vmul.f32 %v3616, %v3685
        %v3750 = vmul.f32 %v3618, %v3686
        %v3751 = vmul.f32 %v3620, %v3687
        %v3752 = vmul.f32 %v3622, %v3688
        %v3753 = vmul.f32 %v3624, %v3689
        %v3754 = vmul.f32 %v3626, %v3690
        %v3755 = vsel %vm3691, %v3659, %v3723
        %v3756 = vsel %vm3692, %v3660, %v3724
        %v3757 = vsel %vm3693, %v3661, %v3725
        %v3758 = vsel %vm3694, %v3662, %v3726
        %v3759 = vsel %vm3695, %v3663, %v3727
        %v3760 = vsel %vm3696, %v3664, %v3728
        %v3761 = vsel %vm3697, %v3665, %v3729
        %v3762 = vsel %vm3698, %v3666, %v3730
        %v3763 = vsel %vm3699, %v3667, %v3731
        %v3764 = vsel %vm3700, %v3668, %v3732
        %v3765 = vsel %vm3701, %v3669, %v3733
        %v3766 = vsel %vm3702, %v3670, %v3734
        %v3767 = vsel %vm3703, %v3671, %v3735
        %v3768 = vsel %vm3704, %v3672, %v3736
        %v3769 = vsel %vm3705, %v3673, %v3737
        %v3770 = vsel %vm3706, %v3674, %v3738
        %v3771 = vsel %vm3707, %v3675, %v3739
        %v3772 = vsel %vm3708, %v3676, %v3740
        %v3773 = vsel %vm3709, %v3677, %v3741
        %v3774 = vsel %vm3710, %v3678, %v3742
        %v3775 = vsel %vm3711, %v3679, %v3743
        %v3776 = vsel %vm3712, %v3680, %v3744
        %v3777 = vsel %vm3713, %v3681, %v3745
        %v3778 = vsel %vm3714, %v3682, %v3746
        %v3779 = vsel %vm3715, %v3683, %v3747
        %v3780 = vsel %vm3716, %v3684, %v3748
        %v3781 = vsel %vm3717, %v3685, %v3749
        %v3782 = vsel %vm3718, %v3686, %v3750
        %v3783 = vsel %vm3719, %v3687, %v3751
        %v3784 = vsel %vm3720, %v3688, %v3752
        %v3785 = vsel %vm3721, %v3689, %v3753
        %v3786 = vsel %vm3722, %v3690, %v3754
        %3787 = vst [vmem:[%s451] sm:$0xff] %v3755
        %3788 = vst [vmem:[%s451 + $0x8] sm:$0xff] %v3756
        %3789 = vst [vmem:[%s451 + $0x10] sm:$0xff] %v3757
        %3790 = vst [vmem:[%s451 + $0x18] sm:$0xff] %v3758
        %3791 = vst [vmem:[%s451 + $0x20] sm:$0xff] %v3759
        %3792 = vst [vmem:[%s451 + $0x28] sm:$0xff] %v3760
        %3793 = vst [vmem:[%s451 + $0x30] sm:$0xff] %v3761
        %3794 = vst [vmem:[%s451 + $0x38] sm:$0xff] %v3762
        %3795 = vst [vmem:[%s451 + $0x40] sm:$0xff] %v3763
        %3796 = vst [vmem:[%s451 + $0x48] sm:$0xff] %v3764
        %3797 = vst [vmem:[%s451 + $0x50] sm:$0xff] %v3765
        %3798 = vst [vmem:[%s451 + $0x58] sm:$0xff] %v3766
        %3799 = vst [vmem:[%s451 + $0x60] sm:$0xff] %v3767
        %3800 = vst [vmem:[%s451 + $0x68] sm:$0xff] %v3768
        %3801 = vst [vmem:[%s451 + $0x70] sm:$0xff] %v3769
        %3802 = vst [vmem:[%s451 + $0x78] sm:$0xff] %v3770
        %3803 = vst [vmem:[%s451 + $0x80] sm:$0xff] %v3771
        %3804 = vst [vmem:[%s451 + $0x88] sm:$0xff] %v3772
        %3805 = vst [vmem:[%s451 + $0x90] sm:$0xff] %v3773
        %3806 = vst [vmem:[%s451 + $0x98] sm:$0xff] %v3774
        %3807 = vst [vmem:[%s451 + $0xa0] sm:$0xff] %v3775
        %3808 = vst [vmem:[%s451 + $0xa8] sm:$0xff] %v3776
        %3809 = vst [vmem:[%s451 + $0xb0] sm:$0xff] %v3777
        %3810 = vst [vmem:[%s451 + $0xb8] sm:$0xff] %v3778
        %3811 = vst [vmem:[%s451 + $0xc0] sm:$0xff] %v3779
        %3812 = vst [vmem:[%s451 + $0xc8] sm:$0xff] %v3780
        %3813 = vst [vmem:[%s451 + $0xd0] sm:$0xff] %v3781
        %3814 = vst [vmem:[%s451 + $0xd8] sm:$0xff] %v3782
        %3815 = vst [vmem:[%s451 + $0xe0] sm:$0xff] %v3783
        %3816 = vst [vmem:[%s451 + $0xe8] sm:$0xff] %v3784
        %3817 = vst [vmem:[%s451 + $0xf0] sm:$0xff] %v3785
        %3818 = vst [vmem:[%s451 + $0xf8] sm:$0xff] %v3786
        %s3819 = sand.u32 %s253, 1
        %s3820 = scalar_lea.sflag [#allocation4], %s3819
        %s3821 = sand.u32 %s253, 1
        %s3822 = smul.addr %s3821, 256
        %s3823 = scalar_lea.vmem [#allocation13], %s3822
        // Predicated region
        $region85: #{tpu_custom_call.1} parent=59 // pred_check
          %p3824 = pneg %p263
        $region86: #{tpu_custom_call.1} parent=59 // pred_check_branch
          %3826 = sbr.rel (%p3824) target = $region88
        $region87: #{tpu_custom_call.1} parent=59 // pred_region
          %s3827 = smul.u32 32, %s30
          %s3829 = ssub.s32 4096, 4096
          %3830 = vsyncadd %s3820, %s3829
          %s3831 = smul.addr %s3827, 128
          %s3832 = scalar_lea.hbm %s10, %s3831
          %s3833 = sshll.u32 %s3823, 4
          %s3834 = int_to_ptr.vmem [resolvable:$true] %s3833
          %3839 = dma.vmem_to_hbm [thread:$0]  %s3834, 4096, %s3832, %s3820, 128, 128, 8
        $region88: #{tpu_custom_call.1} parent=59 // pred_fallthru
          _
      $region60: #{tpu_custom_call.1} parent=5 // pred_fallthru
        _
      %p3840 = scmp.le.s32.totalorder 2, %s25
      // Predicated region
      $region89: #{tpu_custom_call.1} parent=5 // pred_check
        %p3841 = pneg %p3840
      $region90: #{tpu_custom_call.1} parent=5 // pred_check_branch
        %3843 = sbr.rel (%p3841) target = $region92
      $region91: #{tpu_custom_call.1} parent=5 // pred_region
        %s3844 = ssub.s32 %s25, 2
        // Predicated region
        $region93: #{tpu_custom_call.1} parent=91 // pred_check
          %p3845 = pneg %p269
        $region94: #{tpu_custom_call.1} parent=91 // pred_check_branch
          %3847 = sbr.rel (%p3845) target = $region96
        $region95: #{tpu_custom_call.1} parent=91 // pred_region
          %s3848 = sand.u32 %s254, 1
          %s3849 = scalar_lea.sflag [#allocation4], %s3848
          %s3850 = sand.u32 %s254, 1
          %s3851 = smul.addr %s3850, 256
          %s3852 = scalar_lea.vmem [#allocation13], %s3851
          %3853 = dma.done %s3849, 4096
        $region96: #{tpu_custom_call.1} parent=91 // pred_fallthru
          _
      $region92: #{tpu_custom_call.1} parent=5 // pred_fallthru
        _
    $region6: #{tpu_custom_call.1} parent=1 // loop_footer
      %s29 = sadd.s32 1, %s25
    $region7: #{tpu_custom_call.1} parent=1 // loop_footer_branch
      %24 = sbr.rel target = $region3
    $region8: #{tpu_custom_call.1} parent=1 // loop_exit
      _
    %3854 = vsyncpa [#allocation3], 1
    %s3855 = scalar_lea.sflag [#allocation3], 1
    %3856 = vsyncpa %s3855, 1
    %3857 = vsyncpa [#allocation6], 1
    %3858 = vsyncpa [#allocation9], 1
    %3859 = vsyncpa [#allocation12], 1
    %3860 = vsyncpa [#allocation4], 1
    %s3861 = scalar_lea.sflag [#allocation4], 1
    %3862 = vsyncpa %s3861, 1

</llo_original>
